<compile_context>
chip_gen: v7x
topology: tpu7x:2x2x1
jax: 0.10.0
libtpu: 0.0.40
codegen_flags: <defaults>
</compile_context>

<pallas_src>
import functools

import jax
import jax.numpy as jnp
import numpy as np
from jax.experimental import pallas as pl
from jax.experimental.pallas import tpu as pltpu

_DW_K = 5                                   # GhostConv cheap-op depthwise kernel (fixed in PyTorch)
_NEG = float(jnp.finfo(jnp.float32).min)    # -inf substitute for max-pool padding


# ---------------------------------------------------------------------------
# in-kernel helpers: all values are (C, H*W) f32, channels on sublanes,
# flattened row-major spatial on lanes.
# ---------------------------------------------------------------------------

def _pw_acc_group(acc, wv, x, ci0):
    """1x1 conv accumulation via input-channel broadcast FMAs (no lane reductions).

    acc : (C_out, HW)   wv : (C_out, C_in_total)   x : (C_g, HW)
    ci0 : starting input-channel index of this group inside wv.
    """
    for j in range(x.shape[0]):
        acc = acc + wv[:, ci0 + j:ci0 + j + 1] * x[j:j + 1, :]
    return acc


def _dw_conv5(x, wdv, bv, cm, rm, act, *, W, HW, R):
    """5x5 depthwise conv, stride 1, zero 'same' padding, on (C, H*W) layout.

    Each tap is a static pltpu.roll of the flat spatial axis; wrapped positions
    (row-boundary / image-boundary bleed) are zeroed by the f32 validity masks.
    wdv : (C, 25) BN-folded tap weights, tap index t = ky*5 + kx.
    """
    r0 = _DW_K // 2
    acc = bv + jnp.zeros_like(x)
    for dy in range(-r0, r0 + 1):
        rmask = rm[dy + R:dy + R + 1, :]                    # (1, HW)
        for dx in range(-r0, r0 + 1):
            t = (dy + r0) * _DW_K + (dx + r0)
            s = dy * W + dx
            v = x if s == 0 else pltpu.roll(x, shift=(-s) % HW, axis=1)
            m = rmask * cm[dx + R:dx + R + 1, :]            # (1, HW) {0,1}
            acc = acc + (v * m) * wdv[:, t:t + 1]
    if act:
        acc = acc * jax.nn.sigmoid(acc)                     # SiLU
    return acc


def _max_pool(x, cm, rm, *, kpool, W, HW, R):
    """kpool x kpool max-pool, stride 1, 'same' (-inf) padding, separable (W then H)."""
    r0 = kpool // 2
    m = x
    for dx in range(-r0, r0 + 1):
        if dx == 0:
            continue
        v = pltpu.roll(x, shift=(-dx) % HW, axis=1)
        m = jnp.maximum(m, jnp.where(cm[dx + R:dx + R + 1, :] > 0.5, v, _NEG))
    out = m
    for dy in range(-r0, r0 + 1):
        if dy == 0:
            continue
        v = pltpu.roll(m, shift=(-dy * W) % HW, axis=1)
        out = jnp.maximum(out, jnp.where(rm[dy + R:dy + R + 1, :] > 0.5, v, _NEG))
    return out


# ---------------------------------------------------------------------------
# fused GhostSPPF kernel (one grid step == one batch image)
# ---------------------------------------------------------------------------

def _ghost_sppf_kernel(x_ref, cm_ref, rm_ref,
                       w1p_ref, b1p_ref, w1d_ref, b1d_ref,
                       w2p_ref, b2p_ref, w2d_ref, b2d_ref,
                       o_ref, *, H, W, kpool, R):
    f32 = jnp.float32
    HW = H * W
    x = x_ref[0].astype(f32)                                # (c1, HW)
    cm = cm_ref[...].astype(f32)                            # (2R+1, HW) column validity
    rm = rm_ref[...].astype(f32)                            # (2R+1, HW) row validity

    ch1 = b1p_ref.shape[0]                                  # GhostConv1 half width
    ch2 = b2p_ref.shape[0]                                  # GhostConv2 half width

    # ---- GhostConv #1 primary: 1x1 conv (BN folded) + SiLU -----------------
    y = b1p_ref[...].astype(f32) + jnp.zeros((ch1, HW), f32)
    y = _pw_acc_group(y, w1p_ref[...].astype(f32), x, 0)
    y = y * jax.nn.sigmoid(y)

    # ---- GhostConv #1 cheap op: 5x5 depthwise + SiLU -----------------------
    z = _dw_conv5(y, w1d_ref[...].astype(f32), b1d_ref[...].astype(f32),
                  cm, rm, True, W=W, HW=HW, R=R)

    # ---- SPPF pyramid, streamed straight into GhostConv #2 primary ---------
    # cat([x1, m(x1), m2(x1), m3(x1)]) channel order == levels of [y; z];
    # each level's contribution is accumulated as soon as it is available.
    g = jnp.concatenate([y, z], axis=0)                     # (2*ch1, HW)
    w2 = w2p_ref[...].astype(f32)                           # (ch2, 8*ch1)
    y2 = b2p_ref[...].astype(f32) + jnp.zeros((ch2, HW), f32)
    lvl = g
    for lev in range(4):
        y2 = _pw_acc_group(y2, w2, lvl, lev * 2 * ch1)
        if lev < 3:
            lvl = _max_pool(lvl, cm, rm, kpool=kpool, W=W, HW=HW, R=R)

    # ---- GhostConv #2 cheap op: 5x5 depthwise, no act ----------------------
    z2 = _dw_conv5(y2, w2d_ref[...].astype(f32), b2d_ref[...].astype(f32),
                   cm, rm, False, W=W, HW=HW, R=R)

    # torch.cat([y2, cheap(y2)], 1): two lane-dense (ch2, HW) slabs.
    o_ref[0, 0] = y2.astype(o_ref.dtype)
    o_ref[0, 1] = z2.astype(o_ref.dtype)


# ---------------------------------------------------------------------------
# host-side wrapper (BN folding, weight/mask layout, pallas_call plumbing)
# ---------------------------------------------------------------------------

def _fold_conv_bn(w, bn, eps=1e-5):
    """Fold inference-mode BatchNorm into the conv weight (out-channel = last dim)."""
    scale = bn["gamma"] * jax.lax.rsqrt(bn["var"] + eps)
    bias = bn["beta"] - bn["mean"] * scale
    return w * scale, bias


@functools.partial(jax.jit, static_argnames=("k",))
def ghost_sppf(x_nchw, params, *, k=5):
    """GhostSPPF forward. x: (N, c1, H, W) NCHW -> (N, c2, H, W) NCHW."""
    N, c1, H, W = x_nchw.shape
    HW = H * W
    assert c1 % 4 == 0 and k % 2 == 1
    # TODO(synk): generalize the rolled stencils to H*W that is not a multiple of 128.
    assert HW % 128 == 0, HW

    w1p, b1p = _fold_conv_bn(params["cv1_primary"]["w"], params["cv1_primary"]["bn"])
    w1d, b1d = _fold_conv_bn(params["cv1_cheap"]["w"], params["cv1_cheap"]["bn"])
    w2p, b2p = _fold_conv_bn(params["cv2_primary"]["w"], params["cv2_primary"]["bn"])
    w2d, b2d = _fold_conv_bn(params["cv2_cheap"]["w"], params["cv2_cheap"]["bn"])

    ch1 = w1p.shape[1]                                      # (c1//2)//2
    ch2 = w2p.shape[1]                                      # c2//2
    kdw = w1d.shape[0]
    assert kdw == _DW_K and w2p.shape[0] == 8 * ch1

    # kernel-friendly channel-first weight layouts (host side, free)
    w1t = jnp.transpose(w1p, (1, 0))                        # (ch1, c1)
    w1dt = jnp.transpose(w1d.reshape(kdw * kdw, ch1), (1, 0))   # (ch1, 25)
    w2t = jnp.transpose(w2p, (1, 0))                        # (ch2, 8*ch1)
    w2dt = jnp.transpose(w2d.reshape(kdw * kdw, ch2), (1, 0))   # (ch2, 25)

    # lane-dense flat layout: (N, c1, H*W) -- pure reshape, no transpose.
    x = x_nchw.reshape(N, c1, HW)

    # Host-precomputed stencil validity masks (f32 {0,1}); index d+R holds the
    # validity of displacement d along columns / rows.  Replaces the padded
    # halo scratch buffers and their per-image border fills.
    R = max(kdw // 2, k // 2)
    nm = 2 * R + 1
    rr = np.arange(H).reshape(H, 1)
    cc = np.arange(W).reshape(1, W)
    cmask = np.zeros((nm, HW), np.float32)
    rmask = np.zeros((nm, HW), np.float32)
    for i, d in enumerate(range(-R, R + 1)):
        cmask[i] = np.broadcast_to((cc + d >= 0) & (cc + d < W), (H, W)).reshape(-1)
        rmask[i] = np.broadcast_to((rr + d >= 0) & (rr + d < H), (H, W)).reshape(-1)
    cmask = jnp.asarray(cmask)
    rmask = jnp.asarray(rmask)

    # Explicit VMEM budget: lane/sublane-padded, double-buffered pipeline
    # blocks + small weight tiles + headroom for in-kernel temporaries.
    def _pad(n, m):
        return ((n + m - 1) // m) * m

    hw_pad = _pad(HW, 128)
    buf_bytes = 4 * 2 * (_pad(c1, 8) * hw_pad               # input block
                         + _pad(2 * ch2, 8) * hw_pad        # output block
                         + 2 * _pad(nm, 8) * hw_pad         # mask blocks
                         + 8 * 8 * 128)                     # weight / bias tiles
    vmem_limit = int(buf_bytes + (8 << 20))

    out4 = pl.pallas_call(
        functools.partial(_ghost_sppf_kernel, H=H, W=W, kpool=k, R=R),
        out_shape=jax.ShapeDtypeStruct((N, 2, ch2, HW), x.dtype),
        grid=(N,),
        in_specs=[
            pl.BlockSpec((1, c1, HW), lambda n: (n, 0, 0)),
            pl.BlockSpec((nm, HW), lambda n: (0, 0)),
            pl.BlockSpec((nm, HW), lambda n: (0, 0)),
            pl.BlockSpec((ch1, c1), lambda n: (0, 0)),
            pl.BlockSpec((ch1, 1), lambda n: (0, 0)),
            pl.BlockSpec((ch1, kdw * kdw), lambda n: (0, 0)),
            pl.BlockSpec((ch1, 1), lambda n: (0, 0)),
            pl.BlockSpec((ch2, 8 * ch1), lambda n: (0, 0)),
            pl.BlockSpec((ch2, 1), lambda n: (0, 0)),
            pl.BlockSpec((ch2, kdw * kdw), lambda n: (0, 0)),
            pl.BlockSpec((ch2, 1), lambda n: (0, 0)),
        ],
        out_specs=pl.BlockSpec((1, 2, ch2, HW), lambda n: (n, 0, 0, 0)),
        compiler_params=pltpu.CompilerParams(
            dimension_semantics=("parallel",),      # N>=2 keeps both v7x TCs busy
            vmem_limit_bytes=vmem_limit),
    )(x, cmask, rmask,
      w1t, b1p.reshape(ch1, 1), w1dt, b1d.reshape(ch1, 1),
      w2t, b2p.reshape(ch2, 1), w2dt, b2d.reshape(ch2, 1))

    # (N, 2, ch2, H*W) -> (N, 2*ch2, H, W): pure reshape, channel order [primary | cheap].
    return out4.reshape(N, 2 * ch2, H, W)


# ---------------------------------------------------------------------------
# pure-JAX (XLA) reference of the same forward, for correctness checking
# ---------------------------------------------------------------------------

def ghost_sppf_reference(x_nchw, params, *, k=5):
    x = jnp.transpose(x_nchw, (0, 2, 3, 1))
    w1p, b1p = _fold_conv_bn(params["cv1_primary"]["w"], params["cv1_primary"]["bn"])
    w1d, b1d = _fold_conv_bn(params["cv1_cheap"]["w"], params["cv1_cheap"]["bn"])
    w2p, b2p = _fold_conv_bn(params["cv2_primary"]["w"], params["cv2_primary"]["bn"])
    w2d, b2d = _fold_conv_bn(params["cv2_cheap"]["w"], params["cv2_cheap"]["bn"])

    def pw(v, w, b, act):
        y = jnp.einsum("nhwc,cd->nhwd", v, w) + b
        return y * jax.nn.sigmoid(y) if act else y

    def dw(v, w, b, act):
        C = v.shape[-1]
        kk = w.shape[0]
        y = jax.lax.conv_general_dilated(
            v, w.reshape(kk, kk, 1, C), (1, 1),
            ((kk // 2, kk // 2), (kk // 2, kk // 2)),
            dimension_numbers=("NHWC", "HWIO", "NHWC"),
            feature_group_count=C) + b
        return y * jax.nn.sigmoid(y) if act else y

    def mp(v):
        return jax.lax.reduce_window(
            v, -jnp.inf, jax.lax.max, (1, k, k, 1), (1, 1, 1, 1),
            ((0, 0), (k // 2, k // 2), (k // 2, k // 2), (0, 0)))

    y = pw(x, w1p, b1p, True)
    z = dw(y, w1d, b1d, True)
    g = jnp.concatenate([y, z], axis=-1)
    p1 = mp(g); p2 = mp(p1); p3 = mp(p2)
    cat = jnp.concatenate([g, p1, p2, p3], axis=-1)
    y2 = pw(cat, w2p, b2p, False)
    z2 = dw(y2, w2d, b2d, False)
    out = jnp.concatenate([y2, z2], axis=-1)
    return jnp.transpose(out, (0, 3, 1, 2))


# ---------------------------------------------------------------------------
# deterministic parameter initialization (shapes from the PyTorch __init__)
# ---------------------------------------------------------------------------

def _bn_params(key, c):
    k1, k2, k3, k4 = jax.random.split(key, 4)
    return dict(
        gamma=1.0 + 0.1 * jax.random.normal(k1, (c,), jnp.float32),
        beta=0.1 * jax.random.normal(k2, (c,), jnp.float32),
        mean=0.1 * jax.random.normal(k3, (c,), jnp.float32),
        var=jnp.abs(1.0 + 0.1 * jax.random.normal(k4, (c,), jnp.float32)),
    )


def init_params(key, c1, c2):
    c_ = c1 // 2                 # GhostSPPF hidden width
    ch1 = c_ // 2                # GhostConv1 primary/cheap width
    ch2 = c2 // 2                # GhostConv2 primary/cheap width
    keys = jax.random.split(key, 4)

    def conv_bn(kk, shape, c):
        ka, kb = jax.random.split(kk)
        return dict(w=0.2 * jax.random.normal(ka, shape, jnp.float32),
                    bn=_bn_params(kb, c))

    return dict(
        cv1_primary=conv_bn(keys[0], (c1, ch1), ch1),               # 1x1 conv
        cv1_cheap=conv_bn(keys[1], (_DW_K, _DW_K, ch1), ch1),       # 5x5 depthwise
        cv2_primary=conv_bn(keys[2], (4 * c_, ch2), ch2),           # 1x1 conv
        cv2_cheap=conv_bn(keys[3], (_DW_K, _DW_K, ch2), ch2),       # 5x5 depthwise
    )


if __name__ == "__main__":
    # GhostSPPF(c1=8, c2=16, k=5)
    c1, c2, k = 8, 16, 5
    N, H, W = 2, 16, 16

    key = jax.random.PRNGKey(0)
    kx, kp = jax.random.split(key)
    x = jax.random.normal(kx, (N, c1, H, W), jnp.float32)          # NCHW, like PyTorch
    params = init_params(kp, c1, c2)

    out = ghost_sppf(x, params, k=k)
    out = jax.block_until_ready(out)
    assert out.shape == (N, c2, H, W), out.shape
    assert bool(jnp.all(jnp.isfinite(out)))

    ref = ghost_sppf_reference(x, params, k=k)
    err = float(jnp.max(jnp.abs(out - ref)))
    assert err < 1e-3, f"max abs err vs reference: {err}"
    print("KERNEL_OK")
</pallas_src>

<mosaic_0001>
module attributes {stable_mosaic.version = 11 : i64} {
  func.func @_ghost_sppf_kernel(%arg0: i32, %arg1: memref<1x8x256xf32, #tpu.memory_space<vmem>>, %arg2: memref<5x256xf32, #tpu.memory_space<vmem>>, %arg3: memref<5x256xf32, #tpu.memory_space<vmem>>, %arg4: memref<2x8xf32, #tpu.memory_space<vmem>>, %arg5: memref<2x1xf32, #tpu.memory_space<vmem>>, %arg6: memref<2x25xf32, #tpu.memory_space<vmem>>, %arg7: memref<2x1xf32, #tpu.memory_space<vmem>>, %arg8: memref<8x16xf32, #tpu.memory_space<vmem>>, %arg9: memref<8x1xf32, #tpu.memory_space<vmem>>, %arg10: memref<8x25xf32, #tpu.memory_space<vmem>>, %arg11: memref<8x1xf32, #tpu.memory_space<vmem>>, %arg12: memref<1x2x8x256xf32, #tpu.memory_space<vmem>>) attributes {dimension_semantics = [#tpu.dimension_semantics<parallel>], iteration_bounds = array<i64: 2>, scalar_prefetch = 0 : i64, scratch_operands = 0 : i64, tpu.core_type = #tpu.core_type<tc>, window_params = [{transform_indices = @transform_0, window_bounds = array<i64: 1, 8, 256>}, {pipeline_mode = #tpu.pipeline_mode<synchronous>, transform_indices = @transform_1, window_bounds = array<i64: 5, 256>}, {pipeline_mode = #tpu.pipeline_mode<synchronous>, transform_indices = @transform_2, window_bounds = array<i64: 5, 256>}, {pipeline_mode = #tpu.pipeline_mode<synchronous>, transform_indices = @transform_3, window_bounds = array<i64: 2, 8>}, {pipeline_mode = #tpu.pipeline_mode<synchronous>, transform_indices = @transform_4, window_bounds = array<i64: 2, 1>}, {pipeline_mode = #tpu.pipeline_mode<synchronous>, transform_indices = @transform_5, window_bounds = array<i64: 2, 25>}, {pipeline_mode = #tpu.pipeline_mode<synchronous>, transform_indices = @transform_6, window_bounds = array<i64: 2, 1>}, {pipeline_mode = #tpu.pipeline_mode<synchronous>, transform_indices = @transform_7, window_bounds = array<i64: 8, 16>}, {pipeline_mode = #tpu.pipeline_mode<synchronous>, transform_indices = @transform_8, window_bounds = array<i64: 8, 1>}, {pipeline_mode = #tpu.pipeline_mode<synchronous>, transform_indices = @transform_9, window_bounds = array<i64: 8, 25>}, {pipeline_mode = #tpu.pipeline_mode<synchronous>, transform_indices = @transform_10, window_bounds = array<i64: 8, 1>}, {transform_indices = @transform_11, window_bounds = array<i64: 1, 2, 8, 256>}]} {
    %c0 = arith.constant 0 : index
    %c0_0 = arith.constant 0 : index
    %c0_1 = arith.constant 0 : index
    %0 = vector.load %arg1[%c0, %c0_0, %c0_1] : memref<1x8x256xf32, #tpu.memory_space<vmem>>, vector<1x8x256xf32>
    %1 = vector.shape_cast %0 : vector<1x8x256xf32> to vector<8x256xf32>
    %c0_2 = arith.constant 0 : index
    %c0_3 = arith.constant 0 : index
    %2 = vector.load %arg2[%c0_2, %c0_3] : memref<5x256xf32, #tpu.memory_space<vmem>>, vector<5x256xf32>
    %c0_4 = arith.constant 0 : index
    %c0_5 = arith.constant 0 : index
    %3 = vector.load %arg3[%c0_4, %c0_5] : memref<5x256xf32, #tpu.memory_space<vmem>>, vector<5x256xf32>
    %c0_6 = arith.constant 0 : index
    %c0_7 = arith.constant 0 : index
    %4 = vector.load %arg5[%c0_6, %c0_7] : memref<2x1xf32, #tpu.memory_space<vmem>>, vector<2x1xf32>
    %cst = arith.constant 0.000000e+00 : f32
    %5 = vector.broadcast %cst : f32 to vector<2x256xf32>
    %6 = vector.broadcast %4 : vector<2x1xf32> to vector<2x256xf32>
    %7 = arith.addf %6, %5 : vector<2x256xf32>
    %c0_8 = arith.constant 0 : index
    %c0_9 = arith.constant 0 : index
    %8 = vector.load %arg4[%c0_8, %c0_9] : memref<2x8xf32, #tpu.memory_space<vmem>>, vector<2x8xf32>
    %9 = vector.extract_strided_slice %8 {offsets = [0, 0], sizes = [2, 1], strides = [1, 1]} : vector<2x8xf32> to vector<2x1xf32>
    %10 = vector.extract_strided_slice %1 {offsets = [0, 0], sizes = [1, 256], strides = [1, 1]} : vector<8x256xf32> to vector<1x256xf32>
    %11 = vector.broadcast %9 : vector<2x1xf32> to vector<2x256xf32>
    %12 = vector.broadcast %10 : vector<1x256xf32> to vector<2x256xf32>
    %13 = arith.mulf %11, %12 : vector<2x256xf32>
    %14 = arith.addf %7, %13 : vector<2x256xf32>
    %15 = vector.extract_strided_slice %8 {offsets = [0, 1], sizes = [2, 1], strides = [1, 1]} : vector<2x8xf32> to vector<2x1xf32>
    %16 = vector.extract_strided_slice %1 {offsets = [1, 0], sizes = [1, 256], strides = [1, 1]} : vector<8x256xf32> to vector<1x256xf32>
    %17 = vector.broadcast %15 : vector<2x1xf32> to vector<2x256xf32>
    %18 = vector.broadcast %16 : vector<1x256xf32> to vector<2x256xf32>
    %19 = arith.mulf %17, %18 : vector<2x256xf32>
    %20 = arith.addf %14, %19 : vector<2x256xf32>
    %21 = vector.extract_strided_slice %8 {offsets = [0, 2], sizes = [2, 1], strides = [1, 1]} : vector<2x8xf32> to vector<2x1xf32>
    %22 = vector.extract_strided_slice %1 {offsets = [2, 0], sizes = [1, 256], strides = [1, 1]} : vector<8x256xf32> to vector<1x256xf32>
    %23 = vector.broadcast %21 : vector<2x1xf32> to vector<2x256xf32>
    %24 = vector.broadcast %22 : vector<1x256xf32> to vector<2x256xf32>
    %25 = arith.mulf %23, %24 : vector<2x256xf32>
    %26 = arith.addf %20, %25 : vector<2x256xf32>
    %27 = vector.extract_strided_slice %8 {offsets = [0, 3], sizes = [2, 1], strides = [1, 1]} : vector<2x8xf32> to vector<2x1xf32>
    %28 = vector.extract_strided_slice %1 {offsets = [3, 0], sizes = [1, 256], strides = [1, 1]} : vector<8x256xf32> to vector<1x256xf32>
    %29 = vector.broadcast %27 : vector<2x1xf32> to vector<2x256xf32>
    %30 = vector.broadcast %28 : vector<1x256xf32> to vector<2x256xf32>
    %31 = arith.mulf %29, %30 : vector<2x256xf32>
    %32 = arith.addf %26, %31 : vector<2x256xf32>
    %33 = vector.extract_strided_slice %8 {offsets = [0, 4], sizes = [2, 1], strides = [1, 1]} : vector<2x8xf32> to vector<2x1xf32>
    %34 = vector.extract_strided_slice %1 {offsets = [4, 0], sizes = [1, 256], strides = [1, 1]} : vector<8x256xf32> to vector<1x256xf32>
    %35 = vector.broadcast %33 : vector<2x1xf32> to vector<2x256xf32>
    %36 = vector.broadcast %34 : vector<1x256xf32> to vector<2x256xf32>
    %37 = arith.mulf %35, %36 : vector<2x256xf32>
    %38 = arith.addf %32, %37 : vector<2x256xf32>
    %39 = vector.extract_strided_slice %8 {offsets = [0, 5], sizes = [2, 1], strides = [1, 1]} : vector<2x8xf32> to vector<2x1xf32>
    %40 = vector.extract_strided_slice %1 {offsets = [5, 0], sizes = [1, 256], strides = [1, 1]} : vector<8x256xf32> to vector<1x256xf32>
    %41 = vector.broadcast %39 : vector<2x1xf32> to vector<2x256xf32>
    %42 = vector.broadcast %40 : vector<1x256xf32> to vector<2x256xf32>
    %43 = arith.mulf %41, %42 : vector<2x256xf32>
    %44 = arith.addf %38, %43 : vector<2x256xf32>
    %45 = vector.extract_strided_slice %8 {offsets = [0, 6], sizes = [2, 1], strides = [1, 1]} : vector<2x8xf32> to vector<2x1xf32>
    %46 = vector.extract_strided_slice %1 {offsets = [6, 0], sizes = [1, 256], strides = [1, 1]} : vector<8x256xf32> to vector<1x256xf32>
    %47 = vector.broadcast %45 : vector<2x1xf32> to vector<2x256xf32>
    %48 = vector.broadcast %46 : vector<1x256xf32> to vector<2x256xf32>
    %49 = arith.mulf %47, %48 : vector<2x256xf32>
    %50 = arith.addf %44, %49 : vector<2x256xf32>
    %51 = vector.extract_strided_slice %8 {offsets = [0, 7], sizes = [2, 1], strides = [1, 1]} : vector<2x8xf32> to vector<2x1xf32>
    %52 = vector.extract_strided_slice %1 {offsets = [7, 0], sizes = [1, 256], strides = [1, 1]} : vector<8x256xf32> to vector<1x256xf32>
    %53 = vector.broadcast %51 : vector<2x1xf32> to vector<2x256xf32>
    %54 = vector.broadcast %52 : vector<1x256xf32> to vector<2x256xf32>
    %55 = arith.mulf %53, %54 : vector<2x256xf32>
    %56 = arith.addf %50, %55 : vector<2x256xf32>
    %57 = arith.negf %56 : vector<2x256xf32>
    %58 = math.exp %57 : vector<2x256xf32>
    %cst_10 = arith.constant 1.000000e+00 : f32
    %59 = vector.broadcast %cst_10 : f32 to vector<2x256xf32>
    %60 = arith.addf %59, %58 : vector<2x256xf32>
    %61 = arith.divf %59, %60 : vector<2x256xf32>
    %62 = arith.mulf %56, %61 : vector<2x256xf32>
    %c0_11 = arith.constant 0 : index
    %c0_12 = arith.constant 0 : index
    %63 = vector.load %arg6[%c0_11, %c0_12] : memref<2x25xf32, #tpu.memory_space<vmem>>, vector<2x25xf32>
    %c0_13 = arith.constant 0 : index
    %c0_14 = arith.constant 0 : index
    %64 = vector.load %arg7[%c0_13, %c0_14] : memref<2x1xf32, #tpu.memory_space<vmem>>, vector<2x1xf32>
    %cst_15 = arith.constant 0.000000e+00 : f32
    %65 = vector.broadcast %cst_15 : f32 to vector<2x256xf32>
    %66 = vector.broadcast %64 : vector<2x1xf32> to vector<2x256xf32>
    %67 = arith.addf %66, %65 : vector<2x256xf32>
    %68 = vector.extract_strided_slice %3 {offsets = [0, 0], sizes = [1, 256], strides = [1, 1]} : vector<5x256xf32> to vector<1x256xf32>
    %c34_i32 = arith.constant 34 : i32
    %69 = tpu.dynamic_rotate %62 by %c34_i32 dim 1 : vector<2x256xf32>, i32 -> vector<2x256xf32>
    %70 = vector.extract_strided_slice %2 {offsets = [0, 0], sizes = [1, 256], strides = [1, 1]} : vector<5x256xf32> to vector<1x256xf32>
    %71 = arith.mulf %68, %70 : vector<1x256xf32>
    %72 = vector.broadcast %71 : vector<1x256xf32> to vector<2x256xf32>
    %73 = arith.mulf %69, %72 : vector<2x256xf32>
    %74 = vector.extract_strided_slice %63 {offsets = [0, 0], sizes = [2, 1], strides = [1, 1]} : vector<2x25xf32> to vector<2x1xf32>
    %75 = vector.broadcast %74 : vector<2x1xf32> to vector<2x256xf32>
    %76 = arith.mulf %73, %75 : vector<2x256xf32>
    %77 = arith.addf %67, %76 : vector<2x256xf32>
    %c33_i32 = arith.constant 33 : i32
    %78 = tpu.dynamic_rotate %62 by %c33_i32 dim 1 : vector<2x256xf32>, i32 -> vector<2x256xf32>
    %79 = vector.extract_strided_slice %2 {offsets = [1, 0], sizes = [1, 256], strides = [1, 1]} : vector<5x256xf32> to vector<1x256xf32>
    %80 = arith.mulf %68, %79 : vector<1x256xf32>
    %81 = vector.broadcast %80 : vector<1x256xf32> to vector<2x256xf32>
    %82 = arith.mulf %78, %81 : vector<2x256xf32>
    %83 = vector.extract_strided_slice %63 {offsets = [0, 1], sizes = [2, 1], strides = [1, 1]} : vector<2x25xf32> to vector<2x1xf32>
    %84 = vector.broadcast %83 : vector<2x1xf32> to vector<2x256xf32>
    %85 = arith.mulf %82, %84 : vector<2x256xf32>
    %86 = arith.addf %77, %85 : vector<2x256xf32>
    %c32_i32 = arith.constant 32 : i32
    %87 = tpu.dynamic_rotate %62 by %c32_i32 dim 1 : vector<2x256xf32>, i32 -> vector<2x256xf32>
    %88 = vector.extract_strided_slice %2 {offsets = [2, 0], sizes = [1, 256], strides = [1, 1]} : vector<5x256xf32> to vector<1x256xf32>
    %89 = arith.mulf %68, %88 : vector<1x256xf32>
    %90 = vector.broadcast %89 : vector<1x256xf32> to vector<2x256xf32>
    %91 = arith.mulf %87, %90 : vector<2x256xf32>
    %92 = vector.extract_strided_slice %63 {offsets = [0, 2], sizes = [2, 1], strides = [1, 1]} : vector<2x25xf32> to vector<2x1xf32>
    %93 = vector.broadcast %92 : vector<2x1xf32> to vector<2x256xf32>
    %94 = arith.mulf %91, %93 : vector<2x256xf32>
    %95 = arith.addf %86, %94 : vector<2x256xf32>
    %c31_i32 = arith.constant 31 : i32
    %96 = tpu.dynamic_rotate %62 by %c31_i32 dim 1 : vector<2x256xf32>, i32 -> vector<2x256xf32>
    %97 = vector.extract_strided_slice %2 {offsets = [3, 0], sizes = [1, 256], strides = [1, 1]} : vector<5x256xf32> to vector<1x256xf32>
    %98 = arith.mulf %68, %97 : vector<1x256xf32>
    %99 = vector.broadcast %98 : vector<1x256xf32> to vector<2x256xf32>
    %100 = arith.mulf %96, %99 : vector<2x256xf32>
    %101 = vector.extract_strided_slice %63 {offsets = [0, 3], sizes = [2, 1], strides = [1, 1]} : vector<2x25xf32> to vector<2x1xf32>
    %102 = vector.broadcast %101 : vector<2x1xf32> to vector<2x256xf32>
    %103 = arith.mulf %100, %102 : vector<2x256xf32>
    %104 = arith.addf %95, %103 : vector<2x256xf32>
    %c30_i32 = arith.constant 30 : i32
    %105 = tpu.dynamic_rotate %62 by %c30_i32 dim 1 : vector<2x256xf32>, i32 -> vector<2x256xf32>
    %106 = vector.extract_strided_slice %2 {offsets = [4, 0], sizes = [1, 256], strides = [1, 1]} : vector<5x256xf32> to vector<1x256xf32>
    %107 = arith.mulf %68, %106 : vector<1x256xf32>
    %108 = vector.broadcast %107 : vector<1x256xf32> to vector<2x256xf32>
    %109 = arith.mulf %105, %108 : vector<2x256xf32>
    %110 = vector.extract_strided_slice %63 {offsets = [0, 4], sizes = [2, 1], strides = [1, 1]} : vector<2x25xf32> to vector<2x1xf32>
    %111 = vector.broadcast %110 : vector<2x1xf32> to vector<2x256xf32>
    %112 = arith.mulf %109, %111 : vector<2x256xf32>
    %113 = arith.addf %104, %112 : vector<2x256xf32>
    %114 = vector.extract_strided_slice %3 {offsets = [1, 0], sizes = [1, 256], strides = [1, 1]} : vector<5x256xf32> to vector<1x256xf32>
    %c18_i32 = arith.constant 18 : i32
    %115 = tpu.dynamic_rotate %62 by %c18_i32 dim 1 : vector<2x256xf32>, i32 -> vector<2x256xf32>
    %116 = vector.extract_strided_slice %2 {offsets = [0, 0], sizes = [1, 256], strides = [1, 1]} : vector<5x256xf32> to vector<1x256xf32>
    %117 = arith.mulf %114, %116 : vector<1x256xf32>
    %118 = vector.broadcast %117 : vector<1x256xf32> to vector<2x256xf32>
    %119 = arith.mulf %115, %118 : vector<2x256xf32>
    %120 = vector.extract_strided_slice %63 {offsets = [0, 5], sizes = [2, 1], strides = [1, 1]} : vector<2x25xf32> to vector<2x1xf32>
    %121 = vector.broadcast %120 : vector<2x1xf32> to vector<2x256xf32>
    %122 = arith.mulf %119, %121 : vector<2x256xf32>
    %123 = arith.addf %113, %122 : vector<2x256xf32>
    %c17_i32 = arith.constant 17 : i32
    %124 = tpu.dynamic_rotate %62 by %c17_i32 dim 1 : vector<2x256xf32>, i32 -> vector<2x256xf32>
    %125 = vector.extract_strided_slice %2 {offsets = [1, 0], sizes = [1, 256], strides = [1, 1]} : vector<5x256xf32> to vector<1x256xf32>
    %126 = arith.mulf %114, %125 : vector<1x256xf32>
    %127 = vector.broadcast %126 : vector<1x256xf32> to vector<2x256xf32>
    %128 = arith.mulf %124, %127 : vector<2x256xf32>
    %129 = vector.extract_strided_slice %63 {offsets = [0, 6], sizes = [2, 1], strides = [1, 1]} : vector<2x25xf32> to vector<2x1xf32>
    %130 = vector.broadcast %129 : vector<2x1xf32> to vector<2x256xf32>
    %131 = arith.mulf %128, %130 : vector<2x256xf32>
    %132 = arith.addf %123, %131 : vector<2x256xf32>
    %c16_i32 = arith.constant 16 : i32
    %133 = tpu.dynamic_rotate %62 by %c16_i32 dim 1 : vector<2x256xf32>, i32 -> vector<2x256xf32>
    %134 = vector.extract_strided_slice %2 {offsets = [2, 0], sizes = [1, 256], strides = [1, 1]} : vector<5x256xf32> to vector<1x256xf32>
    %135 = arith.mulf %114, %134 : vector<1x256xf32>
    %136 = vector.broadcast %135 : vector<1x256xf32> to vector<2x256xf32>
    %137 = arith.mulf %133, %136 : vector<2x256xf32>
    %138 = vector.extract_strided_slice %63 {offsets = [0, 7], sizes = [2, 1], strides = [1, 1]} : vector<2x25xf32> to vector<2x1xf32>
    %139 = vector.broadcast %138 : vector<2x1xf32> to vector<2x256xf32>
    %140 = arith.mulf %137, %139 : vector<2x256xf32>
    %141 = arith.addf %132, %140 : vector<2x256xf32>
    %c15_i32 = arith.constant 15 : i32
    %142 = tpu.dynamic_rotate %62 by %c15_i32 dim 1 : vector<2x256xf32>, i32 -> vector<2x256xf32>
    %143 = vector.extract_strided_slice %2 {offsets = [3, 0], sizes = [1, 256], strides = [1, 1]} : vector<5x256xf32> to vector<1x256xf32>
    %144 = arith.mulf %114, %143 : vector<1x256xf32>
    %145 = vector.broadcast %144 : vector<1x256xf32> to vector<2x256xf32>
    %146 = arith.mulf %142, %145 : vector<2x256xf32>
    %147 = vector.extract_strided_slice %63 {offsets = [0, 8], sizes = [2, 1], strides = [1, 1]} : vector<2x25xf32> to vector<2x1xf32>
    %148 = vector.broadcast %147 : vector<2x1xf32> to vector<2x256xf32>
    %149 = arith.mulf %146, %148 : vector<2x256xf32>
    %150 = arith.addf %141, %149 : vector<2x256xf32>
    %c14_i32 = arith.constant 14 : i32
    %151 = tpu.dynamic_rotate %62 by %c14_i32 dim 1 : vector<2x256xf32>, i32 -> vector<2x256xf32>
    %152 = vector.extract_strided_slice %2 {offsets = [4, 0], sizes = [1, 256], strides = [1, 1]} : vector<5x256xf32> to vector<1x256xf32>
    %153 = arith.mulf %114, %152 : vector<1x256xf32>
    %154 = vector.broadcast %153 : vector<1x256xf32> to vector<2x256xf32>
    %155 = arith.mulf %151, %154 : vector<2x256xf32>
    %156 = vector.extract_strided_slice %63 {offsets = [0, 9], sizes = [2, 1], strides = [1, 1]} : vector<2x25xf32> to vector<2x1xf32>
    %157 = vector.broadcast %156 : vector<2x1xf32> to vector<2x256xf32>
    %158 = arith.mulf %155, %157 : vector<2x256xf32>
    %159 = arith.addf %150, %158 : vector<2x256xf32>
    %160 = vector.extract_strided_slice %3 {offsets = [2, 0], sizes = [1, 256], strides = [1, 1]} : vector<5x256xf32> to vector<1x256xf32>
    %c2_i32 = arith.constant 2 : i32
    %161 = tpu.dynamic_rotate %62 by %c2_i32 dim 1 : vector<2x256xf32>, i32 -> vector<2x256xf32>
    %162 = vector.extract_strided_slice %2 {offsets = [0, 0], sizes = [1, 256], strides = [1, 1]} : vector<5x256xf32> to vector<1x256xf32>
    %163 = arith.mulf %160, %162 : vector<1x256xf32>
    %164 = vector.broadcast %163 : vector<1x256xf32> to vector<2x256xf32>
    %165 = arith.mulf %161, %164 : vector<2x256xf32>
    %166 = vector.extract_strided_slice %63 {offsets = [0, 10], sizes = [2, 1], strides = [1, 1]} : vector<2x25xf32> to vector<2x1xf32>
    %167 = vector.broadcast %166 : vector<2x1xf32> to vector<2x256xf32>
    %168 = arith.mulf %165, %167 : vector<2x256xf32>
    %169 = arith.addf %159, %168 : vector<2x256xf32>
    %c1_i32 = arith.constant 1 : i32
    %170 = tpu.dynamic_rotate %62 by %c1_i32 dim 1 : vector<2x256xf32>, i32 -> vector<2x256xf32>
    %171 = vector.extract_strided_slice %2 {offsets = [1, 0], sizes = [1, 256], strides = [1, 1]} : vector<5x256xf32> to vector<1x256xf32>
    %172 = arith.mulf %160, %171 : vector<1x256xf32>
    %173 = vector.broadcast %172 : vector<1x256xf32> to vector<2x256xf32>
    %174 = arith.mulf %170, %173 : vector<2x256xf32>
    %175 = vector.extract_strided_slice %63 {offsets = [0, 11], sizes = [2, 1], strides = [1, 1]} : vector<2x25xf32> to vector<2x1xf32>
    %176 = vector.broadcast %175 : vector<2x1xf32> to vector<2x256xf32>
    %177 = arith.mulf %174, %176 : vector<2x256xf32>
    %178 = arith.addf %169, %177 : vector<2x256xf32>
    %179 = vector.extract_strided_slice %2 {offsets = [2, 0], sizes = [1, 256], strides = [1, 1]} : vector<5x256xf32> to vector<1x256xf32>
    %180 = arith.mulf %160, %179 : vector<1x256xf32>
    %181 = vector.broadcast %180 : vector<1x256xf32> to vector<2x256xf32>
    %182 = arith.mulf %62, %181 : vector<2x256xf32>
    %183 = vector.extract_strided_slice %63 {offsets = [0, 12], sizes = [2, 1], strides = [1, 1]} : vector<2x25xf32> to vector<2x1xf32>
    %184 = vector.broadcast %183 : vector<2x1xf32> to vector<2x256xf32>
    %185 = arith.mulf %182, %184 : vector<2x256xf32>
    %186 = arith.addf %178, %185 : vector<2x256xf32>
    %c255_i32 = arith.constant 255 : i32
    %187 = tpu.dynamic_rotate %62 by %c255_i32 dim 1 : vector<2x256xf32>, i32 -> vector<2x256xf32>
    %188 = vector.extract_strided_slice %2 {offsets = [3, 0], sizes = [1, 256], strides = [1, 1]} : vector<5x256xf32> to vector<1x256xf32>
    %189 = arith.mulf %160, %188 : vector<1x256xf32>
    %190 = vector.broadcast %189 : vector<1x256xf32> to vector<2x256xf32>
    %191 = arith.mulf %187, %190 : vector<2x256xf32>
    %192 = vector.extract_strided_slice %63 {offsets = [0, 13], sizes = [2, 1], strides = [1, 1]} : vector<2x25xf32> to vector<2x1xf32>
    %193 = vector.broadcast %192 : vector<2x1xf32> to vector<2x256xf32>
    %194 = arith.mulf %191, %193 : vector<2x256xf32>
    %195 = arith.addf %186, %194 : vector<2x256xf32>
    %c254_i32 = arith.constant 254 : i32
    %196 = tpu.dynamic_rotate %62 by %c254_i32 dim 1 : vector<2x256xf32>, i32 -> vector<2x256xf32>
    %197 = vector.extract_strided_slice %2 {offsets = [4, 0], sizes = [1, 256], strides = [1, 1]} : vector<5x256xf32> to vector<1x256xf32>
    %198 = arith.mulf %160, %197 : vector<1x256xf32>
    %199 = vector.broadcast %198 : vector<1x256xf32> to vector<2x256xf32>
    %200 = arith.mulf %196, %199 : vector<2x256xf32>
    %201 = vector.extract_strided_slice %63 {offsets = [0, 14], sizes = [2, 1], strides = [1, 1]} : vector<2x25xf32> to vector<2x1xf32>
    %202 = vector.broadcast %201 : vector<2x1xf32> to vector<2x256xf32>
    %203 = arith.mulf %200, %202 : vector<2x256xf32>
    %204 = arith.addf %195, %203 : vector<2x256xf32>
    %205 = vector.extract_strided_slice %3 {offsets = [3, 0], sizes = [1, 256], strides = [1, 1]} : vector<5x256xf32> to vector<1x256xf32>
    %c242_i32 = arith.constant 242 : i32
    %206 = tpu.dynamic_rotate %62 by %c242_i32 dim 1 : vector<2x256xf32>, i32 -> vector<2x256xf32>
    %207 = vector.extract_strided_slice %2 {offsets = [0, 0], sizes = [1, 256], strides = [1, 1]} : vector<5x256xf32> to vector<1x256xf32>
    %208 = arith.mulf %205, %207 : vector<1x256xf32>
    %209 = vector.broadcast %208 : vector<1x256xf32> to vector<2x256xf32>
    %210 = arith.mulf %206, %209 : vector<2x256xf32>
    %211 = vector.extract_strided_slice %63 {offsets = [0, 15], sizes = [2, 1], strides = [1, 1]} : vector<2x25xf32> to vector<2x1xf32>
    %212 = vector.broadcast %211 : vector<2x1xf32> to vector<2x256xf32>
    %213 = arith.mulf %210, %212 : vector<2x256xf32>
    %214 = arith.addf %204, %213 : vector<2x256xf32>
    %c241_i32 = arith.constant 241 : i32
    %215 = tpu.dynamic_rotate %62 by %c241_i32 dim 1 : vector<2x256xf32>, i32 -> vector<2x256xf32>
    %216 = vector.extract_strided_slice %2 {offsets = [1, 0], sizes = [1, 256], strides = [1, 1]} : vector<5x256xf32> to vector<1x256xf32>
    %217 = arith.mulf %205, %216 : vector<1x256xf32>
    %218 = vector.broadcast %217 : vector<1x256xf32> to vector<2x256xf32>
    %219 = arith.mulf %215, %218 : vector<2x256xf32>
    %220 = vector.extract_strided_slice %63 {offsets = [0, 16], sizes = [2, 1], strides = [1, 1]} : vector<2x25xf32> to vector<2x1xf32>
    %221 = vector.broadcast %220 : vector<2x1xf32> to vector<2x256xf32>
    %222 = arith.mulf %219, %221 : vector<2x256xf32>
    %223 = arith.addf %214, %222 : vector<2x256xf32>
    %c240_i32 = arith.constant 240 : i32
    %224 = tpu.dynamic_rotate %62 by %c240_i32 dim 1 : vector<2x256xf32>, i32 -> vector<2x256xf32>
    %225 = vector.extract_strided_slice %2 {offsets = [2, 0], sizes = [1, 256], strides = [1, 1]} : vector<5x256xf32> to vector<1x256xf32>
    %226 = arith.mulf %205, %225 : vector<1x256xf32>
    %227 = vector.broadcast %226 : vector<1x256xf32> to vector<2x256xf32>
    %228 = arith.mulf %224, %227 : vector<2x256xf32>
    %229 = vector.extract_strided_slice %63 {offsets = [0, 17], sizes = [2, 1], strides = [1, 1]} : vector<2x25xf32> to vector<2x1xf32>
    %230 = vector.broadcast %229 : vector<2x1xf32> to vector<2x256xf32>
    %231 = arith.mulf %228, %230 : vector<2x256xf32>
    %232 = arith.addf %223, %231 : vector<2x256xf32>
    %c239_i32 = arith.constant 239 : i32
    %233 = tpu.dynamic_rotate %62 by %c239_i32 dim 1 : vector<2x256xf32>, i32 -> vector<2x256xf32>
    %234 = vector.extract_strided_slice %2 {offsets = [3, 0], sizes = [1, 256], strides = [1, 1]} : vector<5x256xf32> to vector<1x256xf32>
    %235 = arith.mulf %205, %234 : vector<1x256xf32>
    %236 = vector.broadcast %235 : vector<1x256xf32> to vector<2x256xf32>
    %237 = arith.mulf %233, %236 : vector<2x256xf32>
    %238 = vector.extract_strided_slice %63 {offsets = [0, 18], sizes = [2, 1], strides = [1, 1]} : vector<2x25xf32> to vector<2x1xf32>
    %239 = vector.broadcast %238 : vector<2x1xf32> to vector<2x256xf32>
    %240 = arith.mulf %237, %239 : vector<2x256xf32>
    %241 = arith.addf %232, %240 : vector<2x256xf32>
    %c238_i32 = arith.constant 238 : i32
    %242 = tpu.dynamic_rotate %62 by %c238_i32 dim 1 : vector<2x256xf32>, i32 -> vector<2x256xf32>
    %243 = vector.extract_strided_slice %2 {offsets = [4, 0], sizes = [1, 256], strides = [1, 1]} : vector<5x256xf32> to vector<1x256xf32>
    %244 = arith.mulf %205, %243 : vector<1x256xf32>
    %245 = vector.broadcast %244 : vector<1x256xf32> to vector<2x256xf32>
    %246 = arith.mulf %242, %245 : vector<2x256xf32>
    %247 = vector.extract_strided_slice %63 {offsets = [0, 19], sizes = [2, 1], strides = [1, 1]} : vector<2x25xf32> to vector<2x1xf32>
    %248 = vector.broadcast %247 : vector<2x1xf32> to vector<2x256xf32>
    %249 = arith.mulf %246, %248 : vector<2x256xf32>
    %250 = arith.addf %241, %249 : vector<2x256xf32>
    %251 = vector.extract_strided_slice %3 {offsets = [4, 0], sizes = [1, 256], strides = [1, 1]} : vector<5x256xf32> to vector<1x256xf32>
    %c226_i32 = arith.constant 226 : i32
    %252 = tpu.dynamic_rotate %62 by %c226_i32 dim 1 : vector<2x256xf32>, i32 -> vector<2x256xf32>
    %253 = vector.extract_strided_slice %2 {offsets = [0, 0], sizes = [1, 256], strides = [1, 1]} : vector<5x256xf32> to vector<1x256xf32>
    %254 = arith.mulf %251, %253 : vector<1x256xf32>
    %255 = vector.broadcast %254 : vector<1x256xf32> to vector<2x256xf32>
    %256 = arith.mulf %252, %255 : vector<2x256xf32>
    %257 = vector.extract_strided_slice %63 {offsets = [0, 20], sizes = [2, 1], strides = [1, 1]} : vector<2x25xf32> to vector<2x1xf32>
    %258 = vector.broadcast %257 : vector<2x1xf32> to vector<2x256xf32>
    %259 = arith.mulf %256, %258 : vector<2x256xf32>
    %260 = arith.addf %250, %259 : vector<2x256xf32>
    %c225_i32 = arith.constant 225 : i32
    %261 = tpu.dynamic_rotate %62 by %c225_i32 dim 1 : vector<2x256xf32>, i32 -> vector<2x256xf32>
    %262 = vector.extract_strided_slice %2 {offsets = [1, 0], sizes = [1, 256], strides = [1, 1]} : vector<5x256xf32> to vector<1x256xf32>
    %263 = arith.mulf %251, %262 : vector<1x256xf32>
    %264 = vector.broadcast %263 : vector<1x256xf32> to vector<2x256xf32>
    %265 = arith.mulf %261, %264 : vector<2x256xf32>
    %266 = vector.extract_strided_slice %63 {offsets = [0, 21], sizes = [2, 1], strides = [1, 1]} : vector<2x25xf32> to vector<2x1xf32>
    %267 = vector.broadcast %266 : vector<2x1xf32> to vector<2x256xf32>
    %268 = arith.mulf %265, %267 : vector<2x256xf32>
    %269 = arith.addf %260, %268 : vector<2x256xf32>
    %c224_i32 = arith.constant 224 : i32
    %270 = tpu.dynamic_rotate %62 by %c224_i32 dim 1 : vector<2x256xf32>, i32 -> vector<2x256xf32>
    %271 = vector.extract_strided_slice %2 {offsets = [2, 0], sizes = [1, 256], strides = [1, 1]} : vector<5x256xf32> to vector<1x256xf32>
    %272 = arith.mulf %251, %271 : vector<1x256xf32>
    %273 = vector.broadcast %272 : vector<1x256xf32> to vector<2x256xf32>
    %274 = arith.mulf %270, %273 : vector<2x256xf32>
    %275 = vector.extract_strided_slice %63 {offsets = [0, 22], sizes = [2, 1], strides = [1, 1]} : vector<2x25xf32> to vector<2x1xf32>
    %276 = vector.broadcast %275 : vector<2x1xf32> to vector<2x256xf32>
    %277 = arith.mulf %274, %276 : vector<2x256xf32>
    %278 = arith.addf %269, %277 : vector<2x256xf32>
    %c223_i32 = arith.constant 223 : i32
    %279 = tpu.dynamic_rotate %62 by %c223_i32 dim 1 : vector<2x256xf32>, i32 -> vector<2x256xf32>
    %280 = vector.extract_strided_slice %2 {offsets = [3, 0], sizes = [1, 256], strides = [1, 1]} : vector<5x256xf32> to vector<1x256xf32>
    %281 = arith.mulf %251, %280 : vector<1x256xf32>
    %282 = vector.broadcast %281 : vector<1x256xf32> to vector<2x256xf32>
    %283 = arith.mulf %279, %282 : vector<2x256xf32>
    %284 = vector.extract_strided_slice %63 {offsets = [0, 23], sizes = [2, 1], strides = [1, 1]} : vector<2x25xf32> to vector<2x1xf32>
    %285 = vector.broadcast %284 : vector<2x1xf32> to vector<2x256xf32>
    %286 = arith.mulf %283, %285 : vector<2x256xf32>
    %287 = arith.addf %278, %286 : vector<2x256xf32>
    %c222_i32 = arith.constant 222 : i32
    %288 = tpu.dynamic_rotate %62 by %c222_i32 dim 1 : vector<2x256xf32>, i32 -> vector<2x256xf32>
    %289 = vector.extract_strided_slice %2 {offsets = [4, 0], sizes = [1, 256], strides = [1, 1]} : vector<5x256xf32> to vector<1x256xf32>
    %290 = arith.mulf %251, %289 : vector<1x256xf32>
    %291 = vector.broadcast %290 : vector<1x256xf32> to vector<2x256xf32>
    %292 = arith.mulf %288, %291 : vector<2x256xf32>
    %293 = vector.extract_strided_slice %63 {offsets = [0, 24], sizes = [2, 1], strides = [1, 1]} : vector<2x25xf32> to vector<2x1xf32>
    %294 = vector.broadcast %293 : vector<2x1xf32> to vector<2x256xf32>
    %295 = arith.mulf %292, %294 : vector<2x256xf32>
    %296 = arith.addf %287, %295 : vector<2x256xf32>
    %297 = arith.negf %296 : vector<2x256xf32>
    %298 = math.exp %297 : vector<2x256xf32>
    %cst_16 = arith.constant 1.000000e+00 : f32
    %299 = vector.broadcast %cst_16 : f32 to vector<2x256xf32>
    %300 = arith.addf %299, %298 : vector<2x256xf32>
    %301 = arith.divf %299, %300 : vector<2x256xf32>
    %302 = arith.mulf %296, %301 : vector<2x256xf32>
    %303 = tpu.concatenate %62, %302 in 0 : vector<2x256xf32>, vector<2x256xf32> -> vector<4x256xf32>
    %c0_17 = arith.constant 0 : index
    %c0_18 = arith.constant 0 : index
    %304 = vector.load %arg8[%c0_17, %c0_18] : memref<8x16xf32, #tpu.memory_space<vmem>>, vector<8x16xf32>
    %c0_19 = arith.constant 0 : index
    %c0_20 = arith.constant 0 : index
    %305 = vector.load %arg9[%c0_19, %c0_20] : memref<8x1xf32, #tpu.memory_space<vmem>>, vector<8x1xf32>
    %cst_21 = arith.constant 0.000000e+00 : f32
    %306 = vector.broadcast %cst_21 : f32 to vector<8x256xf32>
    %307 = vector.broadcast %305 : vector<8x1xf32> to vector<8x256xf32>
    %308 = arith.addf %307, %306 : vector<8x256xf32>
    %309 = vector.extract_strided_slice %304 {offsets = [0, 0], sizes = [8, 1], strides = [1, 1]} : vector<8x16xf32> to vector<8x1xf32>
    %310 = vector.extract_strided_slice %303 {offsets = [0, 0], sizes = [1, 256], strides = [1, 1]} : vector<4x256xf32> to vector<1x256xf32>
    %311 = vector.broadcast %309 : vector<8x1xf32> to vector<8x256xf32>
    %312 = vector.broadcast %310 : vector<1x256xf32> to vector<8x256xf32>
    %313 = arith.mulf %311, %312 : vector<8x256xf32>
    %314 = arith.addf %308, %313 : vector<8x256xf32>
    %315 = vector.extract_strided_slice %304 {offsets = [0, 1], sizes = [8, 1], strides = [1, 1]} : vector<8x16xf32> to vector<8x1xf32>
    %316 = vector.extract_strided_slice %303 {offsets = [1, 0], sizes = [1, 256], strides = [1, 1]} : vector<4x256xf32> to vector<1x256xf32>
    %317 = vector.broadcast %315 : vector<8x1xf32> to vector<8x256xf32>
    %318 = vector.broadcast %316 : vector<1x256xf32> to vector<8x256xf32>
    %319 = arith.mulf %317, %318 : vector<8x256xf32>
    %320 = arith.addf %314, %319 : vector<8x256xf32>
    %321 = vector.extract_strided_slice %304 {offsets = [0, 2], sizes = [8, 1], strides = [1, 1]} : vector<8x16xf32> to vector<8x1xf32>
    %322 = vector.extract_strided_slice %303 {offsets = [2, 0], sizes = [1, 256], strides = [1, 1]} : vector<4x256xf32> to vector<1x256xf32>
    %323 = vector.broadcast %321 : vector<8x1xf32> to vector<8x256xf32>
    %324 = vector.broadcast %322 : vector<1x256xf32> to vector<8x256xf32>
    %325 = arith.mulf %323, %324 : vector<8x256xf32>
    %326 = arith.addf %320, %325 : vector<8x256xf32>
    %327 = vector.extract_strided_slice %304 {offsets = [0, 3], sizes = [8, 1], strides = [1, 1]} : vector<8x16xf32> to vector<8x1xf32>
    %328 = vector.extract_strided_slice %303 {offsets = [3, 0], sizes = [1, 256], strides = [1, 1]} : vector<4x256xf32> to vector<1x256xf32>
    %329 = vector.broadcast %327 : vector<8x1xf32> to vector<8x256xf32>
    %330 = vector.broadcast %328 : vector<1x256xf32> to vector<8x256xf32>
    %331 = arith.mulf %329, %330 : vector<8x256xf32>
    %332 = arith.addf %326, %331 : vector<8x256xf32>
    %c2_i32_22 = arith.constant 2 : i32
    %333 = tpu.dynamic_rotate %303 by %c2_i32_22 dim 1 : vector<4x256xf32>, i32 -> vector<4x256xf32>
    %334 = vector.extract_strided_slice %2 {offsets = [0, 0], sizes = [1, 256], strides = [1, 1]} : vector<5x256xf32> to vector<1x256xf32>
    %cst_23 = arith.constant 5.000000e-01 : f32
    %335 = vector.broadcast %cst_23 : f32 to vector<1x256xf32>
    %336 = arith.cmpf ogt, %334, %335 : vector<1x256xf32>
    %cst_24 = arith.constant -3.40282347E+38 : f32
    %337 = vector.shape_cast %336 : vector<1x256xi1> to vector<1x256xi1>
    %338 = vector.broadcast %337 : vector<1x256xi1> to vector<4x256xi1>
    %339 = vector.broadcast %cst_24 : f32 to vector<4x256xf32>
    %340 = arith.select %338, %333, %339 : vector<4x256xi1>, vector<4x256xf32>
    %341 = arith.maximumf %303, %340 : vector<4x256xf32>
    %c1_i32_25 = arith.constant 1 : i32
    %342 = tpu.dynamic_rotate %303 by %c1_i32_25 dim 1 : vector<4x256xf32>, i32 -> vector<4x256xf32>
    %343 = vector.extract_strided_slice %2 {offsets = [1, 0], sizes = [1, 256], strides = [1, 1]} : vector<5x256xf32> to vector<1x256xf32>
    %cst_26 = arith.constant 5.000000e-01 : f32
    %344 = vector.broadcast %cst_26 : f32 to vector<1x256xf32>
    %345 = arith.cmpf ogt, %343, %344 : vector<1x256xf32>
    %cst_27 = arith.constant -3.40282347E+38 : f32
    %346 = vector.shape_cast %345 : vector<1x256xi1> to vector<1x256xi1>
    %347 = vector.broadcast %346 : vector<1x256xi1> to vector<4x256xi1>
    %348 = vector.broadcast %cst_27 : f32 to vector<4x256xf32>
    %349 = arith.select %347, %342, %348 : vector<4x256xi1>, vector<4x256xf32>
    %350 = arith.maximumf %341, %349 : vector<4x256xf32>
    %c255_i32_28 = arith.constant 255 : i32
    %351 = tpu.dynamic_rotate %303 by %c255_i32_28 dim 1 : vector<4x256xf32>, i32 -> vector<4x256xf32>
    %352 = vector.extract_strided_slice %2 {offsets = [3, 0], sizes = [1, 256], strides = [1, 1]} : vector<5x256xf32> to vector<1x256xf32>
    %cst_29 = arith.constant 5.000000e-01 : f32
    %353 = vector.broadcast %cst_29 : f32 to vector<1x256xf32>
    %354 = arith.cmpf ogt, %352, %353 : vector<1x256xf32>
    %cst_30 = arith.constant -3.40282347E+38 : f32
    %355 = vector.shape_cast %354 : vector<1x256xi1> to vector<1x256xi1>
    %356 = vector.broadcast %355 : vector<1x256xi1> to vector<4x256xi1>
    %357 = vector.broadcast %cst_30 : f32 to vector<4x256xf32>
    %358 = arith.select %356, %351, %357 : vector<4x256xi1>, vector<4x256xf32>
    %359 = arith.maximumf %350, %358 : vector<4x256xf32>
    %c254_i32_31 = arith.constant 254 : i32
    %360 = tpu.dynamic_rotate %303 by %c254_i32_31 dim 1 : vector<4x256xf32>, i32 -> vector<4x256xf32>
    %361 = vector.extract_strided_slice %2 {offsets = [4, 0], sizes = [1, 256], strides = [1, 1]} : vector<5x256xf32> to vector<1x256xf32>
    %cst_32 = arith.constant 5.000000e-01 : f32
    %362 = vector.broadcast %cst_32 : f32 to vector<1x256xf32>
    %363 = arith.cmpf ogt, %361, %362 : vector<1x256xf32>
    %cst_33 = arith.constant -3.40282347E+38 : f32
    %364 = vector.shape_cast %363 : vector<1x256xi1> to vector<1x256xi1>
    %365 = vector.broadcast %364 : vector<1x256xi1> to vector<4x256xi1>
    %366 = vector.broadcast %cst_33 : f32 to vector<4x256xf32>
    %367 = arith.select %365, %360, %366 : vector<4x256xi1>, vector<4x256xf32>
    %368 = arith.maximumf %359, %367 : vector<4x256xf32>
    %c32_i32_34 = arith.constant 32 : i32
    %369 = tpu.dynamic_rotate %368 by %c32_i32_34 dim 1 : vector<4x256xf32>, i32 -> vector<4x256xf32>
    %370 = vector.extract_strided_slice %3 {offsets = [0, 0], sizes = [1, 256], strides = [1, 1]} : vector<5x256xf32> to vector<1x256xf32>
    %cst_35 = arith.constant 5.000000e-01 : f32
    %371 = vector.broadcast %cst_35 : f32 to vector<1x256xf32>
    %372 = arith.cmpf ogt, %370, %371 : vector<1x256xf32>
    %cst_36 = arith.constant -3.40282347E+38 : f32
    %373 = vector.shape_cast %372 : vector<1x256xi1> to vector<1x256xi1>
    %374 = vector.broadcast %373 : vector<1x256xi1> to vector<4x256xi1>
    %375 = vector.broadcast %cst_36 : f32 to vector<4x256xf32>
    %376 = arith.select %374, %369, %375 : vector<4x256xi1>, vector<4x256xf32>
    %377 = arith.maximumf %368, %376 : vector<4x256xf32>
    %c16_i32_37 = arith.constant 16 : i32
    %378 = tpu.dynamic_rotate %368 by %c16_i32_37 dim 1 : vector<4x256xf32>, i32 -> vector<4x256xf32>
    %379 = vector.extract_strided_slice %3 {offsets = [1, 0], sizes = [1, 256], strides = [1, 1]} : vector<5x256xf32> to vector<1x256xf32>
    %cst_38 = arith.constant 5.000000e-01 : f32
    %380 = vector.broadcast %cst_38 : f32 to vector<1x256xf32>
    %381 = arith.cmpf ogt, %379, %380 : vector<1x256xf32>
    %cst_39 = arith.constant -3.40282347E+38 : f32
    %382 = vector.shape_cast %381 : vector<1x256xi1> to vector<1x256xi1>
    %383 = vector.broadcast %382 : vector<1x256xi1> to vector<4x256xi1>
    %384 = vector.broadcast %cst_39 : f32 to vector<4x256xf32>
    %385 = arith.select %383, %378, %384 : vector<4x256xi1>, vector<4x256xf32>
    %386 = arith.maximumf %377, %385 : vector<4x256xf32>
    %c240_i32_40 = arith.constant 240 : i32
    %387 = tpu.dynamic_rotate %368 by %c240_i32_40 dim 1 : vector<4x256xf32>, i32 -> vector<4x256xf32>
    %388 = vector.extract_strided_slice %3 {offsets = [3, 0], sizes = [1, 256], strides = [1, 1]} : vector<5x256xf32> to vector<1x256xf32>
    %cst_41 = arith.constant 5.000000e-01 : f32
    %389 = vector.broadcast %cst_41 : f32 to vector<1x256xf32>
    %390 = arith.cmpf ogt, %388, %389 : vector<1x256xf32>
    %cst_42 = arith.constant -3.40282347E+38 : f32
    %391 = vector.shape_cast %390 : vector<1x256xi1> to vector<1x256xi1>
    %392 = vector.broadcast %391 : vector<1x256xi1> to vector<4x256xi1>
    %393 = vector.broadcast %cst_42 : f32 to vector<4x256xf32>
    %394 = arith.select %392, %387, %393 : vector<4x256xi1>, vector<4x256xf32>
    %395 = arith.maximumf %386, %394 : vector<4x256xf32>
    %c224_i32_43 = arith.constant 224 : i32
    %396 = tpu.dynamic_rotate %368 by %c224_i32_43 dim 1 : vector<4x256xf32>, i32 -> vector<4x256xf32>
    %397 = vector.extract_strided_slice %3 {offsets = [4, 0], sizes = [1, 256], strides = [1, 1]} : vector<5x256xf32> to vector<1x256xf32>
    %cst_44 = arith.constant 5.000000e-01 : f32
    %398 = vector.broadcast %cst_44 : f32 to vector<1x256xf32>
    %399 = arith.cmpf ogt, %397, %398 : vector<1x256xf32>
    %cst_45 = arith.constant -3.40282347E+38 : f32
    %400 = vector.shape_cast %399 : vector<1x256xi1> to vector<1x256xi1>
    %401 = vector.broadcast %400 : vector<1x256xi1> to vector<4x256xi1>
    %402 = vector.broadcast %cst_45 : f32 to vector<4x256xf32>
    %403 = arith.select %401, %396, %402 : vector<4x256xi1>, vector<4x256xf32>
    %404 = arith.maximumf %395, %403 : vector<4x256xf32>
    %405 = vector.extract_strided_slice %304 {offsets = [0, 4], sizes = [8, 1], strides = [1, 1]} : vector<8x16xf32> to vector<8x1xf32>
    %406 = vector.extract_strided_slice %404 {offsets = [0, 0], sizes = [1, 256], strides = [1, 1]} : vector<4x256xf32> to vector<1x256xf32>
    %407 = vector.broadcast %405 : vector<8x1xf32> to vector<8x256xf32>
    %408 = vector.broadcast %406 : vector<1x256xf32> to vector<8x256xf32>
    %409 = arith.mulf %407, %408 : vector<8x256xf32>
    %410 = arith.addf %332, %409 : vector<8x256xf32>
    %411 = vector.extract_strided_slice %304 {offsets = [0, 5], sizes = [8, 1], strides = [1, 1]} : vector<8x16xf32> to vector<8x1xf32>
    %412 = vector.extract_strided_slice %404 {offsets = [1, 0], sizes = [1, 256], strides = [1, 1]} : vector<4x256xf32> to vector<1x256xf32>
    %413 = vector.broadcast %411 : vector<8x1xf32> to vector<8x256xf32>
    %414 = vector.broadcast %412 : vector<1x256xf32> to vector<8x256xf32>
    %415 = arith.mulf %413, %414 : vector<8x256xf32>
    %416 = arith.addf %410, %415 : vector<8x256xf32>
    %417 = vector.extract_strided_slice %304 {offsets = [0, 6], sizes = [8, 1], strides = [1, 1]} : vector<8x16xf32> to vector<8x1xf32>
    %418 = vector.extract_strided_slice %404 {offsets = [2, 0], sizes = [1, 256], strides = [1, 1]} : vector<4x256xf32> to vector<1x256xf32>
    %419 = vector.broadcast %417 : vector<8x1xf32> to vector<8x256xf32>
    %420 = vector.broadcast %418 : vector<1x256xf32> to vector<8x256xf32>
    %421 = arith.mulf %419, %420 : vector<8x256xf32>
    %422 = arith.addf %416, %421 : vector<8x256xf32>
    %423 = vector.extract_strided_slice %304 {offsets = [0, 7], sizes = [8, 1], strides = [1, 1]} : vector<8x16xf32> to vector<8x1xf32>
    %424 = vector.extract_strided_slice %404 {offsets = [3, 0], sizes = [1, 256], strides = [1, 1]} : vector<4x256xf32> to vector<1x256xf32>
    %425 = vector.broadcast %423 : vector<8x1xf32> to vector<8x256xf32>
    %426 = vector.broadcast %424 : vector<1x256xf32> to vector<8x256xf32>
    %427 = arith.mulf %425, %426 : vector<8x256xf32>
    %428 = arith.addf %422, %427 : vector<8x256xf32>
    %c2_i32_46 = arith.constant 2 : i32
    %429 = tpu.dynamic_rotate %404 by %c2_i32_46 dim 1 : vector<4x256xf32>, i32 -> vector<4x256xf32>
    %430 = vector.extract_strided_slice %2 {offsets = [0, 0], sizes = [1, 256], strides = [1, 1]} : vector<5x256xf32> to vector<1x256xf32>
    %cst_47 = arith.constant 5.000000e-01 : f32
    %431 = vector.broadcast %cst_47 : f32 to vector<1x256xf32>
    %432 = arith.cmpf ogt, %430, %431 : vector<1x256xf32>
    %cst_48 = arith.constant -3.40282347E+38 : f32
    %433 = vector.shape_cast %432 : vector<1x256xi1> to vector<1x256xi1>
    %434 = vector.broadcast %433 : vector<1x256xi1> to vector<4x256xi1>
    %435 = vector.broadcast %cst_48 : f32 to vector<4x256xf32>
    %436 = arith.select %434, %429, %435 : vector<4x256xi1>, vector<4x256xf32>
    %437 = arith.maximumf %404, %436 : vector<4x256xf32>
    %c1_i32_49 = arith.constant 1 : i32
    %438 = tpu.dynamic_rotate %404 by %c1_i32_49 dim 1 : vector<4x256xf32>, i32 -> vector<4x256xf32>
    %439 = vector.extract_strided_slice %2 {offsets = [1, 0], sizes = [1, 256], strides = [1, 1]} : vector<5x256xf32> to vector<1x256xf32>
    %cst_50 = arith.constant 5.000000e-01 : f32
    %440 = vector.broadcast %cst_50 : f32 to vector<1x256xf32>
    %441 = arith.cmpf ogt, %439, %440 : vector<1x256xf32>
    %cst_51 = arith.constant -3.40282347E+38 : f32
    %442 = vector.shape_cast %441 : vector<1x256xi1> to vector<1x256xi1>
    %443 = vector.broadcast %442 : vector<1x256xi1> to vector<4x256xi1>
    %444 = vector.broadcast %cst_51 : f32 to vector<4x256xf32>
    %445 = arith.select %443, %438, %444 : vector<4x256xi1>, vector<4x256xf32>
    %446 = arith.maximumf %437, %445 : vector<4x256xf32>
    %c255_i32_52 = arith.constant 255 : i32
    %447 = tpu.dynamic_rotate %404 by %c255_i32_52 dim 1 : vector<4x256xf32>, i32 -> vector<4x256xf32>
    %448 = vector.extract_strided_slice %2 {offsets = [3, 0], sizes = [1, 256], strides = [1, 1]} : vector<5x256xf32> to vector<1x256xf32>
    %cst_53 = arith.constant 5.000000e-01 : f32
    %449 = vector.broadcast %cst_53 : f32 to vector<1x256xf32>
    %450 = arith.cmpf ogt, %448, %449 : vector<1x256xf32>
    %cst_54 = arith.constant -3.40282347E+38 : f32
    %451 = vector.shape_cast %450 : vector<1x256xi1> to vector<1x256xi1>
    %452 = vector.broadcast %451 : vector<1x256xi1> to vector<4x256xi1>
    %453 = vector.broadcast %cst_54 : f32 to vector<4x256xf32>
    %454 = arith.select %452, %447, %453 : vector<4x256xi1>, vector<4x256xf32>
    %455 = arith.maximumf %446, %454 : vector<4x256xf32>
    %c254_i32_55 = arith.constant 254 : i32
    %456 = tpu.dynamic_rotate %404 by %c254_i32_55 dim 1 : vector<4x256xf32>, i32 -> vector<4x256xf32>
    %457 = vector.extract_strided_slice %2 {offsets = [4, 0], sizes = [1, 256], strides = [1, 1]} : vector<5x256xf32> to vector<1x256xf32>
    %cst_56 = arith.constant 5.000000e-01 : f32
    %458 = vector.broadcast %cst_56 : f32 to vector<1x256xf32>
    %459 = arith.cmpf ogt, %457, %458 : vector<1x256xf32>
    %cst_57 = arith.constant -3.40282347E+38 : f32
    %460 = vector.shape_cast %459 : vector<1x256xi1> to vector<1x256xi1>
    %461 = vector.broadcast %460 : vector<1x256xi1> to vector<4x256xi1>
    %462 = vector.broadcast %cst_57 : f32 to vector<4x256xf32>
    %463 = arith.select %461, %456, %462 : vector<4x256xi1>, vector<4x256xf32>
    %464 = arith.maximumf %455, %463 : vector<4x256xf32>
    %c32_i32_58 = arith.constant 32 : i32
    %465 = tpu.dynamic_rotate %464 by %c32_i32_58 dim 1 : vector<4x256xf32>, i32 -> vector<4x256xf32>
    %466 = vector.extract_strided_slice %3 {offsets = [0, 0], sizes = [1, 256], strides = [1, 1]} : vector<5x256xf32> to vector<1x256xf32>
    %cst_59 = arith.constant 5.000000e-01 : f32
    %467 = vector.broadcast %cst_59 : f32 to vector<1x256xf32>
    %468 = arith.cmpf ogt, %466, %467 : vector<1x256xf32>
    %cst_60 = arith.constant -3.40282347E+38 : f32
    %469 = vector.shape_cast %468 : vector<1x256xi1> to vector<1x256xi1>
    %470 = vector.broadcast %469 : vector<1x256xi1> to vector<4x256xi1>
    %471 = vector.broadcast %cst_60 : f32 to vector<4x256xf32>
    %472 = arith.select %470, %465, %471 : vector<4x256xi1>, vector<4x256xf32>
    %473 = arith.maximumf %464, %472 : vector<4x256xf32>
    %c16_i32_61 = arith.constant 16 : i32
    %474 = tpu.dynamic_rotate %464 by %c16_i32_61 dim 1 : vector<4x256xf32>, i32 -> vector<4x256xf32>
    %475 = vector.extract_strided_slice %3 {offsets = [1, 0], sizes = [1, 256], strides = [1, 1]} : vector<5x256xf32> to vector<1x256xf32>
    %cst_62 = arith.constant 5.000000e-01 : f32
    %476 = vector.broadcast %cst_62 : f32 to vector<1x256xf32>
    %477 = arith.cmpf ogt, %475, %476 : vector<1x256xf32>
    %cst_63 = arith.constant -3.40282347E+38 : f32
    %478 = vector.shape_cast %477 : vector<1x256xi1> to vector<1x256xi1>
    %479 = vector.broadcast %478 : vector<1x256xi1> to vector<4x256xi1>
    %480 = vector.broadcast %cst_63 : f32 to vector<4x256xf32>
    %481 = arith.select %479, %474, %480 : vector<4x256xi1>, vector<4x256xf32>
    %482 = arith.maximumf %473, %481 : vector<4x256xf32>
    %c240_i32_64 = arith.constant 240 : i32
    %483 = tpu.dynamic_rotate %464 by %c240_i32_64 dim 1 : vector<4x256xf32>, i32 -> vector<4x256xf32>
    %484 = vector.extract_strided_slice %3 {offsets = [3, 0], sizes = [1, 256], strides = [1, 1]} : vector<5x256xf32> to vector<1x256xf32>
    %cst_65 = arith.constant 5.000000e-01 : f32
    %485 = vector.broadcast %cst_65 : f32 to vector<1x256xf32>
    %486 = arith.cmpf ogt, %484, %485 : vector<1x256xf32>
    %cst_66 = arith.constant -3.40282347E+38 : f32
    %487 = vector.shape_cast %486 : vector<1x256xi1> to vector<1x256xi1>
    %488 = vector.broadcast %487 : vector<1x256xi1> to vector<4x256xi1>
    %489 = vector.broadcast %cst_66 : f32 to vector<4x256xf32>
    %490 = arith.select %488, %483, %489 : vector<4x256xi1>, vector<4x256xf32>
    %491 = arith.maximumf %482, %490 : vector<4x256xf32>
    %c224_i32_67 = arith.constant 224 : i32
    %492 = tpu.dynamic_rotate %464 by %c224_i32_67 dim 1 : vector<4x256xf32>, i32 -> vector<4x256xf32>
    %493 = vector.extract_strided_slice %3 {offsets = [4, 0], sizes = [1, 256], strides = [1, 1]} : vector<5x256xf32> to vector<1x256xf32>
    %cst_68 = arith.constant 5.000000e-01 : f32
    %494 = vector.broadcast %cst_68 : f32 to vector<1x256xf32>
    %495 = arith.cmpf ogt, %493, %494 : vector<1x256xf32>
    %cst_69 = arith.constant -3.40282347E+38 : f32
    %496 = vector.shape_cast %495 : vector<1x256xi1> to vector<1x256xi1>
    %497 = vector.broadcast %496 : vector<1x256xi1> to vector<4x256xi1>
    %498 = vector.broadcast %cst_69 : f32 to vector<4x256xf32>
    %499 = arith.select %497, %492, %498 : vector<4x256xi1>, vector<4x256xf32>
    %500 = arith.maximumf %491, %499 : vector<4x256xf32>
    %501 = vector.extract_strided_slice %304 {offsets = [0, 8], sizes = [8, 1], strides = [1, 1]} : vector<8x16xf32> to vector<8x1xf32>
    %502 = vector.extract_strided_slice %500 {offsets = [0, 0], sizes = [1, 256], strides = [1, 1]} : vector<4x256xf32> to vector<1x256xf32>
    %503 = vector.broadcast %501 : vector<8x1xf32> to vector<8x256xf32>
    %504 = vector.broadcast %502 : vector<1x256xf32> to vector<8x256xf32>
    %505 = arith.mulf %503, %504 : vector<8x256xf32>
    %506 = arith.addf %428, %505 : vector<8x256xf32>
    %507 = vector.extract_strided_slice %304 {offsets = [0, 9], sizes = [8, 1], strides = [1, 1]} : vector<8x16xf32> to vector<8x1xf32>
    %508 = vector.extract_strided_slice %500 {offsets = [1, 0], sizes = [1, 256], strides = [1, 1]} : vector<4x256xf32> to vector<1x256xf32>
    %509 = vector.broadcast %507 : vector<8x1xf32> to vector<8x256xf32>
    %510 = vector.broadcast %508 : vector<1x256xf32> to vector<8x256xf32>
    %511 = arith.mulf %509, %510 : vector<8x256xf32>
    %512 = arith.addf %506, %511 : vector<8x256xf32>
    %513 = vector.extract_strided_slice %304 {offsets = [0, 10], sizes = [8, 1], strides = [1, 1]} : vector<8x16xf32> to vector<8x1xf32>
    %514 = vector.extract_strided_slice %500 {offsets = [2, 0], sizes = [1, 256], strides = [1, 1]} : vector<4x256xf32> to vector<1x256xf32>
    %515 = vector.broadcast %513 : vector<8x1xf32> to vector<8x256xf32>
    %516 = vector.broadcast %514 : vector<1x256xf32> to vector<8x256xf32>
    %517 = arith.mulf %515, %516 : vector<8x256xf32>
    %518 = arith.addf %512, %517 : vector<8x256xf32>
    %519 = vector.extract_strided_slice %304 {offsets = [0, 11], sizes = [8, 1], strides = [1, 1]} : vector<8x16xf32> to vector<8x1xf32>
    %520 = vector.extract_strided_slice %500 {offsets = [3, 0], sizes = [1, 256], strides = [1, 1]} : vector<4x256xf32> to vector<1x256xf32>
    %521 = vector.broadcast %519 : vector<8x1xf32> to vector<8x256xf32>
    %522 = vector.broadcast %520 : vector<1x256xf32> to vector<8x256xf32>
    %523 = arith.mulf %521, %522 : vector<8x256xf32>
    %524 = arith.addf %518, %523 : vector<8x256xf32>
    %c2_i32_70 = arith.constant 2 : i32
    %525 = tpu.dynamic_rotate %500 by %c2_i32_70 dim 1 : vector<4x256xf32>, i32 -> vector<4x256xf32>
    %526 = vector.extract_strided_slice %2 {offsets = [0, 0], sizes = [1, 256], strides = [1, 1]} : vector<5x256xf32> to vector<1x256xf32>
    %cst_71 = arith.constant 5.000000e-01 : f32
    %527 = vector.broadcast %cst_71 : f32 to vector<1x256xf32>
    %528 = arith.cmpf ogt, %526, %527 : vector<1x256xf32>
    %cst_72 = arith.constant -3.40282347E+38 : f32
    %529 = vector.shape_cast %528 : vector<1x256xi1> to vector<1x256xi1>
    %530 = vector.broadcast %529 : vector<1x256xi1> to vector<4x256xi1>
    %531 = vector.broadcast %cst_72 : f32 to vector<4x256xf32>
    %532 = arith.select %530, %525, %531 : vector<4x256xi1>, vector<4x256xf32>
    %533 = arith.maximumf %500, %532 : vector<4x256xf32>
    %c1_i32_73 = arith.constant 1 : i32
    %534 = tpu.dynamic_rotate %500 by %c1_i32_73 dim 1 : vector<4x256xf32>, i32 -> vector<4x256xf32>
    %535 = vector.extract_strided_slice %2 {offsets = [1, 0], sizes = [1, 256], strides = [1, 1]} : vector<5x256xf32> to vector<1x256xf32>
    %cst_74 = arith.constant 5.000000e-01 : f32
    %536 = vector.broadcast %cst_74 : f32 to vector<1x256xf32>
    %537 = arith.cmpf ogt, %535, %536 : vector<1x256xf32>
    %cst_75 = arith.constant -3.40282347E+38 : f32
    %538 = vector.shape_cast %537 : vector<1x256xi1> to vector<1x256xi1>
    %539 = vector.broadcast %538 : vector<1x256xi1> to vector<4x256xi1>
    %540 = vector.broadcast %cst_75 : f32 to vector<4x256xf32>
    %541 = arith.select %539, %534, %540 : vector<4x256xi1>, vector<4x256xf32>
    %542 = arith.maximumf %533, %541 : vector<4x256xf32>
    %c255_i32_76 = arith.constant 255 : i32
    %543 = tpu.dynamic_rotate %500 by %c255_i32_76 dim 1 : vector<4x256xf32>, i32 -> vector<4x256xf32>
    %544 = vector.extract_strided_slice %2 {offsets = [3, 0], sizes = [1, 256], strides = [1, 1]} : vector<5x256xf32> to vector<1x256xf32>
    %cst_77 = arith.constant 5.000000e-01 : f32
    %545 = vector.broadcast %cst_77 : f32 to vector<1x256xf32>
    %546 = arith.cmpf ogt, %544, %545 : vector<1x256xf32>
    %cst_78 = arith.constant -3.40282347E+38 : f32
    %547 = vector.shape_cast %546 : vector<1x256xi1> to vector<1x256xi1>
    %548 = vector.broadcast %547 : vector<1x256xi1> to vector<4x256xi1>
    %549 = vector.broadcast %cst_78 : f32 to vector<4x256xf32>
    %550 = arith.select %548, %543, %549 : vector<4x256xi1>, vector<4x256xf32>
    %551 = arith.maximumf %542, %550 : vector<4x256xf32>
    %c254_i32_79 = arith.constant 254 : i32
    %552 = tpu.dynamic_rotate %500 by %c254_i32_79 dim 1 : vector<4x256xf32>, i32 -> vector<4x256xf32>
    %553 = vector.extract_strided_slice %2 {offsets = [4, 0], sizes = [1, 256], strides = [1, 1]} : vector<5x256xf32> to vector<1x256xf32>
    %cst_80 = arith.constant 5.000000e-01 : f32
    %554 = vector.broadcast %cst_80 : f32 to vector<1x256xf32>
    %555 = arith.cmpf ogt, %553, %554 : vector<1x256xf32>
    %cst_81 = arith.constant -3.40282347E+38 : f32
    %556 = vector.shape_cast %555 : vector<1x256xi1> to vector<1x256xi1>
    %557 = vector.broadcast %556 : vector<1x256xi1> to vector<4x256xi1>
    %558 = vector.broadcast %cst_81 : f32 to vector<4x256xf32>
    %559 = arith.select %557, %552, %558 : vector<4x256xi1>, vector<4x256xf32>
    %560 = arith.maximumf %551, %559 : vector<4x256xf32>
    %c32_i32_82 = arith.constant 32 : i32
    %561 = tpu.dynamic_rotate %560 by %c32_i32_82 dim 1 : vector<4x256xf32>, i32 -> vector<4x256xf32>
    %562 = vector.extract_strided_slice %3 {offsets = [0, 0], sizes = [1, 256], strides = [1, 1]} : vector<5x256xf32> to vector<1x256xf32>
    %cst_83 = arith.constant 5.000000e-01 : f32
    %563 = vector.broadcast %cst_83 : f32 to vector<1x256xf32>
    %564 = arith.cmpf ogt, %562, %563 : vector<1x256xf32>
    %cst_84 = arith.constant -3.40282347E+38 : f32
    %565 = vector.shape_cast %564 : vector<1x256xi1> to vector<1x256xi1>
    %566 = vector.broadcast %565 : vector<1x256xi1> to vector<4x256xi1>
    %567 = vector.broadcast %cst_84 : f32 to vector<4x256xf32>
    %568 = arith.select %566, %561, %567 : vector<4x256xi1>, vector<4x256xf32>
    %569 = arith.maximumf %560, %568 : vector<4x256xf32>
    %c16_i32_85 = arith.constant 16 : i32
    %570 = tpu.dynamic_rotate %560 by %c16_i32_85 dim 1 : vector<4x256xf32>, i32 -> vector<4x256xf32>
    %571 = vector.extract_strided_slice %3 {offsets = [1, 0], sizes = [1, 256], strides = [1, 1]} : vector<5x256xf32> to vector<1x256xf32>
    %cst_86 = arith.constant 5.000000e-01 : f32
    %572 = vector.broadcast %cst_86 : f32 to vector<1x256xf32>
    %573 = arith.cmpf ogt, %571, %572 : vector<1x256xf32>
    %cst_87 = arith.constant -3.40282347E+38 : f32
    %574 = vector.shape_cast %573 : vector<1x256xi1> to vector<1x256xi1>
    %575 = vector.broadcast %574 : vector<1x256xi1> to vector<4x256xi1>
    %576 = vector.broadcast %cst_87 : f32 to vector<4x256xf32>
    %577 = arith.select %575, %570, %576 : vector<4x256xi1>, vector<4x256xf32>
    %578 = arith.maximumf %569, %577 : vector<4x256xf32>
    %c240_i32_88 = arith.constant 240 : i32
    %579 = tpu.dynamic_rotate %560 by %c240_i32_88 dim 1 : vector<4x256xf32>, i32 -> vector<4x256xf32>
    %580 = vector.extract_strided_slice %3 {offsets = [3, 0], sizes = [1, 256], strides = [1, 1]} : vector<5x256xf32> to vector<1x256xf32>
    %cst_89 = arith.constant 5.000000e-01 : f32
    %581 = vector.broadcast %cst_89 : f32 to vector<1x256xf32>
    %582 = arith.cmpf ogt, %580, %581 : vector<1x256xf32>
    %cst_90 = arith.constant -3.40282347E+38 : f32
    %583 = vector.shape_cast %582 : vector<1x256xi1> to vector<1x256xi1>
    %584 = vector.broadcast %583 : vector<1x256xi1> to vector<4x256xi1>
    %585 = vector.broadcast %cst_90 : f32 to vector<4x256xf32>
    %586 = arith.select %584, %579, %585 : vector<4x256xi1>, vector<4x256xf32>
    %587 = arith.maximumf %578, %586 : vector<4x256xf32>
    %c224_i32_91 = arith.constant 224 : i32
    %588 = tpu.dynamic_rotate %560 by %c224_i32_91 dim 1 : vector<4x256xf32>, i32 -> vector<4x256xf32>
    %589 = vector.extract_strided_slice %3 {offsets = [4, 0], sizes = [1, 256], strides = [1, 1]} : vector<5x256xf32> to vector<1x256xf32>
    %cst_92 = arith.constant 5.000000e-01 : f32
    %590 = vector.broadcast %cst_92 : f32 to vector<1x256xf32>
    %591 = arith.cmpf ogt, %589, %590 : vector<1x256xf32>
    %cst_93 = arith.constant -3.40282347E+38 : f32
    %592 = vector.shape_cast %591 : vector<1x256xi1> to vector<1x256xi1>
    %593 = vector.broadcast %592 : vector<1x256xi1> to vector<4x256xi1>
    %594 = vector.broadcast %cst_93 : f32 to vector<4x256xf32>
    %595 = arith.select %593, %588, %594 : vector<4x256xi1>, vector<4x256xf32>
    %596 = arith.maximumf %587, %595 : vector<4x256xf32>
    %597 = vector.extract_strided_slice %304 {offsets = [0, 12], sizes = [8, 1], strides = [1, 1]} : vector<8x16xf32> to vector<8x1xf32>
    %598 = vector.extract_strided_slice %596 {offsets = [0, 0], sizes = [1, 256], strides = [1, 1]} : vector<4x256xf32> to vector<1x256xf32>
    %599 = vector.broadcast %597 : vector<8x1xf32> to vector<8x256xf32>
    %600 = vector.broadcast %598 : vector<1x256xf32> to vector<8x256xf32>
    %601 = arith.mulf %599, %600 : vector<8x256xf32>
    %602 = arith.addf %524, %601 : vector<8x256xf32>
    %603 = vector.extract_strided_slice %304 {offsets = [0, 13], sizes = [8, 1], strides = [1, 1]} : vector<8x16xf32> to vector<8x1xf32>
    %604 = vector.extract_strided_slice %596 {offsets = [1, 0], sizes = [1, 256], strides = [1, 1]} : vector<4x256xf32> to vector<1x256xf32>
    %605 = vector.broadcast %603 : vector<8x1xf32> to vector<8x256xf32>
    %606 = vector.broadcast %604 : vector<1x256xf32> to vector<8x256xf32>
    %607 = arith.mulf %605, %606 : vector<8x256xf32>
    %608 = arith.addf %602, %607 : vector<8x256xf32>
    %609 = vector.extract_strided_slice %304 {offsets = [0, 14], sizes = [8, 1], strides = [1, 1]} : vector<8x16xf32> to vector<8x1xf32>
    %610 = vector.extract_strided_slice %596 {offsets = [2, 0], sizes = [1, 256], strides = [1, 1]} : vector<4x256xf32> to vector<1x256xf32>
    %611 = vector.broadcast %609 : vector<8x1xf32> to vector<8x256xf32>
    %612 = vector.broadcast %610 : vector<1x256xf32> to vector<8x256xf32>
    %613 = arith.mulf %611, %612 : vector<8x256xf32>
    %614 = arith.addf %608, %613 : vector<8x256xf32>
    %615 = vector.extract_strided_slice %304 {offsets = [0, 15], sizes = [8, 1], strides = [1, 1]} : vector<8x16xf32> to vector<8x1xf32>
    %616 = vector.extract_strided_slice %596 {offsets = [3, 0], sizes = [1, 256], strides = [1, 1]} : vector<4x256xf32> to vector<1x256xf32>
    %617 = vector.broadcast %615 : vector<8x1xf32> to vector<8x256xf32>
    %618 = vector.broadcast %616 : vector<1x256xf32> to vector<8x256xf32>
    %619 = arith.mulf %617, %618 : vector<8x256xf32>
    %620 = arith.addf %614, %619 : vector<8x256xf32>
    %c0_94 = arith.constant 0 : index
    %c0_95 = arith.constant 0 : index
    %621 = vector.load %arg10[%c0_94, %c0_95] : memref<8x25xf32, #tpu.memory_space<vmem>>, vector<8x25xf32>
    %c0_96 = arith.constant 0 : index
    %c0_97 = arith.constant 0 : index
    %622 = vector.load %arg11[%c0_96, %c0_97] : memref<8x1xf32, #tpu.memory_space<vmem>>, vector<8x1xf32>
    %cst_98 = arith.constant 0.000000e+00 : f32
    %623 = vector.broadcast %cst_98 : f32 to vector<8x256xf32>
    %624 = vector.broadcast %622 : vector<8x1xf32> to vector<8x256xf32>
    %625 = arith.addf %624, %623 : vector<8x256xf32>
    %626 = vector.extract_strided_slice %3 {offsets = [0, 0], sizes = [1, 256], strides = [1, 1]} : vector<5x256xf32> to vector<1x256xf32>
    %c34_i32_99 = arith.constant 34 : i32
    %627 = tpu.dynamic_rotate %620 by %c34_i32_99 dim 1 : vector<8x256xf32>, i32 -> vector<8x256xf32>
    %628 = vector.extract_strided_slice %2 {offsets = [0, 0], sizes = [1, 256], strides = [1, 1]} : vector<5x256xf32> to vector<1x256xf32>
    %629 = arith.mulf %626, %628 : vector<1x256xf32>
    %630 = vector.broadcast %629 : vector<1x256xf32> to vector<8x256xf32>
    %631 = arith.mulf %627, %630 : vector<8x256xf32>
    %632 = vector.extract_strided_slice %621 {offsets = [0, 0], sizes = [8, 1], strides = [1, 1]} : vector<8x25xf32> to vector<8x1xf32>
    %633 = vector.broadcast %632 : vector<8x1xf32> to vector<8x256xf32>
    %634 = arith.mulf %631, %633 : vector<8x256xf32>
    %635 = arith.addf %625, %634 : vector<8x256xf32>
    %c33_i32_100 = arith.constant 33 : i32
    %636 = tpu.dynamic_rotate %620 by %c33_i32_100 dim 1 : vector<8x256xf32>, i32 -> vector<8x256xf32>
    %637 = vector.extract_strided_slice %2 {offsets = [1, 0], sizes = [1, 256], strides = [1, 1]} : vector<5x256xf32> to vector<1x256xf32>
    %638 = arith.mulf %626, %637 : vector<1x256xf32>
    %639 = vector.broadcast %638 : vector<1x256xf32> to vector<8x256xf32>
    %640 = arith.mulf %636, %639 : vector<8x256xf32>
    %641 = vector.extract_strided_slice %621 {offsets = [0, 1], sizes = [8, 1], strides = [1, 1]} : vector<8x25xf32> to vector<8x1xf32>
    %642 = vector.broadcast %641 : vector<8x1xf32> to vector<8x256xf32>
    %643 = arith.mulf %640, %642 : vector<8x256xf32>
    %644 = arith.addf %635, %643 : vector<8x256xf32>
    %c32_i32_101 = arith.constant 32 : i32
    %645 = tpu.dynamic_rotate %620 by %c32_i32_101 dim 1 : vector<8x256xf32>, i32 -> vector<8x256xf32>
    %646 = vector.extract_strided_slice %2 {offsets = [2, 0], sizes = [1, 256], strides = [1, 1]} : vector<5x256xf32> to vector<1x256xf32>
    %647 = arith.mulf %626, %646 : vector<1x256xf32>
    %648 = vector.broadcast %647 : vector<1x256xf32> to vector<8x256xf32>
    %649 = arith.mulf %645, %648 : vector<8x256xf32>
    %650 = vector.extract_strided_slice %621 {offsets = [0, 2], sizes = [8, 1], strides = [1, 1]} : vector<8x25xf32> to vector<8x1xf32>
    %651 = vector.broadcast %650 : vector<8x1xf32> to vector<8x256xf32>
    %652 = arith.mulf %649, %651 : vector<8x256xf32>
    %653 = arith.addf %644, %652 : vector<8x256xf32>
    %c31_i32_102 = arith.constant 31 : i32
    %654 = tpu.dynamic_rotate %620 by %c31_i32_102 dim 1 : vector<8x256xf32>, i32 -> vector<8x256xf32>
    %655 = vector.extract_strided_slice %2 {offsets = [3, 0], sizes = [1, 256], strides = [1, 1]} : vector<5x256xf32> to vector<1x256xf32>
    %656 = arith.mulf %626, %655 : vector<1x256xf32>
    %657 = vector.broadcast %656 : vector<1x256xf32> to vector<8x256xf32>
    %658 = arith.mulf %654, %657 : vector<8x256xf32>
    %659 = vector.extract_strided_slice %621 {offsets = [0, 3], sizes = [8, 1], strides = [1, 1]} : vector<8x25xf32> to vector<8x1xf32>
    %660 = vector.broadcast %659 : vector<8x1xf32> to vector<8x256xf32>
    %661 = arith.mulf %658, %660 : vector<8x256xf32>
    %662 = arith.addf %653, %661 : vector<8x256xf32>
    %c30_i32_103 = arith.constant 30 : i32
    %663 = tpu.dynamic_rotate %620 by %c30_i32_103 dim 1 : vector<8x256xf32>, i32 -> vector<8x256xf32>
    %664 = vector.extract_strided_slice %2 {offsets = [4, 0], sizes = [1, 256], strides = [1, 1]} : vector<5x256xf32> to vector<1x256xf32>
    %665 = arith.mulf %626, %664 : vector<1x256xf32>
    %666 = vector.broadcast %665 : vector<1x256xf32> to vector<8x256xf32>
    %667 = arith.mulf %663, %666 : vector<8x256xf32>
    %668 = vector.extract_strided_slice %621 {offsets = [0, 4], sizes = [8, 1], strides = [1, 1]} : vector<8x25xf32> to vector<8x1xf32>
    %669 = vector.broadcast %668 : vector<8x1xf32> to vector<8x256xf32>
    %670 = arith.mulf %667, %669 : vector<8x256xf32>
    %671 = arith.addf %662, %670 : vector<8x256xf32>
    %672 = vector.extract_strided_slice %3 {offsets = [1, 0], sizes = [1, 256], strides = [1, 1]} : vector<5x256xf32> to vector<1x256xf32>
    %c18_i32_104 = arith.constant 18 : i32
    %673 = tpu.dynamic_rotate %620 by %c18_i32_104 dim 1 : vector<8x256xf32>, i32 -> vector<8x256xf32>
    %674 = vector.extract_strided_slice %2 {offsets = [0, 0], sizes = [1, 256], strides = [1, 1]} : vector<5x256xf32> to vector<1x256xf32>
    %675 = arith.mulf %672, %674 : vector<1x256xf32>
    %676 = vector.broadcast %675 : vector<1x256xf32> to vector<8x256xf32>
    %677 = arith.mulf %673, %676 : vector<8x256xf32>
    %678 = vector.extract_strided_slice %621 {offsets = [0, 5], sizes = [8, 1], strides = [1, 1]} : vector<8x25xf32> to vector<8x1xf32>
    %679 = vector.broadcast %678 : vector<8x1xf32> to vector<8x256xf32>
    %680 = arith.mulf %677, %679 : vector<8x256xf32>
    %681 = arith.addf %671, %680 : vector<8x256xf32>
    %c17_i32_105 = arith.constant 17 : i32
    %682 = tpu.dynamic_rotate %620 by %c17_i32_105 dim 1 : vector<8x256xf32>, i32 -> vector<8x256xf32>
    %683 = vector.extract_strided_slice %2 {offsets = [1, 0], sizes = [1, 256], strides = [1, 1]} : vector<5x256xf32> to vector<1x256xf32>
    %684 = arith.mulf %672, %683 : vector<1x256xf32>
    %685 = vector.broadcast %684 : vector<1x256xf32> to vector<8x256xf32>
    %686 = arith.mulf %682, %685 : vector<8x256xf32>
    %687 = vector.extract_strided_slice %621 {offsets = [0, 6], sizes = [8, 1], strides = [1, 1]} : vector<8x25xf32> to vector<8x1xf32>
    %688 = vector.broadcast %687 : vector<8x1xf32> to vector<8x256xf32>
    %689 = arith.mulf %686, %688 : vector<8x256xf32>
    %690 = arith.addf %681, %689 : vector<8x256xf32>
    %c16_i32_106 = arith.constant 16 : i32
    %691 = tpu.dynamic_rotate %620 by %c16_i32_106 dim 1 : vector<8x256xf32>, i32 -> vector<8x256xf32>
    %692 = vector.extract_strided_slice %2 {offsets = [2, 0], sizes = [1, 256], strides = [1, 1]} : vector<5x256xf32> to vector<1x256xf32>
    %693 = arith.mulf %672, %692 : vector<1x256xf32>
    %694 = vector.broadcast %693 : vector<1x256xf32> to vector<8x256xf32>
    %695 = arith.mulf %691, %694 : vector<8x256xf32>
    %696 = vector.extract_strided_slice %621 {offsets = [0, 7], sizes = [8, 1], strides = [1, 1]} : vector<8x25xf32> to vector<8x1xf32>
    %697 = vector.broadcast %696 : vector<8x1xf32> to vector<8x256xf32>
    %698 = arith.mulf %695, %697 : vector<8x256xf32>
    %699 = arith.addf %690, %698 : vector<8x256xf32>
    %c15_i32_107 = arith.constant 15 : i32
    %700 = tpu.dynamic_rotate %620 by %c15_i32_107 dim 1 : vector<8x256xf32>, i32 -> vector<8x256xf32>
    %701 = vector.extract_strided_slice %2 {offsets = [3, 0], sizes = [1, 256], strides = [1, 1]} : vector<5x256xf32> to vector<1x256xf32>
    %702 = arith.mulf %672, %701 : vector<1x256xf32>
    %703 = vector.broadcast %702 : vector<1x256xf32> to vector<8x256xf32>
    %704 = arith.mulf %700, %703 : vector<8x256xf32>
    %705 = vector.extract_strided_slice %621 {offsets = [0, 8], sizes = [8, 1], strides = [1, 1]} : vector<8x25xf32> to vector<8x1xf32>
    %706 = vector.broadcast %705 : vector<8x1xf32> to vector<8x256xf32>
    %707 = arith.mulf %704, %706 : vector<8x256xf32>
    %708 = arith.addf %699, %707 : vector<8x256xf32>
    %c14_i32_108 = arith.constant 14 : i32
    %709 = tpu.dynamic_rotate %620 by %c14_i32_108 dim 1 : vector<8x256xf32>, i32 -> vector<8x256xf32>
    %710 = vector.extract_strided_slice %2 {offsets = [4, 0], sizes = [1, 256], strides = [1, 1]} : vector<5x256xf32> to vector<1x256xf32>
    %711 = arith.mulf %672, %710 : vector<1x256xf32>
    %712 = vector.broadcast %711 : vector<1x256xf32> to vector<8x256xf32>
    %713 = arith.mulf %709, %712 : vector<8x256xf32>
    %714 = vector.extract_strided_slice %621 {offsets = [0, 9], sizes = [8, 1], strides = [1, 1]} : vector<8x25xf32> to vector<8x1xf32>
    %715 = vector.broadcast %714 : vector<8x1xf32> to vector<8x256xf32>
    %716 = arith.mulf %713, %715 : vector<8x256xf32>
    %717 = arith.addf %708, %716 : vector<8x256xf32>
    %718 = vector.extract_strided_slice %3 {offsets = [2, 0], sizes = [1, 256], strides = [1, 1]} : vector<5x256xf32> to vector<1x256xf32>
    %c2_i32_109 = arith.constant 2 : i32
    %719 = tpu.dynamic_rotate %620 by %c2_i32_109 dim 1 : vector<8x256xf32>, i32 -> vector<8x256xf32>
    %720 = vector.extract_strided_slice %2 {offsets = [0, 0], sizes = [1, 256], strides = [1, 1]} : vector<5x256xf32> to vector<1x256xf32>
    %721 = arith.mulf %718, %720 : vector<1x256xf32>
    %722 = vector.broadcast %721 : vector<1x256xf32> to vector<8x256xf32>
    %723 = arith.mulf %719, %722 : vector<8x256xf32>
    %724 = vector.extract_strided_slice %621 {offsets = [0, 10], sizes = [8, 1], strides = [1, 1]} : vector<8x25xf32> to vector<8x1xf32>
    %725 = vector.broadcast %724 : vector<8x1xf32> to vector<8x256xf32>
    %726 = arith.mulf %723, %725 : vector<8x256xf32>
    %727 = arith.addf %717, %726 : vector<8x256xf32>
    %c1_i32_110 = arith.constant 1 : i32
    %728 = tpu.dynamic_rotate %620 by %c1_i32_110 dim 1 : vector<8x256xf32>, i32 -> vector<8x256xf32>
    %729 = vector.extract_strided_slice %2 {offsets = [1, 0], sizes = [1, 256], strides = [1, 1]} : vector<5x256xf32> to vector<1x256xf32>
    %730 = arith.mulf %718, %729 : vector<1x256xf32>
    %731 = vector.broadcast %730 : vector<1x256xf32> to vector<8x256xf32>
    %732 = arith.mulf %728, %731 : vector<8x256xf32>
    %733 = vector.extract_strided_slice %621 {offsets = [0, 11], sizes = [8, 1], strides = [1, 1]} : vector<8x25xf32> to vector<8x1xf32>
    %734 = vector.broadcast %733 : vector<8x1xf32> to vector<8x256xf32>
    %735 = arith.mulf %732, %734 : vector<8x256xf32>
    %736 = arith.addf %727, %735 : vector<8x256xf32>
    %737 = vector.extract_strided_slice %2 {offsets = [2, 0], sizes = [1, 256], strides = [1, 1]} : vector<5x256xf32> to vector<1x256xf32>
    %738 = arith.mulf %718, %737 : vector<1x256xf32>
    %739 = vector.broadcast %738 : vector<1x256xf32> to vector<8x256xf32>
    %740 = arith.mulf %620, %739 : vector<8x256xf32>
    %741 = vector.extract_strided_slice %621 {offsets = [0, 12], sizes = [8, 1], strides = [1, 1]} : vector<8x25xf32> to vector<8x1xf32>
    %742 = vector.broadcast %741 : vector<8x1xf32> to vector<8x256xf32>
    %743 = arith.mulf %740, %742 : vector<8x256xf32>
    %744 = arith.addf %736, %743 : vector<8x256xf32>
    %c255_i32_111 = arith.constant 255 : i32
    %745 = tpu.dynamic_rotate %620 by %c255_i32_111 dim 1 : vector<8x256xf32>, i32 -> vector<8x256xf32>
    %746 = vector.extract_strided_slice %2 {offsets = [3, 0], sizes = [1, 256], strides = [1, 1]} : vector<5x256xf32> to vector<1x256xf32>
    %747 = arith.mulf %718, %746 : vector<1x256xf32>
    %748 = vector.broadcast %747 : vector<1x256xf32> to vector<8x256xf32>
    %749 = arith.mulf %745, %748 : vector<8x256xf32>
    %750 = vector.extract_strided_slice %621 {offsets = [0, 13], sizes = [8, 1], strides = [1, 1]} : vector<8x25xf32> to vector<8x1xf32>
    %751 = vector.broadcast %750 : vector<8x1xf32> to vector<8x256xf32>
    %752 = arith.mulf %749, %751 : vector<8x256xf32>
    %753 = arith.addf %744, %752 : vector<8x256xf32>
    %c254_i32_112 = arith.constant 254 : i32
    %754 = tpu.dynamic_rotate %620 by %c254_i32_112 dim 1 : vector<8x256xf32>, i32 -> vector<8x256xf32>
    %755 = vector.extract_strided_slice %2 {offsets = [4, 0], sizes = [1, 256], strides = [1, 1]} : vector<5x256xf32> to vector<1x256xf32>
    %756 = arith.mulf %718, %755 : vector<1x256xf32>
    %757 = vector.broadcast %756 : vector<1x256xf32> to vector<8x256xf32>
    %758 = arith.mulf %754, %757 : vector<8x256xf32>
    %759 = vector.extract_strided_slice %621 {offsets = [0, 14], sizes = [8, 1], strides = [1, 1]} : vector<8x25xf32> to vector<8x1xf32>
    %760 = vector.broadcast %759 : vector<8x1xf32> to vector<8x256xf32>
    %761 = arith.mulf %758, %760 : vector<8x256xf32>
    %762 = arith.addf %753, %761 : vector<8x256xf32>
    %763 = vector.extract_strided_slice %3 {offsets = [3, 0], sizes = [1, 256], strides = [1, 1]} : vector<5x256xf32> to vector<1x256xf32>
    %c242_i32_113 = arith.constant 242 : i32
    %764 = tpu.dynamic_rotate %620 by %c242_i32_113 dim 1 : vector<8x256xf32>, i32 -> vector<8x256xf32>
    %765 = vector.extract_strided_slice %2 {offsets = [0, 0], sizes = [1, 256], strides = [1, 1]} : vector<5x256xf32> to vector<1x256xf32>
    %766 = arith.mulf %763, %765 : vector<1x256xf32>
    %767 = vector.broadcast %766 : vector<1x256xf32> to vector<8x256xf32>
    %768 = arith.mulf %764, %767 : vector<8x256xf32>
    %769 = vector.extract_strided_slice %621 {offsets = [0, 15], sizes = [8, 1], strides = [1, 1]} : vector<8x25xf32> to vector<8x1xf32>
    %770 = vector.broadcast %769 : vector<8x1xf32> to vector<8x256xf32>
    %771 = arith.mulf %768, %770 : vector<8x256xf32>
    %772 = arith.addf %762, %771 : vector<8x256xf32>
    %c241_i32_114 = arith.constant 241 : i32
    %773 = tpu.dynamic_rotate %620 by %c241_i32_114 dim 1 : vector<8x256xf32>, i32 -> vector<8x256xf32>
    %774 = vector.extract_strided_slice %2 {offsets = [1, 0], sizes = [1, 256], strides = [1, 1]} : vector<5x256xf32> to vector<1x256xf32>
    %775 = arith.mulf %763, %774 : vector<1x256xf32>
    %776 = vector.broadcast %775 : vector<1x256xf32> to vector<8x256xf32>
    %777 = arith.mulf %773, %776 : vector<8x256xf32>
    %778 = vector.extract_strided_slice %621 {offsets = [0, 16], sizes = [8, 1], strides = [1, 1]} : vector<8x25xf32> to vector<8x1xf32>
    %779 = vector.broadcast %778 : vector<8x1xf32> to vector<8x256xf32>
    %780 = arith.mulf %777, %779 : vector<8x256xf32>
    %781 = arith.addf %772, %780 : vector<8x256xf32>
    %c240_i32_115 = arith.constant 240 : i32
    %782 = tpu.dynamic_rotate %620 by %c240_i32_115 dim 1 : vector<8x256xf32>, i32 -> vector<8x256xf32>
    %783 = vector.extract_strided_slice %2 {offsets = [2, 0], sizes = [1, 256], strides = [1, 1]} : vector<5x256xf32> to vector<1x256xf32>
    %784 = arith.mulf %763, %783 : vector<1x256xf32>
    %785 = vector.broadcast %784 : vector<1x256xf32> to vector<8x256xf32>
    %786 = arith.mulf %782, %785 : vector<8x256xf32>
    %787 = vector.extract_strided_slice %621 {offsets = [0, 17], sizes = [8, 1], strides = [1, 1]} : vector<8x25xf32> to vector<8x1xf32>
    %788 = vector.broadcast %787 : vector<8x1xf32> to vector<8x256xf32>
    %789 = arith.mulf %786, %788 : vector<8x256xf32>
    %790 = arith.addf %781, %789 : vector<8x256xf32>
    %c239_i32_116 = arith.constant 239 : i32
    %791 = tpu.dynamic_rotate %620 by %c239_i32_116 dim 1 : vector<8x256xf32>, i32 -> vector<8x256xf32>
    %792 = vector.extract_strided_slice %2 {offsets = [3, 0], sizes = [1, 256], strides = [1, 1]} : vector<5x256xf32> to vector<1x256xf32>
    %793 = arith.mulf %763, %792 : vector<1x256xf32>
    %794 = vector.broadcast %793 : vector<1x256xf32> to vector<8x256xf32>
    %795 = arith.mulf %791, %794 : vector<8x256xf32>
    %796 = vector.extract_strided_slice %621 {offsets = [0, 18], sizes = [8, 1], strides = [1, 1]} : vector<8x25xf32> to vector<8x1xf32>
    %797 = vector.broadcast %796 : vector<8x1xf32> to vector<8x256xf32>
    %798 = arith.mulf %795, %797 : vector<8x256xf32>
    %799 = arith.addf %790, %798 : vector<8x256xf32>
    %c238_i32_117 = arith.constant 238 : i32
    %800 = tpu.dynamic_rotate %620 by %c238_i32_117 dim 1 : vector<8x256xf32>, i32 -> vector<8x256xf32>
    %801 = vector.extract_strided_slice %2 {offsets = [4, 0], sizes = [1, 256], strides = [1, 1]} : vector<5x256xf32> to vector<1x256xf32>
    %802 = arith.mulf %763, %801 : vector<1x256xf32>
    %803 = vector.broadcast %802 : vector<1x256xf32> to vector<8x256xf32>
    %804 = arith.mulf %800, %803 : vector<8x256xf32>
    %805 = vector.extract_strided_slice %621 {offsets = [0, 19], sizes = [8, 1], strides = [1, 1]} : vector<8x25xf32> to vector<8x1xf32>
    %806 = vector.broadcast %805 : vector<8x1xf32> to vector<8x256xf32>
    %807 = arith.mulf %804, %806 : vector<8x256xf32>
    %808 = arith.addf %799, %807 : vector<8x256xf32>
    %809 = vector.extract_strided_slice %3 {offsets = [4, 0], sizes = [1, 256], strides = [1, 1]} : vector<5x256xf32> to vector<1x256xf32>
    %c226_i32_118 = arith.constant 226 : i32
    %810 = tpu.dynamic_rotate %620 by %c226_i32_118 dim 1 : vector<8x256xf32>, i32 -> vector<8x256xf32>
    %811 = vector.extract_strided_slice %2 {offsets = [0, 0], sizes = [1, 256], strides = [1, 1]} : vector<5x256xf32> to vector<1x256xf32>
    %812 = arith.mulf %809, %811 : vector<1x256xf32>
    %813 = vector.broadcast %812 : vector<1x256xf32> to vector<8x256xf32>
    %814 = arith.mulf %810, %813 : vector<8x256xf32>
    %815 = vector.extract_strided_slice %621 {offsets = [0, 20], sizes = [8, 1], strides = [1, 1]} : vector<8x25xf32> to vector<8x1xf32>
    %816 = vector.broadcast %815 : vector<8x1xf32> to vector<8x256xf32>
    %817 = arith.mulf %814, %816 : vector<8x256xf32>
    %818 = arith.addf %808, %817 : vector<8x256xf32>
    %c225_i32_119 = arith.constant 225 : i32
    %819 = tpu.dynamic_rotate %620 by %c225_i32_119 dim 1 : vector<8x256xf32>, i32 -> vector<8x256xf32>
    %820 = vector.extract_strided_slice %2 {offsets = [1, 0], sizes = [1, 256], strides = [1, 1]} : vector<5x256xf32> to vector<1x256xf32>
    %821 = arith.mulf %809, %820 : vector<1x256xf32>
    %822 = vector.broadcast %821 : vector<1x256xf32> to vector<8x256xf32>
    %823 = arith.mulf %819, %822 : vector<8x256xf32>
    %824 = vector.extract_strided_slice %621 {offsets = [0, 21], sizes = [8, 1], strides = [1, 1]} : vector<8x25xf32> to vector<8x1xf32>
    %825 = vector.broadcast %824 : vector<8x1xf32> to vector<8x256xf32>
    %826 = arith.mulf %823, %825 : vector<8x256xf32>
    %827 = arith.addf %818, %826 : vector<8x256xf32>
    %c224_i32_120 = arith.constant 224 : i32
    %828 = tpu.dynamic_rotate %620 by %c224_i32_120 dim 1 : vector<8x256xf32>, i32 -> vector<8x256xf32>
    %829 = vector.extract_strided_slice %2 {offsets = [2, 0], sizes = [1, 256], strides = [1, 1]} : vector<5x256xf32> to vector<1x256xf32>
    %830 = arith.mulf %809, %829 : vector<1x256xf32>
    %831 = vector.broadcast %830 : vector<1x256xf32> to vector<8x256xf32>
    %832 = arith.mulf %828, %831 : vector<8x256xf32>
    %833 = vector.extract_strided_slice %621 {offsets = [0, 22], sizes = [8, 1], strides = [1, 1]} : vector<8x25xf32> to vector<8x1xf32>
    %834 = vector.broadcast %833 : vector<8x1xf32> to vector<8x256xf32>
    %835 = arith.mulf %832, %834 : vector<8x256xf32>
    %836 = arith.addf %827, %835 : vector<8x256xf32>
    %c223_i32_121 = arith.constant 223 : i32
    %837 = tpu.dynamic_rotate %620 by %c223_i32_121 dim 1 : vector<8x256xf32>, i32 -> vector<8x256xf32>
    %838 = vector.extract_strided_slice %2 {offsets = [3, 0], sizes = [1, 256], strides = [1, 1]} : vector<5x256xf32> to vector<1x256xf32>
    %839 = arith.mulf %809, %838 : vector<1x256xf32>
    %840 = vector.broadcast %839 : vector<1x256xf32> to vector<8x256xf32>
    %841 = arith.mulf %837, %840 : vector<8x256xf32>
    %842 = vector.extract_strided_slice %621 {offsets = [0, 23], sizes = [8, 1], strides = [1, 1]} : vector<8x25xf32> to vector<8x1xf32>
    %843 = vector.broadcast %842 : vector<8x1xf32> to vector<8x256xf32>
    %844 = arith.mulf %841, %843 : vector<8x256xf32>
    %845 = arith.addf %836, %844 : vector<8x256xf32>
    %c222_i32_122 = arith.constant 222 : i32
    %846 = tpu.dynamic_rotate %620 by %c222_i32_122 dim 1 : vector<8x256xf32>, i32 -> vector<8x256xf32>
    %847 = vector.extract_strided_slice %2 {offsets = [4, 0], sizes = [1, 256], strides = [1, 1]} : vector<5x256xf32> to vector<1x256xf32>
    %848 = arith.mulf %809, %847 : vector<1x256xf32>
    %849 = vector.broadcast %848 : vector<1x256xf32> to vector<8x256xf32>
    %850 = arith.mulf %846, %849 : vector<8x256xf32>
    %851 = vector.extract_strided_slice %621 {offsets = [0, 24], sizes = [8, 1], strides = [1, 1]} : vector<8x25xf32> to vector<8x1xf32>
    %852 = vector.broadcast %851 : vector<8x1xf32> to vector<8x256xf32>
    %853 = arith.mulf %850, %852 : vector<8x256xf32>
    %854 = arith.addf %845, %853 : vector<8x256xf32>
    %c0_123 = arith.constant 0 : index
    %c0_124 = arith.constant 0 : index
    %c0_125 = arith.constant 0 : index
    %c0_126 = arith.constant 0 : index
    %855 = vector.load %arg12[%c0_123, %c0_124, %c0_125, %c0_126] : memref<1x2x8x256xf32, #tpu.memory_space<vmem>>, vector<1x1x8x256xf32>
    %856 = vector.shape_cast %855 : vector<1x1x8x256xf32> to vector<8x256xf32>
    %857 = vector.shape_cast %620 : vector<8x256xf32> to vector<1x1x8x256xf32>
    tpu.vector_store %arg12[%c0_123, %c0_124, %c0_125, %c0_126], %857 {strides = array<i32>} : memref<1x2x8x256xf32, #tpu.memory_space<vmem>>, vector<1x1x8x256xf32>,
    %c0_127 = arith.constant 0 : index
    %c1 = arith.constant 1 : index
    %c0_128 = arith.constant 0 : index
    %c0_129 = arith.constant 0 : index
    %858 = vector.load %arg12[%c0_127, %c1, %c0_128, %c0_129] : memref<1x2x8x256xf32, #tpu.memory_space<vmem>>, vector<1x1x8x256xf32>
    %859 = vector.shape_cast %858 : vector<1x1x8x256xf32> to vector<8x256xf32>
    %860 = vector.shape_cast %854 : vector<8x256xf32> to vector<1x1x8x256xf32>
    tpu.vector_store %arg12[%c0_127, %c1, %c0_128, %c0_129], %860 {strides = array<i32>} : memref<1x2x8x256xf32, #tpu.memory_space<vmem>>, vector<1x1x8x256xf32>,
    return
  }
  func.func @transform_0(%arg0: i32) -> (i32, i32, i32) {
    %c0_i32 = arith.constant 0 : i32
    %c0_i32_0 = arith.constant 0 : i32
    %c0_i32_1 = arith.constant 0 : i32
    return %arg0, %c0_i32, %c0_i32_0 : i32, i32, i32
  }
  func.func @transform_1(%arg0: i32) -> (i32, i32) {
    %c0_i32 = arith.constant 0 : i32
    %c0_i32_0 = arith.constant 0 : i32
    %c0_i32_1 = arith.constant 0 : i32
    return %c0_i32, %c0_i32_0 : i32, i32
  }
  func.func @transform_2(%arg0: i32) -> (i32, i32) {
    %c0_i32 = arith.constant 0 : i32
    %c0_i32_0 = arith.constant 0 : i32
    %c0_i32_1 = arith.constant 0 : i32
    return %c0_i32, %c0_i32_0 : i32, i32
  }
  func.func @transform_3(%arg0: i32) -> (i32, i32) {
    %c0_i32 = arith.constant 0 : i32
    %c0_i32_0 = arith.constant 0 : i32
    %c0_i32_1 = arith.constant 0 : i32
    return %c0_i32, %c0_i32_0 : i32, i32
  }
  func.func @transform_4(%arg0: i32) -> (i32, i32) {
    %c0_i32 = arith.constant 0 : i32
    %c0_i32_0 = arith.constant 0 : i32
    %c0_i32_1 = arith.constant 0 : i32
    return %c0_i32, %c0_i32_0 : i32, i32
  }
  func.func @transform_5(%arg0: i32) -> (i32, i32) {
    %c0_i32 = arith.constant 0 : i32
    %c0_i32_0 = arith.constant 0 : i32
    %c0_i32_1 = arith.constant 0 : i32
    return %c0_i32, %c0_i32_0 : i32, i32
  }
  func.func @transform_6(%arg0: i32) -> (i32, i32) {
    %c0_i32 = arith.constant 0 : i32
    %c0_i32_0 = arith.constant 0 : i32
    %c0_i32_1 = arith.constant 0 : i32
    return %c0_i32, %c0_i32_0 : i32, i32
  }
  func.func @transform_7(%arg0: i32) -> (i32, i32) {
    %c0_i32 = arith.constant 0 : i32
    %c0_i32_0 = arith.constant 0 : i32
    %c0_i32_1 = arith.constant 0 : i32
    return %c0_i32, %c0_i32_0 : i32, i32
  }
  func.func @transform_8(%arg0: i32) -> (i32, i32) {
    %c0_i32 = arith.constant 0 : i32
    %c0_i32_0 = arith.constant 0 : i32
    %c0_i32_1 = arith.constant 0 : i32
    return %c0_i32, %c0_i32_0 : i32, i32
  }
  func.func @transform_9(%arg0: i32) -> (i32, i32) {
    %c0_i32 = arith.constant 0 : i32
    %c0_i32_0 = arith.constant 0 : i32
    %c0_i32_1 = arith.constant 0 : i32
    return %c0_i32, %c0_i32_0 : i32, i32
  }
  func.func @transform_10(%arg0: i32) -> (i32, i32) {
    %c0_i32 = arith.constant 0 : i32
    %c0_i32_0 = arith.constant 0 : i32
    %c0_i32_1 = arith.constant 0 : i32
    return %c0_i32, %c0_i32_0 : i32, i32
  }
  func.func @transform_11(%arg0: i32) -> (i32, i32, i32, i32) {
    %c0_i32 = arith.constant 0 : i32
    %c0_i32_0 = arith.constant 0 : i32
    %c0_i32_1 = arith.constant 0 : i32
    %c0_i32_2 = arith.constant 0 : i32
    return %arg0, %c0_i32, %c0_i32_0, %c0_i32_1 : i32, i32, i32, i32
  }
}

</mosaic_0001>

<llo_original>
// kernel: ghost_sppf.1
$region0: #{ghost_sppf.1}
  #allocation0 [shape = 'u32[]', space=smem, size = 0x4, offset = 0x4, fixed_abs, tag = 'smem constant byte address 0x4 - core index']
  #allocation1 [shape = 'u32[144,128]{1,0:T(1,128)}', space=vmem, size = 0x12000, scoped, tag = 'internal scratch']
  %s0 = inlined_call_operand.vmem [shape: f32[2,8,256], index: 0, kind: input, shape index: {}]
  %s1 = inlined_call_operand.vmem [shape: f32[5,256], index: 1, kind: input, shape index: {}]
  %s2 = inlined_call_operand.vmem [shape: f32[5,256], index: 2, kind: input, shape index: {}]
  %s3 = inlined_call_operand.vmem [shape: f32[2,8], index: 3, kind: input, shape index: {}]
  %s4 = inlined_call_operand.vmem [shape: f32[2,1], index: 4, kind: input, shape index: {}]
  %s5 = inlined_call_operand.vmem [shape: f32[2,25], index: 5, kind: input, shape index: {}]
  %s6 = inlined_call_operand.vmem [shape: f32[2,1], index: 6, kind: input, shape index: {}]
  %s7 = inlined_call_operand.vmem [shape: f32[8,16], index: 7, kind: input, shape index: {}]
  %s8 = inlined_call_operand.vmem [shape: f32[8,1], index: 8, kind: input, shape index: {}]
  %s9 = inlined_call_operand.vmem [shape: f32[8,25], index: 9, kind: input, shape index: {}]
  %s10 = inlined_call_operand.vmem [shape: f32[8,1], index: 10, kind: input, shape index: {}]
  %s11 = inlined_call_operand.vmem [shape: f32[2,2,8,256], index: 11, kind: output, shape index: {}]
  %s12 = sld [smem:[#allocation0]]
  $region77: #{ghost_sppf.1} parent=0
    _
  %s14 = ssub.s32 1, %s12
  %s15 = scalar_select 0, %s14, %s12
  loop: start=0, step=1, limit=4
  $region2: #{ghost_sppf.1} parent=0 // loop_pre_header
    _
  $region3: #{ghost_sppf.1} parent=0 // loop_header
    %s17 = sphi 0, %s21
    %p18 = scmp.ge.s32.totalorder %s17, 4
    %s27 = sphi 0, %s29
    %s30 = sphi 0, %s27
    %s31 = sphi 0, %s30
    %s47 = sphi 0, %s31
    %s51 = sphi 0, %s51
    %s53 = sphi 0, %s51
    %s54 = sphi 0, %s53
    %s68 = sphi 0, %s54
    %s72 = sphi 0, %s72
    %s74 = sphi 0, %s72
    %s75 = sphi 0, %s74
    %s89 = sphi 0, %s75
    %s93 = sphi 0, %s93
    %s95 = sphi 0, %s93
    %s96 = sphi 0, %s95
    %s110 = sphi 0, %s96
    %s114 = sphi 0, %s114
    %s116 = sphi 0, %s114
    %s117 = sphi 0, %s116
    %s131 = sphi 0, %s117
    %s135 = sphi 0, %s135
    %s137 = sphi 0, %s135
    %s138 = sphi 0, %s137
    %s152 = sphi 0, %s138
    %s156 = sphi 0, %s156
    %s158 = sphi 0, %s156
    %s159 = sphi 0, %s158
    %s173 = sphi 0, %s159
    %s177 = sphi 0, %s177
    %s179 = sphi 0, %s177
    %s180 = sphi 0, %s179
    %s194 = sphi 0, %s180
    %s198 = sphi 0, %s198
    %s200 = sphi 0, %s198
    %s201 = sphi 0, %s200
    %s215 = sphi 0, %s201
    %s219 = sphi 0, %s219
    %s221 = sphi 0, %s219
    %s222 = sphi 0, %s221
    %s236 = sphi 0, %s222
    %s240 = sphi 0, %s240
    %s242 = sphi 0, %s240
    %s243 = sphi 0, %s242
    %s257 = sphi 0, %s243
    %s263 = sphi 0, %s265
    %s266 = sphi 0, %s263
    %s267 = sphi 0, %s266
    %s283 = sphi 0, %s267
  $region4: #{ghost_sppf.1} parent=0 // loop_header_branch
    %20 = sbr.rel (%p18) target = $region8
  $region5: #{ghost_sppf.1} parent=0 // loop_body
    %s22 = ssub.s32 %s17, 1
    %s23 = ssub.s32 %s17, 2
    %s24 = sadd.s32 %s17, 1
    %s25 = ssub.s32 %s17, %s24
    %p26 = scmp.eq.s32.totalorder %s25, 0
    %s28 = sadd.s32 %s27, 1
    %s29 = scalar_select %p26, %s27, %s28
    %p32 = pneg %p26
    %p33 = scmp.eq.s32.totalorder %s17, 1
    %p34 = por %p32, %p33
    %p35 = scmp.ne.s32.totalorder %s27, %s30
    %p36 = scmp.eq.s32.totalorder %s17, 0
    %p37 = por %p35, %p36
    %p38 = scmp.ne.s32.totalorder %s27, %s30
    %p39 = scmp.eq.s32.totalorder %s22, 1
    %p40 = por %p38, %p39
    %p41 = scmp.ne.s32.totalorder %s30, %s31
    %p42 = scmp.eq.s32.totalorder %s22, 0
    %p43 = por %p41, %p42
    %p44 = scmp.ne.s32.totalorder %s30, %s31
    %p45 = scmp.eq.s32.totalorder %s23, 1
    %p46 = por %p44, %p45
    %p48 = scmp.ne.s32.totalorder %s31, %s47
    %p49 = scmp.eq.s32.totalorder %s23, 0
    %p50 = por %p48, %p49
    %s52 = sadd.s32 %s51, 1
    %p55 = scmp.eq.s32.totalorder %s17, 1
    %p56 = scmp.ne.s32.totalorder %s51, %s53
    %p57 = scmp.eq.s32.totalorder %s17, 0
    %p58 = por %p56, %p57
    %p59 = scmp.ne.s32.totalorder %s51, %s53
    %p60 = scmp.eq.s32.totalorder %s22, 1
    %p61 = por %p59, %p60
    %p62 = scmp.ne.s32.totalorder %s53, %s54
    %p63 = scmp.eq.s32.totalorder %s22, 0
    %p64 = por %p62, %p63
    %p65 = scmp.ne.s32.totalorder %s53, %s54
    %p66 = scmp.eq.s32.totalorder %s23, 1
    %p67 = por %p65, %p66
    %p69 = scmp.ne.s32.totalorder %s54, %s68
    %p70 = scmp.eq.s32.totalorder %s23, 0
    %p71 = por %p69, %p70
    %s73 = sadd.s32 %s72, 1
    %p76 = scmp.eq.s32.totalorder %s17, 1
    %p77 = scmp.ne.s32.totalorder %s72, %s74
    %p78 = scmp.eq.s32.totalorder %s17, 0
    %p79 = por %p77, %p78
    %p80 = scmp.ne.s32.totalorder %s72, %s74
    %p81 = scmp.eq.s32.totalorder %s22, 1
    %p82 = por %p80, %p81
    %p83 = scmp.ne.s32.totalorder %s74, %s75
    %p84 = scmp.eq.s32.totalorder %s22, 0
    %p85 = por %p83, %p84
    %p86 = scmp.ne.s32.totalorder %s74, %s75
    %p87 = scmp.eq.s32.totalorder %s23, 1
    %p88 = por %p86, %p87
    %p90 = scmp.ne.s32.totalorder %s75, %s89
    %p91 = scmp.eq.s32.totalorder %s23, 0
    %p92 = por %p90, %p91
    %s94 = sadd.s32 %s93, 1
    %p97 = scmp.eq.s32.totalorder %s17, 1
    %p98 = scmp.ne.s32.totalorder %s93, %s95
    %p99 = scmp.eq.s32.totalorder %s17, 0
    %p100 = por %p98, %p99
    %p101 = scmp.ne.s32.totalorder %s93, %s95
    %p102 = scmp.eq.s32.totalorder %s22, 1
    %p103 = por %p101, %p102
    %p104 = scmp.ne.s32.totalorder %s95, %s96
    %p105 = scmp.eq.s32.totalorder %s22, 0
    %p106 = por %p104, %p105
    %p107 = scmp.ne.s32.totalorder %s95, %s96
    %p108 = scmp.eq.s32.totalorder %s23, 1
    %p109 = por %p107, %p108
    %p111 = scmp.ne.s32.totalorder %s96, %s110
    %p112 = scmp.eq.s32.totalorder %s23, 0
    %p113 = por %p111, %p112
    %s115 = sadd.s32 %s114, 1
    %p118 = scmp.eq.s32.totalorder %s17, 1
    %p119 = scmp.ne.s32.totalorder %s114, %s116
    %p120 = scmp.eq.s32.totalorder %s17, 0
    %p121 = por %p119, %p120
    %p122 = scmp.ne.s32.totalorder %s114, %s116
    %p123 = scmp.eq.s32.totalorder %s22, 1
    %p124 = por %p122, %p123
    %p125 = scmp.ne.s32.totalorder %s116, %s117
    %p126 = scmp.eq.s32.totalorder %s22, 0
    %p127 = por %p125, %p126
    %p128 = scmp.ne.s32.totalorder %s116, %s117
    %p129 = scmp.eq.s32.totalorder %s23, 1
    %p130 = por %p128, %p129
    %p132 = scmp.ne.s32.totalorder %s117, %s131
    %p133 = scmp.eq.s32.totalorder %s23, 0
    %p134 = por %p132, %p133
    %s136 = sadd.s32 %s135, 1
    %p139 = scmp.eq.s32.totalorder %s17, 1
    %p140 = scmp.ne.s32.totalorder %s135, %s137
    %p141 = scmp.eq.s32.totalorder %s17, 0
    %p142 = por %p140, %p141
    %p143 = scmp.ne.s32.totalorder %s135, %s137
    %p144 = scmp.eq.s32.totalorder %s22, 1
    %p145 = por %p143, %p144
    %p146 = scmp.ne.s32.totalorder %s137, %s138
    %p147 = scmp.eq.s32.totalorder %s22, 0
    %p148 = por %p146, %p147
    %p149 = scmp.ne.s32.totalorder %s137, %s138
    %p150 = scmp.eq.s32.totalorder %s23, 1
    %p151 = por %p149, %p150
    %p153 = scmp.ne.s32.totalorder %s138, %s152
    %p154 = scmp.eq.s32.totalorder %s23, 0
    %p155 = por %p153, %p154
    %s157 = sadd.s32 %s156, 1
    %p160 = scmp.eq.s32.totalorder %s17, 1
    %p161 = scmp.ne.s32.totalorder %s156, %s158
    %p162 = scmp.eq.s32.totalorder %s17, 0
    %p163 = por %p161, %p162
    %p164 = scmp.ne.s32.totalorder %s156, %s158
    %p165 = scmp.eq.s32.totalorder %s22, 1
    %p166 = por %p164, %p165
    %p167 = scmp.ne.s32.totalorder %s158, %s159
    %p168 = scmp.eq.s32.totalorder %s22, 0
    %p169 = por %p167, %p168
    %p170 = scmp.ne.s32.totalorder %s158, %s159
    %p171 = scmp.eq.s32.totalorder %s23, 1
    %p172 = por %p170, %p171
    %p174 = scmp.ne.s32.totalorder %s159, %s173
    %p175 = scmp.eq.s32.totalorder %s23, 0
    %p176 = por %p174, %p175
    %s178 = sadd.s32 %s177, 1
    %p181 = scmp.eq.s32.totalorder %s17, 1
    %p182 = scmp.ne.s32.totalorder %s177, %s179
    %p183 = scmp.eq.s32.totalorder %s17, 0
    %p184 = por %p182, %p183
    %p185 = scmp.ne.s32.totalorder %s177, %s179
    %p186 = scmp.eq.s32.totalorder %s22, 1
    %p187 = por %p185, %p186
    %p188 = scmp.ne.s32.totalorder %s179, %s180
    %p189 = scmp.eq.s32.totalorder %s22, 0
    %p190 = por %p188, %p189
    %p191 = scmp.ne.s32.totalorder %s179, %s180
    %p192 = scmp.eq.s32.totalorder %s23, 1
    %p193 = por %p191, %p192
    %p195 = scmp.ne.s32.totalorder %s180, %s194
    %p196 = scmp.eq.s32.totalorder %s23, 0
    %p197 = por %p195, %p196
    %s199 = sadd.s32 %s198, 1
    %p202 = scmp.eq.s32.totalorder %s17, 1
    %p203 = scmp.ne.s32.totalorder %s198, %s200
    %p204 = scmp.eq.s32.totalorder %s17, 0
    %p205 = por %p203, %p204
    %p206 = scmp.ne.s32.totalorder %s198, %s200
    %p207 = scmp.eq.s32.totalorder %s22, 1
    %p208 = por %p206, %p207
    %p209 = scmp.ne.s32.totalorder %s200, %s201
    %p210 = scmp.eq.s32.totalorder %s22, 0
    %p211 = por %p209, %p210
    %p212 = scmp.ne.s32.totalorder %s200, %s201
    %p213 = scmp.eq.s32.totalorder %s23, 1
    %p214 = por %p212, %p213
    %p216 = scmp.ne.s32.totalorder %s201, %s215
    %p217 = scmp.eq.s32.totalorder %s23, 0
    %p218 = por %p216, %p217
    %s220 = sadd.s32 %s219, 1
    %p223 = scmp.eq.s32.totalorder %s17, 1
    %p224 = scmp.ne.s32.totalorder %s219, %s221
    %p225 = scmp.eq.s32.totalorder %s17, 0
    %p226 = por %p224, %p225
    %p227 = scmp.ne.s32.totalorder %s219, %s221
    %p228 = scmp.eq.s32.totalorder %s22, 1
    %p229 = por %p227, %p228
    %p230 = scmp.ne.s32.totalorder %s221, %s222
    %p231 = scmp.eq.s32.totalorder %s22, 0
    %p232 = por %p230, %p231
    %p233 = scmp.ne.s32.totalorder %s221, %s222
    %p234 = scmp.eq.s32.totalorder %s23, 1
    %p235 = por %p233, %p234
    %p237 = scmp.ne.s32.totalorder %s222, %s236
    %p238 = scmp.eq.s32.totalorder %s23, 0
    %p239 = por %p237, %p238
    %s241 = sadd.s32 %s240, 1
    %p244 = scmp.eq.s32.totalorder %s17, 1
    %p245 = scmp.ne.s32.totalorder %s240, %s242
    %p246 = scmp.eq.s32.totalorder %s17, 0
    %p247 = por %p245, %p246
    %p248 = scmp.ne.s32.totalorder %s240, %s242
    %p249 = scmp.eq.s32.totalorder %s22, 1
    %p250 = por %p248, %p249
    %p251 = scmp.ne.s32.totalorder %s242, %s243
    %p252 = scmp.eq.s32.totalorder %s22, 0
    %p253 = por %p251, %p252
    %p254 = scmp.ne.s32.totalorder %s242, %s243
    %p255 = scmp.eq.s32.totalorder %s23, 1
    %p256 = por %p254, %p255
    %p258 = scmp.ne.s32.totalorder %s243, %s257
    %p259 = scmp.eq.s32.totalorder %s23, 0
    %p260 = por %p258, %p259
    %s261 = ssub.s32 %s17, %s24
    %p262 = scmp.eq.s32.totalorder %s261, 0
    %s264 = sadd.s32 %s263, 1
    %s265 = scalar_select %p262, %s263, %s264
    %p268 = pneg %p262
    %p269 = scmp.eq.s32.totalorder %s17, 1
    %p270 = por %p268, %p269
    %p271 = scmp.ne.s32.totalorder %s263, %s266
    %p272 = scmp.eq.s32.totalorder %s17, 0
    %p273 = por %p271, %p272
    %p274 = scmp.ne.s32.totalorder %s263, %s266
    %p275 = scmp.eq.s32.totalorder %s22, 1
    %p276 = por %p274, %p275
    %p277 = scmp.ne.s32.totalorder %s266, %s267
    %p278 = scmp.eq.s32.totalorder %s22, 0
    %p279 = por %p277, %p278
    %p280 = scmp.ne.s32.totalorder %s266, %s267
    %p281 = scmp.eq.s32.totalorder %s23, 1
    %p282 = por %p280, %p281
    %p284 = scmp.ne.s32.totalorder %s267, %s283
    %p285 = scmp.eq.s32.totalorder %s23, 0
    %p286 = por %p284, %p285
    %p287 = scmp.le.s32.totalorder 1, %s17
    %p288 = scmp.lt.s32.totalorder %s17, 3
    %p289 = pnand %p287, %p288
    %p290 = pneg %p289
    // Predicated region
    $region9: #{ghost_sppf.1} parent=5 // pred_check
      _
    $region10: #{ghost_sppf.1} parent=5 // pred_check_branch
      %292 = sbr.rel (%p289) target = $region12
    $region11: #{ghost_sppf.1} parent=5 // pred_region
      %s293 = ssub.s32 %s17, 1
      // Predicated region
      $region13: #{ghost_sppf.1} parent=11 // pred_check
        %p294 = pneg %p64
      $region14: #{ghost_sppf.1} parent=11 // pred_check_branch
        %296 = sbr.rel (%p294) target = $region16
      $region15: #{ghost_sppf.1} parent=11 // pred_region
        _
      $region16: #{ghost_sppf.1} parent=11 // pred_fallthru
        _
      // Predicated region
      $region17: #{ghost_sppf.1} parent=11 // pred_check
        %p297 = pneg %p85
      $region18: #{ghost_sppf.1} parent=11 // pred_check_branch
        %299 = sbr.rel (%p297) target = $region20
      $region19: #{ghost_sppf.1} parent=11 // pred_region
        _
      $region20: #{ghost_sppf.1} parent=11 // pred_fallthru
        _
      // Predicated region
      $region21: #{ghost_sppf.1} parent=11 // pred_check
        %p300 = pneg %p106
      $region22: #{ghost_sppf.1} parent=11 // pred_check_branch
        %302 = sbr.rel (%p300) target = $region24
      $region23: #{ghost_sppf.1} parent=11 // pred_region
        _
      $region24: #{ghost_sppf.1} parent=11 // pred_fallthru
        _
      // Predicated region
      $region25: #{ghost_sppf.1} parent=11 // pred_check
        %p303 = pneg %p127
      $region26: #{ghost_sppf.1} parent=11 // pred_check_branch
        %305 = sbr.rel (%p303) target = $region28
      $region27: #{ghost_sppf.1} parent=11 // pred_region
        _
      $region28: #{ghost_sppf.1} parent=11 // pred_fallthru
        _
      // Predicated region
      $region29: #{ghost_sppf.1} parent=11 // pred_check
        %p306 = pneg %p148
      $region30: #{ghost_sppf.1} parent=11 // pred_check_branch
        %308 = sbr.rel (%p306) target = $region32
      $region31: #{ghost_sppf.1} parent=11 // pred_region
        _
      $region32: #{ghost_sppf.1} parent=11 // pred_fallthru
        _
      // Predicated region
      $region33: #{ghost_sppf.1} parent=11 // pred_check
        %p309 = pneg %p169
      $region34: #{ghost_sppf.1} parent=11 // pred_check_branch
        %311 = sbr.rel (%p309) target = $region36
      $region35: #{ghost_sppf.1} parent=11 // pred_region
        _
      $region36: #{ghost_sppf.1} parent=11 // pred_fallthru
        _
      // Predicated region
      $region37: #{ghost_sppf.1} parent=11 // pred_check
        %p312 = pneg %p190
      $region38: #{ghost_sppf.1} parent=11 // pred_check_branch
        %314 = sbr.rel (%p312) target = $region40
      $region39: #{ghost_sppf.1} parent=11 // pred_region
        _
      $region40: #{ghost_sppf.1} parent=11 // pred_fallthru
        _
      // Predicated region
      $region41: #{ghost_sppf.1} parent=11 // pred_check
        %p315 = pneg %p211
      $region42: #{ghost_sppf.1} parent=11 // pred_check_branch
        %317 = sbr.rel (%p315) target = $region44
      $region43: #{ghost_sppf.1} parent=11 // pred_region
        _
      $region44: #{ghost_sppf.1} parent=11 // pred_fallthru
        _
      // Predicated region
      $region45: #{ghost_sppf.1} parent=11 // pred_check
        %p318 = pneg %p232
      $region46: #{ghost_sppf.1} parent=11 // pred_check_branch
        %320 = sbr.rel (%p318) target = $region48
      $region47: #{ghost_sppf.1} parent=11 // pred_region
        _
      $region48: #{ghost_sppf.1} parent=11 // pred_fallthru
        _
      // Predicated region
      $region49: #{ghost_sppf.1} parent=11 // pred_check
        %p321 = pneg %p253
      $region50: #{ghost_sppf.1} parent=11 // pred_check_branch
        %323 = sbr.rel (%p321) target = $region52
      $region51: #{ghost_sppf.1} parent=11 // pred_region
        _
      $region52: #{ghost_sppf.1} parent=11 // pred_fallthru
        _
    $region12: #{ghost_sppf.1} parent=5 // pred_fallthru
      _
    %p324 = scmp.lt.s32.totalorder %s17, 2
    // Predicated region
    $region53: #{ghost_sppf.1} parent=5 // pred_check
      %p325 = pneg %p324
    $region54: #{ghost_sppf.1} parent=5 // pred_check_branch
      %327 = sbr.rel (%p325) target = $region56
    $region55: #{ghost_sppf.1} parent=5 // pred_region
      // Predicated region
      $region57: #{ghost_sppf.1} parent=55 // pred_check
        %p328 = pneg %p37
      $region58: #{ghost_sppf.1} parent=55 // pred_check_branch
        %330 = sbr.rel (%p328) target = $region60
      $region59: #{ghost_sppf.1} parent=55 // pred_region
        %p331 = scmp.lt.s32.totalorder %s17, 1
        %s332 = scalar_select %p331, %s17, 1
        %s333 = smul.addr %s332, 2
        %s334 = smul.addr %s333, 8
        %s335 = scalar_lea.vmem %s0, %s334
      $region60: #{ghost_sppf.1} parent=55 // pred_fallthru
        _
    $region56: #{ghost_sppf.1} parent=5 // pred_fallthru
      _
    %p336 = scmp.le.s32.totalorder 1, %s17
    %p337 = scmp.lt.s32.totalorder %s17, 3
    %p338 = pnand %p336, %p337
    %p339 = pneg %p338
    // Predicated region
    $region61: #{ghost_sppf.1} parent=5 // pred_check
      _
    $region62: #{ghost_sppf.1} parent=5 // pred_check_branch
      %341 = sbr.rel (%p338) target = $region64
    $region63: #{ghost_sppf.1} parent=5 // pred_region
      %s342 = ssub.s32 %s17, 1
      %p343 = scmp.lt.s32.totalorder %s22, 1
      %s344 = scalar_select %p343, %s22, 1
      %s345 = smul.addr %s344, 2
      %s346 = smul.addr %s345, 8
      %s347 = scalar_lea.vmem %s0, %s346
      %p348 = pneg %p43
      %p349 = pneg %p40
      %p350 = pneg %p64
      %p351 = pneg %p61
      %p352 = pneg %p85
      %p353 = pneg %p82
      %p354 = pneg %p106
      %p355 = pneg %p103
      %p356 = pneg %p127
      %p357 = pneg %p124
      %p358 = pneg %p148
      %p359 = pneg %p145
      %p360 = pneg %p169
      %p361 = pneg %p166
      %p362 = pneg %p190
      %p363 = pneg %p187
      %p364 = pneg %p211
      %p365 = pneg %p208
      %p366 = pneg %p232
      %p367 = pneg %p229
      %p368 = pneg %p253
      %p369 = pneg %p250
      %p370 = pneg %p279
      %p371 = pneg %p276
      %p372 = scmp.lt.s32.totalorder %s22, 1
      %s373 = scalar_select %p372, %s22, 1
      %s374 = smul.addr %s373, 4
      %s375 = smul.addr %s374, 8
      %s376 = scalar_lea.vmem %s11, %s375
      %p377 = scmp.lt.s32.totalorder %s22, 1
      %s378 = scalar_select %p377, %s22, 1
      %s379 = smul.addr %s378, 2
      %s380 = smul.addr %s379, 8
      %s381 = scalar_lea.vmem %s0, %s380
      %p382 = scmp.lt.s32.totalorder %s22, 1
      %s383 = scalar_select %p382, %s22, 1
      %s384 = smul.addr %s383, 4
      %s385 = smul.addr %s384, 8
      %s386 = scalar_lea.vmem %s11, %s385
      %v387 = vld [vmem:[%s381] sm:$0xff]
      %v388 = vld [vmem:[%s381 + $0x8] sm:$0xff]
      %v389 = vld [vmem:[%s1] sm:$0x1f]
      %v390 = vld [vmem:[%s1 + $0x8] sm:$0x1f]
      %v391 = vld [vmem:[%s2] sm:$0x1f]
      %v392 = vld [vmem:[%s2 + $0x8] sm:$0x1f]
      %v393 = vld [vmem:[%s4] sm:$0x3]
      %395 = vset.pattern.permute.xlu0 0
      %396 = vperm.xlu0 %395, %v393
      %v397 = vpop.permute.xlu0 %396
      %v399 = vadd.f32 %v397, 0.0
      %v400 = vld [vmem:[%s3] sm:$0x3]
      %402 = vset.pattern.permute.xlu0 0
      %403 = vperm.xlu0 %402, %v400
      %v404 = vpop.permute.xlu0 %403
      %v406 = vlaneseq
      %v407 = vshrl.u32 %v406, 7
      %v408 = vsub.s32 0, %v407
      %v409 = vrot.slane %v387, %v408
      %v410 = vlaneseq
      %v411 = vshrl.u32 %v410, 7
      %v412 = vsub.s32 0, %v411
      %v413 = vrot.slane %v388, %v412
      %v414 = vmul.f32 %v404, %v409
      %v415 = vmul.f32 %v404, %v413
      %v416 = vadd.f32 %v399, %v414
      %v417 = vadd.f32 %v399, %v415
      %418 = vset.pattern.permute.xlu0 1
      %419 = vperm.xlu0 %418, %v400
      %v420 = vpop.permute.xlu0 %419
      %v422 = vlaneseq
      %v423 = vshrl.u32 %v422, 7
      %v424 = vsub.s32 1, %v423
      %v425 = vrot.slane %v387, %v424
      %v426 = vlaneseq
      %v427 = vshrl.u32 %v426, 7
      %v428 = vsub.s32 1, %v427
      %v429 = vrot.slane %v388, %v428
      %v430 = vmul.f32 %v420, %v425
      %v431 = vmul.f32 %v420, %v429
      %v432 = vadd.f32 %v416, %v430
      %v433 = vadd.f32 %v417, %v431
      %434 = vset.pattern.permute.xlu0 2
      %435 = vperm.xlu0 %434, %v400
      %v436 = vpop.permute.xlu0 %435
      %v438 = vlaneseq
      %v439 = vshrl.u32 %v438, 7
      %v440 = vsub.s32 2, %v439
      %v441 = vrot.slane %v387, %v440
      %v442 = vlaneseq
      %v443 = vshrl.u32 %v442, 7
      %v444 = vsub.s32 2, %v443
      %v445 = vrot.slane %v388, %v444
      %v446 = vmul.f32 %v436, %v441
      %v447 = vmul.f32 %v436, %v445
      %v448 = vadd.f32 %v432, %v446
      %v449 = vadd.f32 %v433, %v447
      %450 = vset.pattern.permute.xlu0 3
      %451 = vperm.xlu0 %450, %v400
      %v452 = vpop.permute.xlu0 %451
      %v454 = vlaneseq
      %v455 = vshrl.u32 %v454, 7
      %v456 = vsub.s32 3, %v455
      %v457 = vrot.slane %v387, %v456
      %v458 = vlaneseq
      %v459 = vshrl.u32 %v458, 7
      %v460 = vsub.s32 3, %v459
      %v461 = vrot.slane %v388, %v460
      %v462 = vmul.f32 %v452, %v457
      %v463 = vmul.f32 %v452, %v461
      %v464 = vadd.f32 %v448, %v462
      %v465 = vadd.f32 %v449, %v463
      %466 = vset.pattern.permute.xlu0 4
      %467 = vperm.xlu0 %466, %v400
      %v468 = vpop.permute.xlu0 %467
      %v470 = vlaneseq
      %v471 = vshrl.u32 %v470, 7
      %v472 = vsub.s32 4, %v471
      %v473 = vrot.slane %v387, %v472
      %v474 = vlaneseq
      %v475 = vshrl.u32 %v474, 7
      %v476 = vsub.s32 4, %v475
      %v477 = vrot.slane %v388, %v476
      %v478 = vmul.f32 %v468, %v473
      %v479 = vmul.f32 %v468, %v477
      %v480 = vadd.f32 %v464, %v478
      %v481 = vadd.f32 %v465, %v479
      %482 = vset.pattern.permute.xlu0 5
      %483 = vperm.xlu0 %482, %v400
      %v484 = vpop.permute.xlu0 %483
      %v486 = vlaneseq
      %v487 = vshrl.u32 %v486, 7
      %v488 = vsub.s32 5, %v487
      %v489 = vrot.slane %v387, %v488
      %v490 = vlaneseq
      %v491 = vshrl.u32 %v490, 7
      %v492 = vsub.s32 5, %v491
      %v493 = vrot.slane %v388, %v492
      %v494 = vmul.f32 %v484, %v489
      %v495 = vmul.f32 %v484, %v493
      %v496 = vadd.f32 %v480, %v494
      %v497 = vadd.f32 %v481, %v495
      %498 = vset.pattern.permute.xlu0 6
      %499 = vperm.xlu0 %498, %v400
      %v500 = vpop.permute.xlu0 %499
      %v502 = vlaneseq
      %v503 = vshrl.u32 %v502, 7
      %v504 = vsub.s32 6, %v503
      %v505 = vrot.slane %v387, %v504
      %v506 = vlaneseq
      %v507 = vshrl.u32 %v506, 7
      %v508 = vsub.s32 6, %v507
      %v509 = vrot.slane %v388, %v508
      %v510 = vmul.f32 %v500, %v505
      %v511 = vmul.f32 %v500, %v509
      %v512 = vadd.f32 %v496, %v510
      %v513 = vadd.f32 %v497, %v511
      %514 = vset.pattern.permute.xlu0 7
      %515 = vperm.xlu0 %514, %v400
      %v516 = vpop.permute.xlu0 %515
      %v518 = vlaneseq
      %v519 = vshrl.u32 %v518, 7
      %v520 = vsub.s32 7, %v519
      %v521 = vrot.slane %v387, %v520
      %v522 = vlaneseq
      %v523 = vshrl.u32 %v522, 7
      %v524 = vsub.s32 7, %v523
      %v525 = vrot.slane %v388, %v524
      %v526 = vmul.f32 %v516, %v521
      %v527 = vmul.f32 %v516, %v525
      %v528 = vadd.f32 %v512, %v526
      %v529 = vadd.f32 %v513, %v527
      %v530 = vxor.u32 %v528, 2147483648
      %v531 = vxor.u32 %v529, 2147483648
      %v532 = vmul.f32 %v530, 1.442695
      %v533 = vpow.pop %v532
      %v534 = vmul.f32 %v531, 1.442695
      %v535 = vpow.pop %v534
      %v536 = vadd.f32 %v533, 1.0
      %v537 = vadd.f32 %v535, 1.0
      %v538 = vrcp.pop %v536
      %v539 = vmul.f32 1.0, %v538
      %v540 = vrcp.pop %v537
      %v541 = vmul.f32 1.0, %v540
      %v542 = vmul.f32 %v528, %v539
      %v543 = vmul.f32 %v529, %v541
      %v544 = vld [vmem:[%s5] sm:$0x3]
      %v545 = vld [vmem:[%s6] sm:$0x3]
      %547 = vset.pattern.permute.xlu0 0
      %548 = vperm.xlu0 %547, %v545
      %v549 = vpop.permute.xlu0 %548
      %v551 = vadd.f32 %v549, 0.0
      %552 = vrot.lane.b32.xlu0 %v542, 34
      %v553 = vpop.permute.xlu0 %552
      %554 = vrot.lane.b32.xlu0 %v543, 34
      %v555 = vpop.permute.xlu0 %554
      %v556 = vlaneseq
      %v557 = vand.u32 %v556, 127
      %vm558 = vcmp.lt.s32.totalorder %v557, 34
      %v559 = vsel %vm558, %v553, %v555
      %v560 = vsel %vm558, %v555, %v553
      %v561 = vmul.f32 %v391, %v389
      %v562 = vmul.f32 %v392, %v390
      %v563 = vlaneseq
      %v564 = vshrl.u32 %v563, 7
      %v565 = vsub.s32 0, %v564
      %v566 = vrot.slane %v561, %v565
      %v567 = vlaneseq
      %v568 = vshrl.u32 %v567, 7
      %v569 = vsub.s32 0, %v568
      %v570 = vrot.slane %v562, %v569
      %v571 = vmul.f32 %v560, %v566
      %v572 = vmul.f32 %v559, %v570
      %574 = vset.pattern.permute.xlu0 0
      %575 = vperm.xlu0 %574, %v544
      %v576 = vpop.permute.xlu0 %575
      %v578 = vmul.f32 %v571, %v576
      %v579 = vmul.f32 %v572, %v576
      %v580 = vadd.f32 %v551, %v578
      %v581 = vadd.f32 %v551, %v579
      %582 = vrot.lane.b32.xlu0 %v542, 33
      %v583 = vpop.permute.xlu0 %582
      %584 = vrot.lane.b32.xlu0 %v543, 33
      %v585 = vpop.permute.xlu0 %584
      %vm586 = vcmp.lt.s32.totalorder %v557, 33
      %v587 = vsel %vm586, %v583, %v585
      %v588 = vsel %vm586, %v585, %v583
      %v591 = vrot.slane %v389, 1
      %v592 = vrot.slane %v390, 1
      %v595 = vmul.f32 %v391, %v591
      %v596 = vmul.f32 %v392, %v592
      %v597 = vlaneseq
      %v598 = vshrl.u32 %v597, 7
      %v599 = vsub.s32 0, %v598
      %v600 = vrot.slane %v595, %v599
      %v601 = vlaneseq
      %v602 = vshrl.u32 %v601, 7
      %v603 = vsub.s32 0, %v602
      %v604 = vrot.slane %v596, %v603
      %v605 = vmul.f32 %v588, %v600
      %v606 = vmul.f32 %v587, %v604
      %607 = vset.pattern.permute.xlu0 1
      %608 = vperm.xlu0 %607, %v544
      %v609 = vpop.permute.xlu0 %608
      %v611 = vmul.f32 %v605, %v609
      %v612 = vmul.f32 %v606, %v609
      %v613 = vadd.f32 %v580, %v611
      %v614 = vadd.f32 %v581, %v612
      %615 = vrot.lane.b32.xlu0 %v542, 32
      %v616 = vpop.permute.xlu0 %615
      %617 = vrot.lane.b32.xlu0 %v543, 32
      %v618 = vpop.permute.xlu0 %617
      %vm619 = vcmp.lt.s32.totalorder %v557, 32
      %v620 = vsel %vm619, %v616, %v618
      %v621 = vsel %vm619, %v618, %v616
      %v622 = vrot.slane %v389, 2
      %v623 = vrot.slane %v390, 2
      %v626 = vmul.f32 %v391, %v622
      %v627 = vmul.f32 %v392, %v623
      %v628 = vlaneseq
      %v629 = vshrl.u32 %v628, 7
      %v630 = vsub.s32 0, %v629
      %v631 = vrot.slane %v626, %v630
      %v632 = vlaneseq
      %v633 = vshrl.u32 %v632, 7
      %v634 = vsub.s32 0, %v633
      %v635 = vrot.slane %v627, %v634
      %v636 = vmul.f32 %v621, %v631
      %v637 = vmul.f32 %v620, %v635
      %638 = vset.pattern.permute.xlu0 2
      %639 = vperm.xlu0 %638, %v544
      %v640 = vpop.permute.xlu0 %639
      %v642 = vmul.f32 %v636, %v640
      %v643 = vmul.f32 %v637, %v640
      %v644 = vadd.f32 %v613, %v642
      %v645 = vadd.f32 %v614, %v643
      %646 = vrot.lane.b32.xlu0 %v542, 31
      %v647 = vpop.permute.xlu0 %646
      %648 = vrot.lane.b32.xlu0 %v543, 31
      %v649 = vpop.permute.xlu0 %648
      %vm650 = vcmp.lt.s32.totalorder %v557, 31
      %v651 = vsel %vm650, %v647, %v649
      %v652 = vsel %vm650, %v649, %v647
      %v653 = vrot.slane %v389, 3
      %v654 = vrot.slane %v390, 3
      %v657 = vmul.f32 %v391, %v653
      %v658 = vmul.f32 %v392, %v654
      %v659 = vlaneseq
      %v660 = vshrl.u32 %v659, 7
      %v661 = vsub.s32 0, %v660
      %v662 = vrot.slane %v657, %v661
      %v663 = vlaneseq
      %v664 = vshrl.u32 %v663, 7
      %v665 = vsub.s32 0, %v664
      %v666 = vrot.slane %v658, %v665
      %v667 = vmul.f32 %v652, %v662
      %v668 = vmul.f32 %v651, %v666
      %669 = vset.pattern.permute.xlu0 3
      %670 = vperm.xlu0 %669, %v544
      %v671 = vpop.permute.xlu0 %670
      %v673 = vmul.f32 %v667, %v671
      %v674 = vmul.f32 %v668, %v671
      %v675 = vadd.f32 %v644, %v673
      %v676 = vadd.f32 %v645, %v674
      %677 = vrot.lane.b32.xlu0 %v542, 30
      %v678 = vpop.permute.xlu0 %677
      %679 = vrot.lane.b32.xlu0 %v543, 30
      %v680 = vpop.permute.xlu0 %679
      %vm681 = vcmp.lt.s32.totalorder %v557, 30
      %v682 = vsel %vm681, %v678, %v680
      %v683 = vsel %vm681, %v680, %v678
      %v684 = vrot.slane %v389, 4
      %v685 = vrot.slane %v390, 4
      %v688 = vmul.f32 %v391, %v684
      %v689 = vmul.f32 %v392, %v685
      %v690 = vlaneseq
      %v691 = vshrl.u32 %v690, 7
      %v692 = vsub.s32 0, %v691
      %v693 = vrot.slane %v688, %v692
      %v694 = vlaneseq
      %v695 = vshrl.u32 %v694, 7
      %v696 = vsub.s32 0, %v695
      %v697 = vrot.slane %v689, %v696
      %v698 = vmul.f32 %v683, %v693
      %v699 = vmul.f32 %v682, %v697
      %700 = vset.pattern.permute.xlu0 4
      %701 = vperm.xlu0 %700, %v544
      %v702 = vpop.permute.xlu0 %701
      %v704 = vmul.f32 %v698, %v702
      %v705 = vmul.f32 %v699, %v702
      %v706 = vadd.f32 %v675, %v704
      %v707 = vadd.f32 %v676, %v705
      %708 = vrot.lane.b32.xlu0 %v542, 18
      %v709 = vpop.permute.xlu0 %708
      %710 = vrot.lane.b32.xlu0 %v543, 18
      %v711 = vpop.permute.xlu0 %710
      %vm712 = vcmp.lt.s32.totalorder %v557, 18
      %v713 = vsel %vm712, %v709, %v711
      %v714 = vsel %vm712, %v711, %v709
      %v715 = vrot.slane %v389, 7
      %v716 = vrot.slane %v390, 7
      %v719 = vmul.f32 %v391, %v715
      %v720 = vmul.f32 %v392, %v716
      %v721 = vlaneseq
      %v722 = vshrl.u32 %v721, 7
      %v723 = vsub.s32 1, %v722
      %v724 = vrot.slane %v719, %v723
      %v725 = vlaneseq
      %v726 = vshrl.u32 %v725, 7
      %v727 = vsub.s32 1, %v726
      %v728 = vrot.slane %v720, %v727
      %v729 = vmul.f32 %v714, %v724
      %v730 = vmul.f32 %v713, %v728
      %731 = vset.pattern.permute.xlu0 5
      %732 = vperm.xlu0 %731, %v544
      %v733 = vpop.permute.xlu0 %732
      %v735 = vmul.f32 %v729, %v733
      %v736 = vmul.f32 %v730, %v733
      %v737 = vadd.f32 %v706, %v735
      %v738 = vadd.f32 %v707, %v736
      %739 = vrot.lane.b32.xlu0 %v542, 17
      %v740 = vpop.permute.xlu0 %739
      %741 = vrot.lane.b32.xlu0 %v543, 17
      %v742 = vpop.permute.xlu0 %741
      %vm743 = vcmp.lt.s32.totalorder %v557, 17
      %v744 = vsel %vm743, %v740, %v742
      %v745 = vsel %vm743, %v742, %v740
      %v746 = vlaneseq
      %v747 = vshrl.u32 %v746, 7
      %v748 = vsub.s32 1, %v747
      %v749 = vrot.slane %v561, %v748
      %v750 = vlaneseq
      %v751 = vshrl.u32 %v750, 7
      %v752 = vsub.s32 1, %v751
      %v753 = vrot.slane %v562, %v752
      %v754 = vmul.f32 %v745, %v749
      %v755 = vmul.f32 %v744, %v753
      %756 = vset.pattern.permute.xlu0 6
      %757 = vperm.xlu0 %756, %v544
      %v758 = vpop.permute.xlu0 %757
      %v760 = vmul.f32 %v754, %v758
      %v761 = vmul.f32 %v755, %v758
      %v762 = vadd.f32 %v737, %v760
      %v763 = vadd.f32 %v738, %v761
      %764 = vrot.lane.b32.xlu0 %v542, 16
      %v765 = vpop.permute.xlu0 %764
      %766 = vrot.lane.b32.xlu0 %v543, 16
      %v767 = vpop.permute.xlu0 %766
      %vm768 = vcmp.lt.s32.totalorder %v557, 16
      %v769 = vsel %vm768, %v765, %v767
      %v770 = vsel %vm768, %v767, %v765
      %v771 = vlaneseq
      %v772 = vshrl.u32 %v771, 7
      %v773 = vsub.s32 1, %v772
      %v774 = vrot.slane %v595, %v773
      %v775 = vlaneseq
      %v776 = vshrl.u32 %v775, 7
      %v777 = vsub.s32 1, %v776
      %v778 = vrot.slane %v596, %v777
      %v779 = vmul.f32 %v770, %v774
      %v780 = vmul.f32 %v769, %v778
      %781 = vset.pattern.permute.xlu0 7
      %782 = vperm.xlu0 %781, %v544
      %v783 = vpop.permute.xlu0 %782
      %v785 = vmul.f32 %v779, %v783
      %v786 = vmul.f32 %v780, %v783
      %v787 = vadd.f32 %v762, %v785
      %v788 = vadd.f32 %v763, %v786
      %789 = vrot.lane.b32.xlu0 %v542, 15
      %v790 = vpop.permute.xlu0 %789
      %791 = vrot.lane.b32.xlu0 %v543, 15
      %v792 = vpop.permute.xlu0 %791
      %vm793 = vcmp.lt.s32.totalorder %v557, 15
      %v794 = vsel %vm793, %v790, %v792
      %v795 = vsel %vm793, %v792, %v790
      %v796 = vlaneseq
      %v797 = vshrl.u32 %v796, 7
      %v798 = vsub.s32 1, %v797
      %v799 = vrot.slane %v626, %v798
      %v800 = vlaneseq
      %v801 = vshrl.u32 %v800, 7
      %v802 = vsub.s32 1, %v801
      %v803 = vrot.slane %v627, %v802
      %v804 = vmul.f32 %v795, %v799
      %v805 = vmul.f32 %v794, %v803
      %806 = vset.pattern.permute.xlu0 8
      %807 = vperm.xlu0 %806, %v544
      %v808 = vpop.permute.xlu0 %807
      %v810 = vmul.f32 %v804, %v808
      %v811 = vmul.f32 %v805, %v808
      %v812 = vadd.f32 %v787, %v810
      %v813 = vadd.f32 %v788, %v811
      %814 = vrot.lane.b32.xlu0 %v542, 14
      %v815 = vpop.permute.xlu0 %814
      %816 = vrot.lane.b32.xlu0 %v543, 14
      %v817 = vpop.permute.xlu0 %816
      %vm818 = vcmp.lt.s32.totalorder %v557, 14
      %v819 = vsel %vm818, %v815, %v817
      %v820 = vsel %vm818, %v817, %v815
      %v821 = vlaneseq
      %v822 = vshrl.u32 %v821, 7
      %v823 = vsub.s32 1, %v822
      %v824 = vrot.slane %v657, %v823
      %v825 = vlaneseq
      %v826 = vshrl.u32 %v825, 7
      %v827 = vsub.s32 1, %v826
      %v828 = vrot.slane %v658, %v827
      %v829 = vmul.f32 %v820, %v824
      %v830 = vmul.f32 %v819, %v828
      %831 = vset.pattern.permute.xlu0 9
      %832 = vperm.xlu0 %831, %v544
      %v833 = vpop.permute.xlu0 %832
      %v835 = vmul.f32 %v829, %v833
      %v836 = vmul.f32 %v830, %v833
      %v837 = vadd.f32 %v812, %v835
      %v838 = vadd.f32 %v813, %v836
      %839 = vrot.lane.b32.xlu0 %v542, 2
      %v840 = vpop.permute.xlu0 %839
      %841 = vrot.lane.b32.xlu0 %v543, 2
      %v842 = vpop.permute.xlu0 %841
      %vm843 = vcmp.lt.s32.totalorder %v557, 2
      %v844 = vsel %vm843, %v840, %v842
      %v845 = vsel %vm843, %v842, %v840
      %v846 = vrot.slane %v389, 6
      %v847 = vrot.slane %v390, 6
      %v850 = vmul.f32 %v391, %v846
      %v851 = vmul.f32 %v392, %v847
      %v852 = vlaneseq
      %v853 = vshrl.u32 %v852, 7
      %v854 = vsub.s32 2, %v853
      %v855 = vrot.slane %v850, %v854
      %v856 = vlaneseq
      %v857 = vshrl.u32 %v856, 7
      %v858 = vsub.s32 2, %v857
      %v859 = vrot.slane %v851, %v858
      %v860 = vmul.f32 %v845, %v855
      %v861 = vmul.f32 %v844, %v859
      %862 = vset.pattern.permute.xlu0 10
      %863 = vperm.xlu0 %862, %v544
      %v864 = vpop.permute.xlu0 %863
      %v866 = vmul.f32 %v860, %v864
      %v867 = vmul.f32 %v861, %v864
      %v868 = vadd.f32 %v837, %v866
      %v869 = vadd.f32 %v838, %v867
      %870 = vrot.lane.b32.xlu0 %v542, 1
      %v871 = vpop.permute.xlu0 %870
      %872 = vrot.lane.b32.xlu0 %v543, 1
      %v873 = vpop.permute.xlu0 %872
      %vm874 = vcmp.lt.s32.totalorder %v557, 1
      %v875 = vsel %vm874, %v871, %v873
      %v876 = vsel %vm874, %v873, %v871
      %v877 = vlaneseq
      %v878 = vshrl.u32 %v877, 7
      %v879 = vsub.s32 2, %v878
      %v880 = vrot.slane %v719, %v879
      %v881 = vlaneseq
      %v882 = vshrl.u32 %v881, 7
      %v883 = vsub.s32 2, %v882
      %v884 = vrot.slane %v720, %v883
      %v885 = vmul.f32 %v876, %v880
      %v886 = vmul.f32 %v875, %v884
      %887 = vset.pattern.permute.xlu0 11
      %888 = vperm.xlu0 %887, %v544
      %v889 = vpop.permute.xlu0 %888
      %v891 = vmul.f32 %v885, %v889
      %v892 = vmul.f32 %v886, %v889
      %v893 = vadd.f32 %v868, %v891
      %v894 = vadd.f32 %v869, %v892
      %v895 = vlaneseq
      %v896 = vshrl.u32 %v895, 7
      %v897 = vsub.s32 2, %v896
      %v898 = vrot.slane %v561, %v897
      %v899 = vlaneseq
      %v900 = vshrl.u32 %v899, 7
      %v901 = vsub.s32 2, %v900
      %v902 = vrot.slane %v562, %v901
      %v903 = vmul.f32 %v542, %v898
      %v904 = vmul.f32 %v543, %v902
      %905 = vset.pattern.permute.xlu0 12
      %906 = vperm.xlu0 %905, %v544
      %v907 = vpop.permute.xlu0 %906
      %v909 = vmul.f32 %v903, %v907
      %v910 = vmul.f32 %v904, %v907
      %v911 = vadd.f32 %v893, %v909
      %v912 = vadd.f32 %v894, %v910
      %913 = vrot.lane.b32.xlu0 %v542, 127
      %v914 = vpop.permute.xlu0 %913
      %915 = vrot.lane.b32.xlu0 %v543, 127
      %v916 = vpop.permute.xlu0 %915
      %vm917 = vcmp.lt.s32.totalorder %v557, 127
      %v918 = vsel %vm917, %v914, %v916
      %v919 = vsel %vm917, %v916, %v914
      %v920 = vlaneseq
      %v921 = vshrl.u32 %v920, 7
      %v922 = vsub.s32 2, %v921
      %v923 = vrot.slane %v595, %v922
      %v924 = vlaneseq
      %v925 = vshrl.u32 %v924, 7
      %v926 = vsub.s32 2, %v925
      %v927 = vrot.slane %v596, %v926
      %v928 = vmul.f32 %v918, %v923
      %v929 = vmul.f32 %v919, %v927
      %930 = vset.pattern.permute.xlu0 13
      %931 = vperm.xlu0 %930, %v544
      %v932 = vpop.permute.xlu0 %931
      %v934 = vmul.f32 %v928, %v932
      %v935 = vmul.f32 %v929, %v932
      %v936 = vadd.f32 %v911, %v934
      %v937 = vadd.f32 %v912, %v935
      %938 = vrot.lane.b32.xlu0 %v542, 126
      %v939 = vpop.permute.xlu0 %938
      %940 = vrot.lane.b32.xlu0 %v543, 126
      %v941 = vpop.permute.xlu0 %940
      %vm942 = vcmp.lt.s32.totalorder %v557, 126
      %v943 = vsel %vm942, %v939, %v941
      %v944 = vsel %vm942, %v941, %v939
      %v945 = vlaneseq
      %v946 = vshrl.u32 %v945, 7
      %v947 = vsub.s32 2, %v946
      %v948 = vrot.slane %v626, %v947
      %v949 = vlaneseq
      %v950 = vshrl.u32 %v949, 7
      %v951 = vsub.s32 2, %v950
      %v952 = vrot.slane %v627, %v951
      %v953 = vmul.f32 %v943, %v948
      %v954 = vmul.f32 %v944, %v952
      %955 = vset.pattern.permute.xlu0 14
      %956 = vperm.xlu0 %955, %v544
      %v957 = vpop.permute.xlu0 %956
      %v959 = vmul.f32 %v953, %v957
      %v960 = vmul.f32 %v954, %v957
      %v961 = vadd.f32 %v936, %v959
      %v962 = vadd.f32 %v937, %v960
      %963 = vrot.lane.b32.xlu0 %v542, 114
      %v964 = vpop.permute.xlu0 %963
      %965 = vrot.lane.b32.xlu0 %v543, 114
      %v966 = vpop.permute.xlu0 %965
      %vm967 = vcmp.lt.s32.totalorder %v557, 114
      %v968 = vsel %vm967, %v964, %v966
      %v969 = vsel %vm967, %v966, %v964
      %v970 = vrot.slane %v389, 5
      %v971 = vrot.slane %v390, 5
      %v974 = vmul.f32 %v391, %v970
      %v975 = vmul.f32 %v392, %v971
      %v976 = vlaneseq
      %v977 = vshrl.u32 %v976, 7
      %v978 = vsub.s32 3, %v977
      %v979 = vrot.slane %v974, %v978
      %v980 = vlaneseq
      %v981 = vshrl.u32 %v980, 7
      %v982 = vsub.s32 3, %v981
      %v983 = vrot.slane %v975, %v982
      %v984 = vmul.f32 %v968, %v979
      %v985 = vmul.f32 %v969, %v983
      %986 = vset.pattern.permute.xlu0 15
      %987 = vperm.xlu0 %986, %v544
      %v988 = vpop.permute.xlu0 %987
      %v990 = vmul.f32 %v984, %v988
      %v991 = vmul.f32 %v985, %v988
      %v992 = vadd.f32 %v961, %v990
      %v993 = vadd.f32 %v962, %v991
      %994 = vrot.lane.b32.xlu0 %v542, 113
      %v995 = vpop.permute.xlu0 %994
      %996 = vrot.lane.b32.xlu0 %v543, 113
      %v997 = vpop.permute.xlu0 %996
      %vm998 = vcmp.lt.s32.totalorder %v557, 113
      %v999 = vsel %vm998, %v995, %v997
      %v1000 = vsel %vm998, %v997, %v995
      %v1001 = vlaneseq
      %v1002 = vshrl.u32 %v1001, 7
      %v1003 = vsub.s32 3, %v1002
      %v1004 = vrot.slane %v850, %v1003
      %v1005 = vlaneseq
      %v1006 = vshrl.u32 %v1005, 7
      %v1007 = vsub.s32 3, %v1006
      %v1008 = vrot.slane %v851, %v1007
      %v1009 = vmul.f32 %v999, %v1004
      %v1010 = vmul.f32 %v1000, %v1008
      %1011 = vset.pattern.permute.xlu0 16
      %1012 = vperm.xlu0 %1011, %v544
      %v1013 = vpop.permute.xlu0 %1012
      %v1015 = vmul.f32 %v1009, %v1013
      %v1016 = vmul.f32 %v1010, %v1013
      %v1017 = vadd.f32 %v992, %v1015
      %v1018 = vadd.f32 %v993, %v1016
      %1019 = vrot.lane.b32.xlu0 %v542, 112
      %v1020 = vpop.permute.xlu0 %1019
      %1021 = vrot.lane.b32.xlu0 %v543, 112
      %v1022 = vpop.permute.xlu0 %1021
      %vm1023 = vcmp.lt.s32.totalorder %v557, 112
      %v1024 = vsel %vm1023, %v1020, %v1022
      %v1025 = vsel %vm1023, %v1022, %v1020
      %v1026 = vlaneseq
      %v1027 = vshrl.u32 %v1026, 7
      %v1028 = vsub.s32 3, %v1027
      %v1029 = vrot.slane %v719, %v1028
      %v1030 = vlaneseq
      %v1031 = vshrl.u32 %v1030, 7
      %v1032 = vsub.s32 3, %v1031
      %v1033 = vrot.slane %v720, %v1032
      %v1034 = vmul.f32 %v1024, %v1029
      %v1035 = vmul.f32 %v1025, %v1033
      %1036 = vset.pattern.permute.xlu0 17
      %1037 = vperm.xlu0 %1036, %v544
      %v1038 = vpop.permute.xlu0 %1037
      %v1040 = vmul.f32 %v1034, %v1038
      %v1041 = vmul.f32 %v1035, %v1038
      %v1042 = vadd.f32 %v1017, %v1040
      %v1043 = vadd.f32 %v1018, %v1041
      %1044 = vrot.lane.b32.xlu0 %v542, 111
      %v1045 = vpop.permute.xlu0 %1044
      %1046 = vrot.lane.b32.xlu0 %v543, 111
      %v1047 = vpop.permute.xlu0 %1046
      %vm1048 = vcmp.lt.s32.totalorder %v557, 111
      %v1049 = vsel %vm1048, %v1045, %v1047
      %v1050 = vsel %vm1048, %v1047, %v1045
      %v1051 = vlaneseq
      %v1052 = vshrl.u32 %v1051, 7
      %v1053 = vsub.s32 3, %v1052
      %v1054 = vrot.slane %v561, %v1053
      %v1055 = vlaneseq
      %v1056 = vshrl.u32 %v1055, 7
      %v1057 = vsub.s32 3, %v1056
      %v1058 = vrot.slane %v562, %v1057
      %v1059 = vmul.f32 %v1049, %v1054
      %v1060 = vmul.f32 %v1050, %v1058
      %1061 = vset.pattern.permute.xlu0 18
      %1062 = vperm.xlu0 %1061, %v544
      %v1063 = vpop.permute.xlu0 %1062
      %v1065 = vmul.f32 %v1059, %v1063
      %v1066 = vmul.f32 %v1060, %v1063
      %v1067 = vadd.f32 %v1042, %v1065
      %v1068 = vadd.f32 %v1043, %v1066
      %1069 = vrot.lane.b32.xlu0 %v542, 110
      %v1070 = vpop.permute.xlu0 %1069
      %1071 = vrot.lane.b32.xlu0 %v543, 110
      %v1072 = vpop.permute.xlu0 %1071
      %vm1073 = vcmp.lt.s32.totalorder %v557, 110
      %v1074 = vsel %vm1073, %v1070, %v1072
      %v1075 = vsel %vm1073, %v1072, %v1070
      %v1076 = vlaneseq
      %v1077 = vshrl.u32 %v1076, 7
      %v1078 = vsub.s32 3, %v1077
      %v1079 = vrot.slane %v595, %v1078
      %v1080 = vlaneseq
      %v1081 = vshrl.u32 %v1080, 7
      %v1082 = vsub.s32 3, %v1081
      %v1083 = vrot.slane %v596, %v1082
      %v1084 = vmul.f32 %v1074, %v1079
      %v1085 = vmul.f32 %v1075, %v1083
      %1086 = vset.pattern.permute.xlu0 19
      %1087 = vperm.xlu0 %1086, %v544
      %v1088 = vpop.permute.xlu0 %1087
      %v1090 = vmul.f32 %v1084, %v1088
      %v1091 = vmul.f32 %v1085, %v1088
      %v1092 = vadd.f32 %v1067, %v1090
      %v1093 = vadd.f32 %v1068, %v1091
      %1094 = vrot.lane.b32.xlu0 %v542, 98
      %v1095 = vpop.permute.xlu0 %1094
      %1096 = vrot.lane.b32.xlu0 %v543, 98
      %v1097 = vpop.permute.xlu0 %1096
      %vm1098 = vcmp.lt.s32.totalorder %v557, 98
      %v1099 = vsel %vm1098, %v1095, %v1097
      %v1100 = vsel %vm1098, %v1097, %v1095
      %v1101 = vlaneseq
      %v1102 = vshrl.u32 %v1101, 7
      %v1103 = vsub.s32 4, %v1102
      %v1104 = vrot.slane %v688, %v1103
      %v1105 = vlaneseq
      %v1106 = vshrl.u32 %v1105, 7
      %v1107 = vsub.s32 4, %v1106
      %v1108 = vrot.slane %v689, %v1107
      %v1109 = vmul.f32 %v1099, %v1104
      %v1110 = vmul.f32 %v1100, %v1108
      %1111 = vset.pattern.permute.xlu0 20
      %1112 = vperm.xlu0 %1111, %v544
      %v1113 = vpop.permute.xlu0 %1112
      %v1115 = vmul.f32 %v1109, %v1113
      %v1116 = vmul.f32 %v1110, %v1113
      %v1117 = vadd.f32 %v1092, %v1115
      %v1118 = vadd.f32 %v1093, %v1116
      %1119 = vrot.lane.b32.xlu0 %v542, 97
      %v1120 = vpop.permute.xlu0 %1119
      %1121 = vrot.lane.b32.xlu0 %v543, 97
      %v1122 = vpop.permute.xlu0 %1121
      %vm1123 = vcmp.lt.s32.totalorder %v557, 97
      %v1124 = vsel %vm1123, %v1120, %v1122
      %v1125 = vsel %vm1123, %v1122, %v1120
      %v1126 = vlaneseq
      %v1127 = vshrl.u32 %v1126, 7
      %v1128 = vsub.s32 4, %v1127
      %v1129 = vrot.slane %v974, %v1128
      %v1130 = vlaneseq
      %v1131 = vshrl.u32 %v1130, 7
      %v1132 = vsub.s32 4, %v1131
      %v1133 = vrot.slane %v975, %v1132
      %v1134 = vmul.f32 %v1124, %v1129
      %v1135 = vmul.f32 %v1125, %v1133
      %1136 = vset.pattern.permute.xlu0 21
      %1137 = vperm.xlu0 %1136, %v544
      %v1138 = vpop.permute.xlu0 %1137
      %v1140 = vmul.f32 %v1134, %v1138
      %v1141 = vmul.f32 %v1135, %v1138
      %v1142 = vadd.f32 %v1117, %v1140
      %v1143 = vadd.f32 %v1118, %v1141
      %1144 = vrot.lane.b32.xlu0 %v542, 96
      %v1145 = vpop.permute.xlu0 %1144
      %1146 = vrot.lane.b32.xlu0 %v543, 96
      %v1147 = vpop.permute.xlu0 %1146
      %vm1148 = vcmp.lt.s32.totalorder %v557, 96
      %v1149 = vsel %vm1148, %v1145, %v1147
      %v1150 = vsel %vm1148, %v1147, %v1145
      %v1151 = vlaneseq
      %v1152 = vshrl.u32 %v1151, 7
      %v1153 = vsub.s32 4, %v1152
      %v1154 = vrot.slane %v850, %v1153
      %v1155 = vlaneseq
      %v1156 = vshrl.u32 %v1155, 7
      %v1157 = vsub.s32 4, %v1156
      %v1158 = vrot.slane %v851, %v1157
      %v1159 = vmul.f32 %v1149, %v1154
      %v1160 = vmul.f32 %v1150, %v1158
      %1161 = vset.pattern.permute.xlu0 22
      %1162 = vperm.xlu0 %1161, %v544
      %v1163 = vpop.permute.xlu0 %1162
      %v1165 = vmul.f32 %v1159, %v1163
      %v1166 = vmul.f32 %v1160, %v1163
      %v1167 = vadd.f32 %v1142, %v1165
      %v1168 = vadd.f32 %v1143, %v1166
      %1169 = vrot.lane.b32.xlu0 %v542, 95
      %v1170 = vpop.permute.xlu0 %1169
      %1171 = vrot.lane.b32.xlu0 %v543, 95
      %v1172 = vpop.permute.xlu0 %1171
      %vm1173 = vcmp.lt.s32.totalorder %v557, 95
      %v1174 = vsel %vm1173, %v1170, %v1172
      %v1175 = vsel %vm1173, %v1172, %v1170
      %v1176 = vlaneseq
      %v1177 = vshrl.u32 %v1176, 7
      %v1178 = vsub.s32 4, %v1177
      %v1179 = vrot.slane %v719, %v1178
      %v1180 = vlaneseq
      %v1181 = vshrl.u32 %v1180, 7
      %v1182 = vsub.s32 4, %v1181
      %v1183 = vrot.slane %v720, %v1182
      %v1184 = vmul.f32 %v1174, %v1179
      %v1185 = vmul.f32 %v1175, %v1183
      %1186 = vset.pattern.permute.xlu0 23
      %1187 = vperm.xlu0 %1186, %v544
      %v1188 = vpop.permute.xlu0 %1187
      %v1190 = vmul.f32 %v1184, %v1188
      %v1191 = vmul.f32 %v1185, %v1188
      %v1192 = vadd.f32 %v1167, %v1190
      %v1193 = vadd.f32 %v1168, %v1191
      %1194 = vrot.lane.b32.xlu0 %v542, 94
      %v1195 = vpop.permute.xlu0 %1194
      %1196 = vrot.lane.b32.xlu0 %v543, 94
      %v1197 = vpop.permute.xlu0 %1196
      %vm1198 = vcmp.lt.s32.totalorder %v557, 94
      %v1199 = vsel %vm1198, %v1195, %v1197
      %v1200 = vsel %vm1198, %v1197, %v1195
      %v1201 = vlaneseq
      %v1202 = vshrl.u32 %v1201, 7
      %v1203 = vsub.s32 4, %v1202
      %v1204 = vrot.slane %v561, %v1203
      %v1205 = vlaneseq
      %v1206 = vshrl.u32 %v1205, 7
      %v1207 = vsub.s32 4, %v1206
      %v1208 = vrot.slane %v562, %v1207
      %v1209 = vmul.f32 %v1199, %v1204
      %v1210 = vmul.f32 %v1200, %v1208
      %1211 = vset.pattern.permute.xlu0 24
      %1212 = vperm.xlu0 %1211, %v544
      %v1213 = vpop.permute.xlu0 %1212
      %v1215 = vmul.f32 %v1209, %v1213
      %v1216 = vmul.f32 %v1210, %v1213
      %v1217 = vadd.f32 %v1192, %v1215
      %v1218 = vadd.f32 %v1193, %v1216
      %v1219 = vxor.u32 %v1217, 2147483648
      %v1220 = vxor.u32 %v1218, 2147483648
      %v1221 = vmul.f32 %v1219, 1.442695
      %v1222 = vpow.pop %v1221
      %v1223 = vmul.f32 %v1220, 1.442695
      %v1224 = vpow.pop %v1223
      %v1225 = vadd.f32 %v1222, 1.0
      %v1226 = vadd.f32 %v1224, 1.0
      %v1227 = vrcp.pop %v1225
      %v1228 = vmul.f32 1.0, %v1227
      %v1229 = vrcp.pop %v1226
      %v1230 = vmul.f32 1.0, %v1229
      %v1231 = vmul.f32 %v1217, %v1228
      %v1232 = vmul.f32 %v1218, %v1230
      %v1235 = vrot.slane %v1231, 6
      %v1236 = vrot.slane %v1232, 6
      %vm1239 = vcmask 1041408
      %v1240 = vsel %vm1239, %v542, %v1235
      %v1241 = vsel %vm1239, %v543, %v1236
      %v1242 = vld [vmem:[%s7] sm:$0xff]
      %v1243 = vld [vmem:[%s8] sm:$0xff]
      %1245 = vset.pattern.permute.xlu0 0
      %1246 = vperm.xlu0 %1245, %v1243
      %v1247 = vpop.permute.xlu0 %1246
      %v1249 = vadd.f32 %v1247, 0.0
      %1251 = vset.pattern.permute.xlu0 0
      %1252 = vperm.xlu0 %1251, %v1242
      %v1253 = vpop.permute.xlu0 %1252
      %v1255 = vlaneseq
      %v1256 = vshrl.u32 %v1255, 7
      %v1257 = vsub.s32 0, %v1256
      %v1258 = vrot.slane %v1240, %v1257
      %v1259 = vlaneseq
      %v1260 = vshrl.u32 %v1259, 7
      %v1261 = vsub.s32 0, %v1260
      %v1262 = vrot.slane %v1241, %v1261
      %v1263 = vmul.f32 %v1253, %v1258
      %v1264 = vmul.f32 %v1253, %v1262
      %v1265 = vadd.f32 %v1249, %v1263
      %v1266 = vadd.f32 %v1249, %v1264
      %1267 = vset.pattern.permute.xlu0 1
      %1268 = vperm.xlu0 %1267, %v1242
      %v1269 = vpop.permute.xlu0 %1268
      %v1271 = vlaneseq
      %v1272 = vshrl.u32 %v1271, 7
      %v1273 = vsub.s32 1, %v1272
      %v1274 = vrot.slane %v1240, %v1273
      %v1275 = vlaneseq
      %v1276 = vshrl.u32 %v1275, 7
      %v1277 = vsub.s32 1, %v1276
      %v1278 = vrot.slane %v1241, %v1277
      %v1279 = vmul.f32 %v1269, %v1274
      %v1280 = vmul.f32 %v1269, %v1278
      %v1281 = vadd.f32 %v1265, %v1279
      %v1282 = vadd.f32 %v1266, %v1280
      %1283 = vset.pattern.permute.xlu0 2
      %1284 = vperm.xlu0 %1283, %v1242
      %v1285 = vpop.permute.xlu0 %1284
      %v1287 = vlaneseq
      %v1288 = vshrl.u32 %v1287, 7
      %v1289 = vsub.s32 2, %v1288
      %v1290 = vrot.slane %v1240, %v1289
      %v1291 = vlaneseq
      %v1292 = vshrl.u32 %v1291, 7
      %v1293 = vsub.s32 2, %v1292
      %v1294 = vrot.slane %v1241, %v1293
      %v1295 = vmul.f32 %v1285, %v1290
      %v1296 = vmul.f32 %v1285, %v1294
      %v1297 = vadd.f32 %v1281, %v1295
      %v1298 = vadd.f32 %v1282, %v1296
      %1299 = vset.pattern.permute.xlu0 3
      %1300 = vperm.xlu0 %1299, %v1242
      %v1301 = vpop.permute.xlu0 %1300
      %v1303 = vlaneseq
      %v1304 = vshrl.u32 %v1303, 7
      %v1305 = vsub.s32 3, %v1304
      %v1306 = vrot.slane %v1240, %v1305
      %v1307 = vlaneseq
      %v1308 = vshrl.u32 %v1307, 7
      %v1309 = vsub.s32 3, %v1308
      %v1310 = vrot.slane %v1241, %v1309
      %v1311 = vmul.f32 %v1301, %v1306
      %v1312 = vmul.f32 %v1301, %v1310
      %v1313 = vadd.f32 %v1297, %v1311
      %v1314 = vadd.f32 %v1298, %v1312
      %1315 = vrot.lane.b32.xlu0 %v1240, 2
      %v1316 = vpop.permute.xlu0 %1315
      %1317 = vrot.lane.b32.xlu0 %v1241, 2
      %v1318 = vpop.permute.xlu0 %1317
      %v1319 = vsel %vm843, %v1316, %v1318
      %v1320 = vsel %vm843, %v1318, %v1316
      %vm1321 = vcmp.gt.f32.partialorder %v389, 0.5
      %vm1322 = vcmp.gt.f32.partialorder %v390, 0.5
      %v1323 = vsel %vm1321, 1, 0
      %v1324 = vsel %vm1322, 1, 0
      %v1325 = vlaneseq
      %v1326 = vshrl.u32 %v1325, 7
      %v1327 = vsub.s32 0, %v1326
      %v1328 = vrot.slane %v1323, %v1327
      %v1329 = vlaneseq
      %v1330 = vshrl.u32 %v1329, 7
      %v1331 = vsub.s32 0, %v1330
      %v1332 = vrot.slane %v1324, %v1331
      %vm1333 = vcmp.eq.s32.totalorder %v1328, 1
      %vm1334 = vcmp.eq.s32.totalorder %v1332, 1
      %v1335 = vsel %vm1333, %v1320, -3.4028235e+38
      %v1336 = vsel %vm1334, %v1319, -3.4028235e+38
      %v1337 = vmax.f32 %v1240, %v1335
      %v1338 = vmax.f32 %v1241, %v1336
      %1339 = vrot.lane.b32.xlu0 %v1240, 1
      %v1340 = vpop.permute.xlu0 %1339
      %1341 = vrot.lane.b32.xlu0 %v1241, 1
      %v1342 = vpop.permute.xlu0 %1341
      %v1343 = vsel %vm874, %v1340, %v1342
      %v1344 = vsel %vm874, %v1342, %v1340
      %v1345 = vlaneseq
      %v1346 = vshrl.u32 %v1345, 7
      %v1347 = vsub.s32 1, %v1346
      %v1348 = vrot.slane %v1323, %v1347
      %v1349 = vlaneseq
      %v1350 = vshrl.u32 %v1349, 7
      %v1351 = vsub.s32 1, %v1350
      %v1352 = vrot.slane %v1324, %v1351
      %vm1353 = vcmp.eq.s32.totalorder %v1348, 1
      %vm1354 = vcmp.eq.s32.totalorder %v1352, 1
      %v1355 = vsel %vm1353, %v1344, -3.4028235e+38
      %v1356 = vsel %vm1354, %v1343, -3.4028235e+38
      %v1357 = vmax.f32 %v1337, %v1355
      %v1358 = vmax.f32 %v1338, %v1356
      %1359 = vrot.lane.b32.xlu0 %v1240, 127
      %v1360 = vpop.permute.xlu0 %1359
      %1361 = vrot.lane.b32.xlu0 %v1241, 127
      %v1362 = vpop.permute.xlu0 %1361
      %v1363 = vsel %vm917, %v1360, %v1362
      %v1364 = vsel %vm917, %v1362, %v1360
      %v1365 = vlaneseq
      %v1366 = vshrl.u32 %v1365, 7
      %v1367 = vsub.s32 3, %v1366
      %v1368 = vrot.slane %v1323, %v1367
      %v1369 = vlaneseq
      %v1370 = vshrl.u32 %v1369, 7
      %v1371 = vsub.s32 3, %v1370
      %v1372 = vrot.slane %v1324, %v1371
      %vm1373 = vcmp.eq.s32.totalorder %v1368, 1
      %vm1374 = vcmp.eq.s32.totalorder %v1372, 1
      %v1375 = vsel %vm1373, %v1363, -3.4028235e+38
      %v1376 = vsel %vm1374, %v1364, -3.4028235e+38
      %v1377 = vmax.f32 %v1357, %v1375
      %v1378 = vmax.f32 %v1358, %v1376
      %1379 = vrot.lane.b32.xlu0 %v1240, 126
      %v1380 = vpop.permute.xlu0 %1379
      %1381 = vrot.lane.b32.xlu0 %v1241, 126
      %v1382 = vpop.permute.xlu0 %1381
      %v1383 = vsel %vm942, %v1380, %v1382
      %v1384 = vsel %vm942, %v1382, %v1380
      %v1385 = vlaneseq
      %v1386 = vshrl.u32 %v1385, 7
      %v1387 = vsub.s32 4, %v1386
      %v1388 = vrot.slane %v1323, %v1387
      %v1389 = vlaneseq
      %v1390 = vshrl.u32 %v1389, 7
      %v1391 = vsub.s32 4, %v1390
      %v1392 = vrot.slane %v1324, %v1391
      %vm1393 = vcmp.eq.s32.totalorder %v1388, 1
      %vm1394 = vcmp.eq.s32.totalorder %v1392, 1
      %v1395 = vsel %vm1393, %v1383, -3.4028235e+38
      %v1396 = vsel %vm1394, %v1384, -3.4028235e+38
      %v1397 = vmax.f32 %v1377, %v1395
      %v1398 = vmax.f32 %v1378, %v1396
      %1399 = vrot.lane.b32.xlu0 %v1397, 32
      %v1400 = vpop.permute.xlu0 %1399
      %1401 = vrot.lane.b32.xlu0 %v1398, 32
      %v1402 = vpop.permute.xlu0 %1401
      %v1403 = vsel %vm619, %v1400, %v1402
      %v1404 = vsel %vm619, %v1402, %v1400
      %vm1405 = vcmp.gt.f32.partialorder %v391, 0.5
      %vm1406 = vcmp.gt.f32.partialorder %v392, 0.5
      %v1407 = vsel %vm1405, 1, 0
      %v1408 = vsel %vm1406, 1, 0
      %v1409 = vlaneseq
      %v1410 = vshrl.u32 %v1409, 7
      %v1411 = vsub.s32 0, %v1410
      %v1412 = vrot.slane %v1407, %v1411
      %v1413 = vlaneseq
      %v1414 = vshrl.u32 %v1413, 7
      %v1415 = vsub.s32 0, %v1414
      %v1416 = vrot.slane %v1408, %v1415
      %vm1417 = vcmp.eq.s32.totalorder %v1412, 1
      %vm1418 = vcmp.eq.s32.totalorder %v1416, 1
      %v1419 = vsel %vm1417, %v1404, -3.4028235e+38
      %v1420 = vsel %vm1418, %v1403, -3.4028235e+38
      %v1421 = vmax.f32 %v1397, %v1419
      %v1422 = vmax.f32 %v1398, %v1420
      %1423 = vrot.lane.b32.xlu0 %v1397, 16
      %v1424 = vpop.permute.xlu0 %1423
      %1425 = vrot.lane.b32.xlu0 %v1398, 16
      %v1426 = vpop.permute.xlu0 %1425
      %v1427 = vsel %vm768, %v1424, %v1426
      %v1428 = vsel %vm768, %v1426, %v1424
      %v1429 = vlaneseq
      %v1430 = vshrl.u32 %v1429, 7
      %v1431 = vsub.s32 1, %v1430
      %v1432 = vrot.slane %v1407, %v1431
      %v1433 = vlaneseq
      %v1434 = vshrl.u32 %v1433, 7
      %v1435 = vsub.s32 1, %v1434
      %v1436 = vrot.slane %v1408, %v1435
      %vm1437 = vcmp.eq.s32.totalorder %v1432, 1
      %vm1438 = vcmp.eq.s32.totalorder %v1436, 1
      %v1439 = vsel %vm1437, %v1428, -3.4028235e+38
      %v1440 = vsel %vm1438, %v1427, -3.4028235e+38
      %v1441 = vmax.f32 %v1421, %v1439
      %v1442 = vmax.f32 %v1422, %v1440
      %1443 = vrot.lane.b32.xlu0 %v1397, 112
      %v1444 = vpop.permute.xlu0 %1443
      %1445 = vrot.lane.b32.xlu0 %v1398, 112
      %v1446 = vpop.permute.xlu0 %1445
      %v1447 = vsel %vm1023, %v1444, %v1446
      %v1448 = vsel %vm1023, %v1446, %v1444
      %v1449 = vlaneseq
      %v1450 = vshrl.u32 %v1449, 7
      %v1451 = vsub.s32 3, %v1450
      %v1452 = vrot.slane %v1407, %v1451
      %v1453 = vlaneseq
      %v1454 = vshrl.u32 %v1453, 7
      %v1455 = vsub.s32 3, %v1454
      %v1456 = vrot.slane %v1408, %v1455
      %vm1457 = vcmp.eq.s32.totalorder %v1452, 1
      %vm1458 = vcmp.eq.s32.totalorder %v1456, 1
      %v1459 = vsel %vm1457, %v1447, -3.4028235e+38
      %v1460 = vsel %vm1458, %v1448, -3.4028235e+38
      %v1461 = vmax.f32 %v1441, %v1459
      %v1462 = vmax.f32 %v1442, %v1460
      %1463 = vrot.lane.b32.xlu0 %v1397, 96
      %v1464 = vpop.permute.xlu0 %1463
      %1465 = vrot.lane.b32.xlu0 %v1398, 96
      %v1466 = vpop.permute.xlu0 %1465
      %v1467 = vsel %vm1148, %v1464, %v1466
      %v1468 = vsel %vm1148, %v1466, %v1464
      %v1469 = vlaneseq
      %v1470 = vshrl.u32 %v1469, 7
      %v1471 = vsub.s32 4, %v1470
      %v1472 = vrot.slane %v1407, %v1471
      %v1473 = vlaneseq
      %v1474 = vshrl.u32 %v1473, 7
      %v1475 = vsub.s32 4, %v1474
      %v1476 = vrot.slane %v1408, %v1475
      %vm1477 = vcmp.eq.s32.totalorder %v1472, 1
      %vm1478 = vcmp.eq.s32.totalorder %v1476, 1
      %v1479 = vsel %vm1477, %v1467, -3.4028235e+38
      %v1480 = vsel %vm1478, %v1468, -3.4028235e+38
      %v1481 = vmax.f32 %v1461, %v1479
      %v1482 = vmax.f32 %v1462, %v1480
      %1483 = vset.pattern.permute.xlu0 4
      %1484 = vperm.xlu0 %1483, %v1242
      %v1485 = vpop.permute.xlu0 %1484
      %v1487 = vlaneseq
      %v1488 = vshrl.u32 %v1487, 7
      %v1489 = vsub.s32 0, %v1488
      %v1490 = vrot.slane %v1481, %v1489
      %v1491 = vlaneseq
      %v1492 = vshrl.u32 %v1491, 7
      %v1493 = vsub.s32 0, %v1492
      %v1494 = vrot.slane %v1482, %v1493
      %v1495 = vmul.f32 %v1485, %v1490
      %v1496 = vmul.f32 %v1485, %v1494
      %v1497 = vadd.f32 %v1313, %v1495
      %v1498 = vadd.f32 %v1314, %v1496
      %1499 = vset.pattern.permute.xlu0 5
      %1500 = vperm.xlu0 %1499, %v1242
      %v1501 = vpop.permute.xlu0 %1500
      %v1503 = vlaneseq
      %v1504 = vshrl.u32 %v1503, 7
      %v1505 = vsub.s32 1, %v1504
      %v1506 = vrot.slane %v1481, %v1505
      %v1507 = vlaneseq
      %v1508 = vshrl.u32 %v1507, 7
      %v1509 = vsub.s32 1, %v1508
      %v1510 = vrot.slane %v1482, %v1509
      %v1511 = vmul.f32 %v1501, %v1506
      %v1512 = vmul.f32 %v1501, %v1510
      %v1513 = vadd.f32 %v1497, %v1511
      %v1514 = vadd.f32 %v1498, %v1512
      %1515 = vset.pattern.permute.xlu0 6
      %1516 = vperm.xlu0 %1515, %v1242
      %v1517 = vpop.permute.xlu0 %1516
      %v1519 = vlaneseq
      %v1520 = vshrl.u32 %v1519, 7
      %v1521 = vsub.s32 2, %v1520
      %v1522 = vrot.slane %v1481, %v1521
      %v1523 = vlaneseq
      %v1524 = vshrl.u32 %v1523, 7
      %v1525 = vsub.s32 2, %v1524
      %v1526 = vrot.slane %v1482, %v1525
      %v1527 = vmul.f32 %v1517, %v1522
      %v1528 = vmul.f32 %v1517, %v1526
      %v1529 = vadd.f32 %v1513, %v1527
      %v1530 = vadd.f32 %v1514, %v1528
      %1531 = vset.pattern.permute.xlu0 7
      %1532 = vperm.xlu0 %1531, %v1242
      %v1533 = vpop.permute.xlu0 %1532
      %v1535 = vlaneseq
      %v1536 = vshrl.u32 %v1535, 7
      %v1537 = vsub.s32 3, %v1536
      %v1538 = vrot.slane %v1481, %v1537
      %v1539 = vlaneseq
      %v1540 = vshrl.u32 %v1539, 7
      %v1541 = vsub.s32 3, %v1540
      %v1542 = vrot.slane %v1482, %v1541
      %v1543 = vmul.f32 %v1533, %v1538
      %v1544 = vmul.f32 %v1533, %v1542
      %v1545 = vadd.f32 %v1529, %v1543
      %v1546 = vadd.f32 %v1530, %v1544
      %1547 = vrot.lane.b32.xlu0 %v1481, 2
      %v1548 = vpop.permute.xlu0 %1547
      %1549 = vrot.lane.b32.xlu0 %v1482, 2
      %v1550 = vpop.permute.xlu0 %1549
      %v1551 = vsel %vm843, %v1548, %v1550
      %v1552 = vsel %vm843, %v1550, %v1548
      %v1553 = vsel %vm1333, %v1552, -3.4028235e+38
      %v1554 = vsel %vm1334, %v1551, -3.4028235e+38
      %v1555 = vmax.f32 %v1481, %v1553
      %v1556 = vmax.f32 %v1482, %v1554
      %1557 = vrot.lane.b32.xlu0 %v1481, 1
      %v1558 = vpop.permute.xlu0 %1557
      %1559 = vrot.lane.b32.xlu0 %v1482, 1
      %v1560 = vpop.permute.xlu0 %1559
      %v1561 = vsel %vm874, %v1558, %v1560
      %v1562 = vsel %vm874, %v1560, %v1558
      %v1563 = vsel %vm1353, %v1562, -3.4028235e+38
      %v1564 = vsel %vm1354, %v1561, -3.4028235e+38
      %v1565 = vmax.f32 %v1555, %v1563
      %v1566 = vmax.f32 %v1556, %v1564
      %1567 = vrot.lane.b32.xlu0 %v1481, 127
      %v1568 = vpop.permute.xlu0 %1567
      %1569 = vrot.lane.b32.xlu0 %v1482, 127
      %v1570 = vpop.permute.xlu0 %1569
      %v1571 = vsel %vm917, %v1568, %v1570
      %v1572 = vsel %vm917, %v1570, %v1568
      %v1573 = vsel %vm1373, %v1571, -3.4028235e+38
      %v1574 = vsel %vm1374, %v1572, -3.4028235e+38
      %v1575 = vmax.f32 %v1565, %v1573
      %v1576 = vmax.f32 %v1566, %v1574
      %1577 = vrot.lane.b32.xlu0 %v1481, 126
      %v1578 = vpop.permute.xlu0 %1577
      %1579 = vrot.lane.b32.xlu0 %v1482, 126
      %v1580 = vpop.permute.xlu0 %1579
      %v1581 = vsel %vm942, %v1578, %v1580
      %v1582 = vsel %vm942, %v1580, %v1578
      %v1583 = vsel %vm1393, %v1581, -3.4028235e+38
      %v1584 = vsel %vm1394, %v1582, -3.4028235e+38
      %v1585 = vmax.f32 %v1575, %v1583
      %v1586 = vmax.f32 %v1576, %v1584
      %1587 = vrot.lane.b32.xlu0 %v1585, 32
      %v1588 = vpop.permute.xlu0 %1587
      %1589 = vrot.lane.b32.xlu0 %v1586, 32
      %v1590 = vpop.permute.xlu0 %1589
      %v1591 = vsel %vm619, %v1588, %v1590
      %v1592 = vsel %vm619, %v1590, %v1588
      %v1593 = vsel %vm1417, %v1592, -3.4028235e+38
      %v1594 = vsel %vm1418, %v1591, -3.4028235e+38
      %v1595 = vmax.f32 %v1585, %v1593
      %v1596 = vmax.f32 %v1586, %v1594
      %1597 = vrot.lane.b32.xlu0 %v1585, 16
      %v1598 = vpop.permute.xlu0 %1597
      %1599 = vrot.lane.b32.xlu0 %v1586, 16
      %v1600 = vpop.permute.xlu0 %1599
      %v1601 = vsel %vm768, %v1598, %v1600
      %v1602 = vsel %vm768, %v1600, %v1598
      %v1603 = vsel %vm1437, %v1602, -3.4028235e+38
      %v1604 = vsel %vm1438, %v1601, -3.4028235e+38
      %v1605 = vmax.f32 %v1595, %v1603
      %v1606 = vmax.f32 %v1596, %v1604
      %1607 = vrot.lane.b32.xlu0 %v1585, 112
      %v1608 = vpop.permute.xlu0 %1607
      %1609 = vrot.lane.b32.xlu0 %v1586, 112
      %v1610 = vpop.permute.xlu0 %1609
      %v1611 = vsel %vm1023, %v1608, %v1610
      %v1612 = vsel %vm1023, %v1610, %v1608
      %v1613 = vsel %vm1457, %v1611, -3.4028235e+38
      %v1614 = vsel %vm1458, %v1612, -3.4028235e+38
      %v1615 = vmax.f32 %v1605, %v1613
      %v1616 = vmax.f32 %v1606, %v1614
      %1617 = vrot.lane.b32.xlu0 %v1585, 96
      %v1618 = vpop.permute.xlu0 %1617
      %1619 = vrot.lane.b32.xlu0 %v1586, 96
      %v1620 = vpop.permute.xlu0 %1619
      %v1621 = vsel %vm1148, %v1618, %v1620
      %v1622 = vsel %vm1148, %v1620, %v1618
      %v1623 = vsel %vm1477, %v1621, -3.4028235e+38
      %v1624 = vsel %vm1478, %v1622, -3.4028235e+38
      %v1625 = vmax.f32 %v1615, %v1623
      %v1626 = vmax.f32 %v1616, %v1624
      %1627 = vset.pattern.permute.xlu0 8
      %1628 = vperm.xlu0 %1627, %v1242
      %v1629 = vpop.permute.xlu0 %1628
      %v1631 = vlaneseq
      %v1632 = vshrl.u32 %v1631, 7
      %v1633 = vsub.s32 0, %v1632
      %v1634 = vrot.slane %v1625, %v1633
      %v1635 = vlaneseq
      %v1636 = vshrl.u32 %v1635, 7
      %v1637 = vsub.s32 0, %v1636
      %v1638 = vrot.slane %v1626, %v1637
      %v1639 = vmul.f32 %v1629, %v1634
      %v1640 = vmul.f32 %v1629, %v1638
      %v1641 = vadd.f32 %v1545, %v1639
      %v1642 = vadd.f32 %v1546, %v1640
      %1643 = vset.pattern.permute.xlu0 9
      %1644 = vperm.xlu0 %1643, %v1242
      %v1645 = vpop.permute.xlu0 %1644
      %v1647 = vlaneseq
      %v1648 = vshrl.u32 %v1647, 7
      %v1649 = vsub.s32 1, %v1648
      %v1650 = vrot.slane %v1625, %v1649
      %v1651 = vlaneseq
      %v1652 = vshrl.u32 %v1651, 7
      %v1653 = vsub.s32 1, %v1652
      %v1654 = vrot.slane %v1626, %v1653
      %v1655 = vmul.f32 %v1645, %v1650
      %v1656 = vmul.f32 %v1645, %v1654
      %v1657 = vadd.f32 %v1641, %v1655
      %v1658 = vadd.f32 %v1642, %v1656
      %1659 = vset.pattern.permute.xlu0 10
      %1660 = vperm.xlu0 %1659, %v1242
      %v1661 = vpop.permute.xlu0 %1660
      %v1663 = vlaneseq
      %v1664 = vshrl.u32 %v1663, 7
      %v1665 = vsub.s32 2, %v1664
      %v1666 = vrot.slane %v1625, %v1665
      %v1667 = vlaneseq
      %v1668 = vshrl.u32 %v1667, 7
      %v1669 = vsub.s32 2, %v1668
      %v1670 = vrot.slane %v1626, %v1669
      %v1671 = vmul.f32 %v1661, %v1666
      %v1672 = vmul.f32 %v1661, %v1670
      %v1673 = vadd.f32 %v1657, %v1671
      %v1674 = vadd.f32 %v1658, %v1672
      %1675 = vset.pattern.permute.xlu0 11
      %1676 = vperm.xlu0 %1675, %v1242
      %v1677 = vpop.permute.xlu0 %1676
      %v1679 = vlaneseq
      %v1680 = vshrl.u32 %v1679, 7
      %v1681 = vsub.s32 3, %v1680
      %v1682 = vrot.slane %v1625, %v1681
      %v1683 = vlaneseq
      %v1684 = vshrl.u32 %v1683, 7
      %v1685 = vsub.s32 3, %v1684
      %v1686 = vrot.slane %v1626, %v1685
      %v1687 = vmul.f32 %v1677, %v1682
      %v1688 = vmul.f32 %v1677, %v1686
      %v1689 = vadd.f32 %v1673, %v1687
      %v1690 = vadd.f32 %v1674, %v1688
      %1691 = vrot.lane.b32.xlu0 %v1625, 2
      %v1692 = vpop.permute.xlu0 %1691
      %1693 = vrot.lane.b32.xlu0 %v1626, 2
      %v1694 = vpop.permute.xlu0 %1693
      %v1695 = vsel %vm843, %v1692, %v1694
      %v1696 = vsel %vm843, %v1694, %v1692
      %v1697 = vsel %vm1333, %v1696, -3.4028235e+38
      %v1698 = vsel %vm1334, %v1695, -3.4028235e+38
      %v1699 = vmax.f32 %v1625, %v1697
      %v1700 = vmax.f32 %v1626, %v1698
      %1701 = vrot.lane.b32.xlu0 %v1625, 1
      %v1702 = vpop.permute.xlu0 %1701
      %1703 = vrot.lane.b32.xlu0 %v1626, 1
      %v1704 = vpop.permute.xlu0 %1703
      %v1705 = vsel %vm874, %v1702, %v1704
      %v1706 = vsel %vm874, %v1704, %v1702
      %v1707 = vsel %vm1353, %v1706, -3.4028235e+38
      %v1708 = vsel %vm1354, %v1705, -3.4028235e+38
      %v1709 = vmax.f32 %v1699, %v1707
      %v1710 = vmax.f32 %v1700, %v1708
      %1711 = vrot.lane.b32.xlu0 %v1625, 127
      %v1712 = vpop.permute.xlu0 %1711
      %1713 = vrot.lane.b32.xlu0 %v1626, 127
      %v1714 = vpop.permute.xlu0 %1713
      %v1715 = vsel %vm917, %v1712, %v1714
      %v1716 = vsel %vm917, %v1714, %v1712
      %v1717 = vsel %vm1373, %v1715, -3.4028235e+38
      %v1718 = vsel %vm1374, %v1716, -3.4028235e+38
      %v1719 = vmax.f32 %v1709, %v1717
      %v1720 = vmax.f32 %v1710, %v1718
      %1721 = vrot.lane.b32.xlu0 %v1625, 126
      %v1722 = vpop.permute.xlu0 %1721
      %1723 = vrot.lane.b32.xlu0 %v1626, 126
      %v1724 = vpop.permute.xlu0 %1723
      %v1725 = vsel %vm942, %v1722, %v1724
      %v1726 = vsel %vm942, %v1724, %v1722
      %v1727 = vsel %vm1393, %v1725, -3.4028235e+38
      %v1728 = vsel %vm1394, %v1726, -3.4028235e+38
      %v1729 = vmax.f32 %v1719, %v1727
      %v1730 = vmax.f32 %v1720, %v1728
      %1731 = vrot.lane.b32.xlu0 %v1729, 32
      %v1732 = vpop.permute.xlu0 %1731
      %1733 = vrot.lane.b32.xlu0 %v1730, 32
      %v1734 = vpop.permute.xlu0 %1733
      %v1735 = vsel %vm619, %v1732, %v1734
      %v1736 = vsel %vm619, %v1734, %v1732
      %v1737 = vsel %vm1417, %v1736, -3.4028235e+38
      %v1738 = vsel %vm1418, %v1735, -3.4028235e+38
      %v1739 = vmax.f32 %v1729, %v1737
      %v1740 = vmax.f32 %v1730, %v1738
      %1741 = vrot.lane.b32.xlu0 %v1729, 16
      %v1742 = vpop.permute.xlu0 %1741
      %1743 = vrot.lane.b32.xlu0 %v1730, 16
      %v1744 = vpop.permute.xlu0 %1743
      %v1745 = vsel %vm768, %v1742, %v1744
      %v1746 = vsel %vm768, %v1744, %v1742
      %v1747 = vsel %vm1437, %v1746, -3.4028235e+38
      %v1748 = vsel %vm1438, %v1745, -3.4028235e+38
      %v1749 = vmax.f32 %v1739, %v1747
      %v1750 = vmax.f32 %v1740, %v1748
      %1751 = vrot.lane.b32.xlu0 %v1729, 112
      %v1752 = vpop.permute.xlu0 %1751
      %1753 = vrot.lane.b32.xlu0 %v1730, 112
      %v1754 = vpop.permute.xlu0 %1753
      %v1755 = vsel %vm1023, %v1752, %v1754
      %v1756 = vsel %vm1023, %v1754, %v1752
      %v1757 = vsel %vm1457, %v1755, -3.4028235e+38
      %v1758 = vsel %vm1458, %v1756, -3.4028235e+38
      %v1759 = vmax.f32 %v1749, %v1757
      %v1760 = vmax.f32 %v1750, %v1758
      %1761 = vrot.lane.b32.xlu0 %v1729, 96
      %v1762 = vpop.permute.xlu0 %1761
      %1763 = vrot.lane.b32.xlu0 %v1730, 96
      %v1764 = vpop.permute.xlu0 %1763
      %v1765 = vsel %vm1148, %v1762, %v1764
      %v1766 = vsel %vm1148, %v1764, %v1762
      %v1767 = vsel %vm1477, %v1765, -3.4028235e+38
      %v1768 = vsel %vm1478, %v1766, -3.4028235e+38
      %v1769 = vmax.f32 %v1759, %v1767
      %v1770 = vmax.f32 %v1760, %v1768
      %1771 = vset.pattern.permute.xlu0 12
      %1772 = vperm.xlu0 %1771, %v1242
      %v1773 = vpop.permute.xlu0 %1772
      %v1775 = vlaneseq
      %v1776 = vshrl.u32 %v1775, 7
      %v1777 = vsub.s32 0, %v1776
      %v1778 = vrot.slane %v1769, %v1777
      %v1779 = vlaneseq
      %v1780 = vshrl.u32 %v1779, 7
      %v1781 = vsub.s32 0, %v1780
      %v1782 = vrot.slane %v1770, %v1781
      %v1783 = vmul.f32 %v1773, %v1778
      %v1784 = vmul.f32 %v1773, %v1782
      %v1785 = vadd.f32 %v1689, %v1783
      %v1786 = vadd.f32 %v1690, %v1784
      %1787 = vset.pattern.permute.xlu0 13
      %1788 = vperm.xlu0 %1787, %v1242
      %v1789 = vpop.permute.xlu0 %1788
      %v1791 = vlaneseq
      %v1792 = vshrl.u32 %v1791, 7
      %v1793 = vsub.s32 1, %v1792
      %v1794 = vrot.slane %v1769, %v1793
      %v1795 = vlaneseq
      %v1796 = vshrl.u32 %v1795, 7
      %v1797 = vsub.s32 1, %v1796
      %v1798 = vrot.slane %v1770, %v1797
      %v1799 = vmul.f32 %v1789, %v1794
      %v1800 = vmul.f32 %v1789, %v1798
      %v1801 = vadd.f32 %v1785, %v1799
      %v1802 = vadd.f32 %v1786, %v1800
      %1803 = vset.pattern.permute.xlu0 14
      %1804 = vperm.xlu0 %1803, %v1242
      %v1805 = vpop.permute.xlu0 %1804
      %v1807 = vlaneseq
      %v1808 = vshrl.u32 %v1807, 7
      %v1809 = vsub.s32 2, %v1808
      %v1810 = vrot.slane %v1769, %v1809
      %v1811 = vlaneseq
      %v1812 = vshrl.u32 %v1811, 7
      %v1813 = vsub.s32 2, %v1812
      %v1814 = vrot.slane %v1770, %v1813
      %v1815 = vmul.f32 %v1805, %v1810
      %v1816 = vmul.f32 %v1805, %v1814
      %v1817 = vadd.f32 %v1801, %v1815
      %v1818 = vadd.f32 %v1802, %v1816
      %1819 = vset.pattern.permute.xlu0 15
      %1820 = vperm.xlu0 %1819, %v1242
      %v1821 = vpop.permute.xlu0 %1820
      %v1823 = vlaneseq
      %v1824 = vshrl.u32 %v1823, 7
      %v1825 = vsub.s32 3, %v1824
      %v1826 = vrot.slane %v1769, %v1825
      %v1827 = vlaneseq
      %v1828 = vshrl.u32 %v1827, 7
      %v1829 = vsub.s32 3, %v1828
      %v1830 = vrot.slane %v1770, %v1829
      %v1831 = vmul.f32 %v1821, %v1826
      %v1832 = vmul.f32 %v1821, %v1830
      %v1833 = vadd.f32 %v1817, %v1831
      %v1834 = vadd.f32 %v1818, %v1832
      %v1835 = vld [vmem:[%s9] sm:$0xff]
      %v1836 = vld [vmem:[%s10] sm:$0xff]
      %1838 = vset.pattern.permute.xlu0 0
      %1839 = vperm.xlu0 %1838, %v1836
      %v1840 = vpop.permute.xlu0 %1839
      %v1842 = vadd.f32 %v1840, 0.0
      %1843 = vrot.lane.b32.xlu0 %v1833, 34
      %v1844 = vpop.permute.xlu0 %1843
      %1845 = vrot.lane.b32.xlu0 %v1834, 34
      %v1846 = vpop.permute.xlu0 %1845
      %v1847 = vsel %vm558, %v1844, %v1846
      %v1848 = vsel %vm558, %v1846, %v1844
      %v1849 = vmul.f32 %v1848, %v566
      %v1850 = vmul.f32 %v1847, %v570
      %1852 = vset.pattern.permute.xlu0 0
      %1853 = vperm.xlu0 %1852, %v1835
      %v1854 = vpop.permute.xlu0 %1853
      %v1856 = vmul.f32 %v1849, %v1854
      %v1857 = vmul.f32 %v1850, %v1854
      %v1858 = vadd.f32 %v1842, %v1856
      %v1859 = vadd.f32 %v1842, %v1857
      %1860 = vrot.lane.b32.xlu0 %v1833, 33
      %v1861 = vpop.permute.xlu0 %1860
      %1862 = vrot.lane.b32.xlu0 %v1834, 33
      %v1863 = vpop.permute.xlu0 %1862
      %v1864 = vsel %vm586, %v1861, %v1863
      %v1865 = vsel %vm586, %v1863, %v1861
      %v1866 = vmul.f32 %v1865, %v600
      %v1867 = vmul.f32 %v1864, %v604
      %1868 = vset.pattern.permute.xlu0 1
      %1869 = vperm.xlu0 %1868, %v1835
      %v1870 = vpop.permute.xlu0 %1869
      %v1872 = vmul.f32 %v1866, %v1870
      %v1873 = vmul.f32 %v1867, %v1870
      %v1874 = vadd.f32 %v1858, %v1872
      %v1875 = vadd.f32 %v1859, %v1873
      %1876 = vrot.lane.b32.xlu0 %v1833, 32
      %v1877 = vpop.permute.xlu0 %1876
      %1878 = vrot.lane.b32.xlu0 %v1834, 32
      %v1879 = vpop.permute.xlu0 %1878
      %v1880 = vsel %vm619, %v1877, %v1879
      %v1881 = vsel %vm619, %v1879, %v1877
      %v1882 = vmul.f32 %v1881, %v631
      %v1883 = vmul.f32 %v1880, %v635
      %1884 = vset.pattern.permute.xlu0 2
      %1885 = vperm.xlu0 %1884, %v1835
      %v1886 = vpop.permute.xlu0 %1885
      %v1888 = vmul.f32 %v1882, %v1886
      %v1889 = vmul.f32 %v1883, %v1886
      %v1890 = vadd.f32 %v1874, %v1888
      %v1891 = vadd.f32 %v1875, %v1889
      %1892 = vrot.lane.b32.xlu0 %v1833, 31
      %v1893 = vpop.permute.xlu0 %1892
      %1894 = vrot.lane.b32.xlu0 %v1834, 31
      %v1895 = vpop.permute.xlu0 %1894
      %v1896 = vsel %vm650, %v1893, %v1895
      %v1897 = vsel %vm650, %v1895, %v1893
      %v1898 = vmul.f32 %v1897, %v662
      %v1899 = vmul.f32 %v1896, %v666
      %1900 = vset.pattern.permute.xlu0 3
      %1901 = vperm.xlu0 %1900, %v1835
      %v1902 = vpop.permute.xlu0 %1901
      %v1904 = vmul.f32 %v1898, %v1902
      %v1905 = vmul.f32 %v1899, %v1902
      %v1906 = vadd.f32 %v1890, %v1904
      %v1907 = vadd.f32 %v1891, %v1905
      %1908 = vrot.lane.b32.xlu0 %v1833, 30
      %v1909 = vpop.permute.xlu0 %1908
      %1910 = vrot.lane.b32.xlu0 %v1834, 30
      %v1911 = vpop.permute.xlu0 %1910
      %v1912 = vsel %vm681, %v1909, %v1911
      %v1913 = vsel %vm681, %v1911, %v1909
      %v1914 = vmul.f32 %v1913, %v693
      %v1915 = vmul.f32 %v1912, %v697
      %1916 = vset.pattern.permute.xlu0 4
      %1917 = vperm.xlu0 %1916, %v1835
      %v1918 = vpop.permute.xlu0 %1917
      %v1920 = vmul.f32 %v1914, %v1918
      %v1921 = vmul.f32 %v1915, %v1918
      %v1922 = vadd.f32 %v1906, %v1920
      %v1923 = vadd.f32 %v1907, %v1921
      %1924 = vrot.lane.b32.xlu0 %v1833, 18
      %v1925 = vpop.permute.xlu0 %1924
      %1926 = vrot.lane.b32.xlu0 %v1834, 18
      %v1927 = vpop.permute.xlu0 %1926
      %v1928 = vsel %vm712, %v1925, %v1927
      %v1929 = vsel %vm712, %v1927, %v1925
      %v1930 = vmul.f32 %v1929, %v724
      %v1931 = vmul.f32 %v1928, %v728
      %1932 = vset.pattern.permute.xlu0 5
      %1933 = vperm.xlu0 %1932, %v1835
      %v1934 = vpop.permute.xlu0 %1933
      %v1936 = vmul.f32 %v1930, %v1934
      %v1937 = vmul.f32 %v1931, %v1934
      %v1938 = vadd.f32 %v1922, %v1936
      %v1939 = vadd.f32 %v1923, %v1937
      %1940 = vrot.lane.b32.xlu0 %v1833, 17
      %v1941 = vpop.permute.xlu0 %1940
      %1942 = vrot.lane.b32.xlu0 %v1834, 17
      %v1943 = vpop.permute.xlu0 %1942
      %v1944 = vsel %vm743, %v1941, %v1943
      %v1945 = vsel %vm743, %v1943, %v1941
      %v1946 = vmul.f32 %v1945, %v749
      %v1947 = vmul.f32 %v1944, %v753
      %1948 = vset.pattern.permute.xlu0 6
      %1949 = vperm.xlu0 %1948, %v1835
      %v1950 = vpop.permute.xlu0 %1949
      %v1952 = vmul.f32 %v1946, %v1950
      %v1953 = vmul.f32 %v1947, %v1950
      %v1954 = vadd.f32 %v1938, %v1952
      %v1955 = vadd.f32 %v1939, %v1953
      %1956 = vrot.lane.b32.xlu0 %v1833, 16
      %v1957 = vpop.permute.xlu0 %1956
      %1958 = vrot.lane.b32.xlu0 %v1834, 16
      %v1959 = vpop.permute.xlu0 %1958
      %v1960 = vsel %vm768, %v1957, %v1959
      %v1961 = vsel %vm768, %v1959, %v1957
      %v1962 = vmul.f32 %v1961, %v774
      %v1963 = vmul.f32 %v1960, %v778
      %1964 = vset.pattern.permute.xlu0 7
      %1965 = vperm.xlu0 %1964, %v1835
      %v1966 = vpop.permute.xlu0 %1965
      %v1968 = vmul.f32 %v1962, %v1966
      %v1969 = vmul.f32 %v1963, %v1966
      %v1970 = vadd.f32 %v1954, %v1968
      %v1971 = vadd.f32 %v1955, %v1969
      %1972 = vrot.lane.b32.xlu0 %v1833, 15
      %v1973 = vpop.permute.xlu0 %1972
      %1974 = vrot.lane.b32.xlu0 %v1834, 15
      %v1975 = vpop.permute.xlu0 %1974
      %v1976 = vsel %vm793, %v1973, %v1975
      %v1977 = vsel %vm793, %v1975, %v1973
      %v1978 = vmul.f32 %v1977, %v799
      %v1979 = vmul.f32 %v1976, %v803
      %1980 = vset.pattern.permute.xlu0 8
      %1981 = vperm.xlu0 %1980, %v1835
      %v1982 = vpop.permute.xlu0 %1981
      %v1984 = vmul.f32 %v1978, %v1982
      %v1985 = vmul.f32 %v1979, %v1982
      %v1986 = vadd.f32 %v1970, %v1984
      %v1987 = vadd.f32 %v1971, %v1985
      %1988 = vrot.lane.b32.xlu0 %v1833, 14
      %v1989 = vpop.permute.xlu0 %1988
      %1990 = vrot.lane.b32.xlu0 %v1834, 14
      %v1991 = vpop.permute.xlu0 %1990
      %v1992 = vsel %vm818, %v1989, %v1991
      %v1993 = vsel %vm818, %v1991, %v1989
      %v1994 = vmul.f32 %v1993, %v824
      %v1995 = vmul.f32 %v1992, %v828
      %1996 = vset.pattern.permute.xlu0 9
      %1997 = vperm.xlu0 %1996, %v1835
      %v1998 = vpop.permute.xlu0 %1997
      %v2000 = vmul.f32 %v1994, %v1998
      %v2001 = vmul.f32 %v1995, %v1998
      %v2002 = vadd.f32 %v1986, %v2000
      %v2003 = vadd.f32 %v1987, %v2001
      %2004 = vrot.lane.b32.xlu0 %v1833, 2
      %v2005 = vpop.permute.xlu0 %2004
      %2006 = vrot.lane.b32.xlu0 %v1834, 2
      %v2007 = vpop.permute.xlu0 %2006
      %v2008 = vsel %vm843, %v2005, %v2007
      %v2009 = vsel %vm843, %v2007, %v2005
      %v2010 = vmul.f32 %v2009, %v855
      %v2011 = vmul.f32 %v2008, %v859
      %2012 = vset.pattern.permute.xlu0 10
      %2013 = vperm.xlu0 %2012, %v1835
      %v2014 = vpop.permute.xlu0 %2013
      %v2016 = vmul.f32 %v2010, %v2014
      %v2017 = vmul.f32 %v2011, %v2014
      %v2018 = vadd.f32 %v2002, %v2016
      %v2019 = vadd.f32 %v2003, %v2017
      %2020 = vrot.lane.b32.xlu0 %v1833, 1
      %v2021 = vpop.permute.xlu0 %2020
      %2022 = vrot.lane.b32.xlu0 %v1834, 1
      %v2023 = vpop.permute.xlu0 %2022
      %v2024 = vsel %vm874, %v2021, %v2023
      %v2025 = vsel %vm874, %v2023, %v2021
      %v2026 = vmul.f32 %v2025, %v880
      %v2027 = vmul.f32 %v2024, %v884
      %2028 = vset.pattern.permute.xlu0 11
      %2029 = vperm.xlu0 %2028, %v1835
      %v2030 = vpop.permute.xlu0 %2029
      %v2032 = vmul.f32 %v2026, %v2030
      %v2033 = vmul.f32 %v2027, %v2030
      %v2034 = vadd.f32 %v2018, %v2032
      %v2035 = vadd.f32 %v2019, %v2033
      %v2036 = vmul.f32 %v1833, %v898
      %v2037 = vmul.f32 %v1834, %v902
      %2038 = vset.pattern.permute.xlu0 12
      %2039 = vperm.xlu0 %2038, %v1835
      %v2040 = vpop.permute.xlu0 %2039
      %v2042 = vmul.f32 %v2036, %v2040
      %v2043 = vmul.f32 %v2037, %v2040
      %v2044 = vadd.f32 %v2034, %v2042
      %v2045 = vadd.f32 %v2035, %v2043
      %2046 = vrot.lane.b32.xlu0 %v1833, 127
      %v2047 = vpop.permute.xlu0 %2046
      %2048 = vrot.lane.b32.xlu0 %v1834, 127
      %v2049 = vpop.permute.xlu0 %2048
      %v2050 = vsel %vm917, %v2047, %v2049
      %v2051 = vsel %vm917, %v2049, %v2047
      %v2052 = vmul.f32 %v2050, %v923
      %v2053 = vmul.f32 %v2051, %v927
      %2054 = vset.pattern.permute.xlu0 13
      %2055 = vperm.xlu0 %2054, %v1835
      %v2056 = vpop.permute.xlu0 %2055
      %v2058 = vmul.f32 %v2052, %v2056
      %v2059 = vmul.f32 %v2053, %v2056
      %v2060 = vadd.f32 %v2044, %v2058
      %v2061 = vadd.f32 %v2045, %v2059
      %2062 = vrot.lane.b32.xlu0 %v1833, 126
      %v2063 = vpop.permute.xlu0 %2062
      %2064 = vrot.lane.b32.xlu0 %v1834, 126
      %v2065 = vpop.permute.xlu0 %2064
      %v2066 = vsel %vm942, %v2063, %v2065
      %v2067 = vsel %vm942, %v2065, %v2063
      %v2068 = vmul.f32 %v2066, %v948
      %v2069 = vmul.f32 %v2067, %v952
      %2070 = vset.pattern.permute.xlu0 14
      %2071 = vperm.xlu0 %2070, %v1835
      %v2072 = vpop.permute.xlu0 %2071
      %v2074 = vmul.f32 %v2068, %v2072
      %v2075 = vmul.f32 %v2069, %v2072
      %v2076 = vadd.f32 %v2060, %v2074
      %v2077 = vadd.f32 %v2061, %v2075
      %2078 = vrot.lane.b32.xlu0 %v1833, 114
      %v2079 = vpop.permute.xlu0 %2078
      %2080 = vrot.lane.b32.xlu0 %v1834, 114
      %v2081 = vpop.permute.xlu0 %2080
      %v2082 = vsel %vm967, %v2079, %v2081
      %v2083 = vsel %vm967, %v2081, %v2079
      %v2084 = vmul.f32 %v2082, %v979
      %v2085 = vmul.f32 %v2083, %v983
      %2086 = vset.pattern.permute.xlu0 15
      %2087 = vperm.xlu0 %2086, %v1835
      %v2088 = vpop.permute.xlu0 %2087
      %v2090 = vmul.f32 %v2084, %v2088
      %v2091 = vmul.f32 %v2085, %v2088
      %v2092 = vadd.f32 %v2076, %v2090
      %v2093 = vadd.f32 %v2077, %v2091
      %2094 = vrot.lane.b32.xlu0 %v1833, 113
      %v2095 = vpop.permute.xlu0 %2094
      %2096 = vrot.lane.b32.xlu0 %v1834, 113
      %v2097 = vpop.permute.xlu0 %2096
      %v2098 = vsel %vm998, %v2095, %v2097
      %v2099 = vsel %vm998, %v2097, %v2095
      %v2100 = vmul.f32 %v2098, %v1004
      %v2101 = vmul.f32 %v2099, %v1008
      %2102 = vset.pattern.permute.xlu0 16
      %2103 = vperm.xlu0 %2102, %v1835
      %v2104 = vpop.permute.xlu0 %2103
      %v2106 = vmul.f32 %v2100, %v2104
      %v2107 = vmul.f32 %v2101, %v2104
      %v2108 = vadd.f32 %v2092, %v2106
      %v2109 = vadd.f32 %v2093, %v2107
      %2110 = vrot.lane.b32.xlu0 %v1833, 112
      %v2111 = vpop.permute.xlu0 %2110
      %2112 = vrot.lane.b32.xlu0 %v1834, 112
      %v2113 = vpop.permute.xlu0 %2112
      %v2114 = vsel %vm1023, %v2111, %v2113
      %v2115 = vsel %vm1023, %v2113, %v2111
      %v2116 = vmul.f32 %v2114, %v1029
      %v2117 = vmul.f32 %v2115, %v1033
      %2118 = vset.pattern.permute.xlu0 17
      %2119 = vperm.xlu0 %2118, %v1835
      %v2120 = vpop.permute.xlu0 %2119
      %v2122 = vmul.f32 %v2116, %v2120
      %v2123 = vmul.f32 %v2117, %v2120
      %v2124 = vadd.f32 %v2108, %v2122
      %v2125 = vadd.f32 %v2109, %v2123
      %2126 = vrot.lane.b32.xlu0 %v1833, 111
      %v2127 = vpop.permute.xlu0 %2126
      %2128 = vrot.lane.b32.xlu0 %v1834, 111
      %v2129 = vpop.permute.xlu0 %2128
      %v2130 = vsel %vm1048, %v2127, %v2129
      %v2131 = vsel %vm1048, %v2129, %v2127
      %v2132 = vmul.f32 %v2130, %v1054
      %v2133 = vmul.f32 %v2131, %v1058
      %2134 = vset.pattern.permute.xlu0 18
      %2135 = vperm.xlu0 %2134, %v1835
      %v2136 = vpop.permute.xlu0 %2135
      %v2138 = vmul.f32 %v2132, %v2136
      %v2139 = vmul.f32 %v2133, %v2136
      %v2140 = vadd.f32 %v2124, %v2138
      %v2141 = vadd.f32 %v2125, %v2139
      %2142 = vrot.lane.b32.xlu0 %v1833, 110
      %v2143 = vpop.permute.xlu0 %2142
      %2144 = vrot.lane.b32.xlu0 %v1834, 110
      %v2145 = vpop.permute.xlu0 %2144
      %v2146 = vsel %vm1073, %v2143, %v2145
      %v2147 = vsel %vm1073, %v2145, %v2143
      %v2148 = vmul.f32 %v2146, %v1079
      %v2149 = vmul.f32 %v2147, %v1083
      %2150 = vset.pattern.permute.xlu0 19
      %2151 = vperm.xlu0 %2150, %v1835
      %v2152 = vpop.permute.xlu0 %2151
      %v2154 = vmul.f32 %v2148, %v2152
      %v2155 = vmul.f32 %v2149, %v2152
      %v2156 = vadd.f32 %v2140, %v2154
      %v2157 = vadd.f32 %v2141, %v2155
      %2158 = vrot.lane.b32.xlu0 %v1833, 98
      %v2159 = vpop.permute.xlu0 %2158
      %2160 = vrot.lane.b32.xlu0 %v1834, 98
      %v2161 = vpop.permute.xlu0 %2160
      %v2162 = vsel %vm1098, %v2159, %v2161
      %v2163 = vsel %vm1098, %v2161, %v2159
      %v2164 = vmul.f32 %v2162, %v1104
      %v2165 = vmul.f32 %v2163, %v1108
      %2166 = vset.pattern.permute.xlu0 20
      %2167 = vperm.xlu0 %2166, %v1835
      %v2168 = vpop.permute.xlu0 %2167
      %v2170 = vmul.f32 %v2164, %v2168
      %v2171 = vmul.f32 %v2165, %v2168
      %v2172 = vadd.f32 %v2156, %v2170
      %v2173 = vadd.f32 %v2157, %v2171
      %2174 = vrot.lane.b32.xlu0 %v1833, 97
      %v2175 = vpop.permute.xlu0 %2174
      %2176 = vrot.lane.b32.xlu0 %v1834, 97
      %v2177 = vpop.permute.xlu0 %2176
      %v2178 = vsel %vm1123, %v2175, %v2177
      %v2179 = vsel %vm1123, %v2177, %v2175
      %v2180 = vmul.f32 %v2178, %v1129
      %v2181 = vmul.f32 %v2179, %v1133
      %2182 = vset.pattern.permute.xlu0 21
      %2183 = vperm.xlu0 %2182, %v1835
      %v2184 = vpop.permute.xlu0 %2183
      %v2186 = vmul.f32 %v2180, %v2184
      %v2187 = vmul.f32 %v2181, %v2184
      %v2188 = vadd.f32 %v2172, %v2186
      %v2189 = vadd.f32 %v2173, %v2187
      %2190 = vrot.lane.b32.xlu0 %v1833, 96
      %v2191 = vpop.permute.xlu0 %2190
      %2192 = vrot.lane.b32.xlu0 %v1834, 96
      %v2193 = vpop.permute.xlu0 %2192
      %v2194 = vsel %vm1148, %v2191, %v2193
      %v2195 = vsel %vm1148, %v2193, %v2191
      %v2196 = vmul.f32 %v2194, %v1154
      %v2197 = vmul.f32 %v2195, %v1158
      %2198 = vset.pattern.permute.xlu0 22
      %2199 = vperm.xlu0 %2198, %v1835
      %v2200 = vpop.permute.xlu0 %2199
      %v2202 = vmul.f32 %v2196, %v2200
      %v2203 = vmul.f32 %v2197, %v2200
      %v2204 = vadd.f32 %v2188, %v2202
      %v2205 = vadd.f32 %v2189, %v2203
      %2206 = vrot.lane.b32.xlu0 %v1833, 95
      %v2207 = vpop.permute.xlu0 %2206
      %2208 = vrot.lane.b32.xlu0 %v1834, 95
      %v2209 = vpop.permute.xlu0 %2208
      %v2210 = vsel %vm1173, %v2207, %v2209
      %v2211 = vsel %vm1173, %v2209, %v2207
      %v2212 = vmul.f32 %v2210, %v1179
      %v2213 = vmul.f32 %v2211, %v1183
      %2214 = vset.pattern.permute.xlu0 23
      %2215 = vperm.xlu0 %2214, %v1835
      %v2216 = vpop.permute.xlu0 %2215
      %v2218 = vmul.f32 %v2212, %v2216
      %v2219 = vmul.f32 %v2213, %v2216
      %v2220 = vadd.f32 %v2204, %v2218
      %v2221 = vadd.f32 %v2205, %v2219
      %2222 = vrot.lane.b32.xlu0 %v1833, 94
      %v2223 = vpop.permute.xlu0 %2222
      %2224 = vrot.lane.b32.xlu0 %v1834, 94
      %v2225 = vpop.permute.xlu0 %2224
      %v2226 = vsel %vm1198, %v2223, %v2225
      %v2227 = vsel %vm1198, %v2225, %v2223
      %v2228 = vmul.f32 %v2226, %v1204
      %v2229 = vmul.f32 %v2227, %v1208
      %2230 = vset.pattern.permute.xlu0 24
      %2231 = vperm.xlu0 %2230, %v1835
      %v2232 = vpop.permute.xlu0 %2231
      %v2234 = vmul.f32 %v2228, %v2232
      %v2235 = vmul.f32 %v2229, %v2232
      %v2236 = vadd.f32 %v2220, %v2234
      %v2237 = vadd.f32 %v2221, %v2235
      %2238 = vst [vmem:[%s386] sm:$0xff] %v1833
      %2239 = vst [vmem:[%s386 + $0x8] sm:$0xff] %v1834
      %s2240 = scalar_lea.vmem %s386, 16
      %2241 = vst [vmem:[%s2240] sm:$0xff] %v2236
      %2242 = vst [vmem:[%s2240 + $0x8] sm:$0xff] %v2237
      %p2243 = scmp.lt.s32.totalorder %s22, 1
      %s2244 = scalar_select %p2243, %s22, 1
      %s2245 = smul.addr %s2244, 4
      %s2246 = smul.addr %s2245, 8
      %s2247 = scalar_lea.vmem %s11, %s2246
      // Predicated region
      $region65: #{ghost_sppf.1} parent=63 // pred_check
        %p2248 = pneg %p276
      $region66: #{ghost_sppf.1} parent=63 // pred_check_branch
        %2250 = sbr.rel (%p2248) target = $region68
      $region67: #{ghost_sppf.1} parent=63 // pred_region
        _
      $region68: #{ghost_sppf.1} parent=63 // pred_fallthru
        _
    $region64: #{ghost_sppf.1} parent=5 // pred_fallthru
      _
    %p2251 = scmp.le.s32.totalorder 2, %s17
    // Predicated region
    $region69: #{ghost_sppf.1} parent=5 // pred_check
      %p2252 = pneg %p2251
    $region70: #{ghost_sppf.1} parent=5 // pred_check_branch
      %2254 = sbr.rel (%p2252) target = $region72
    $region71: #{ghost_sppf.1} parent=5 // pred_region
      %s2255 = ssub.s32 %s17, 2
      // Predicated region
      $region73: #{ghost_sppf.1} parent=71 // pred_check
        %p2256 = pneg %p282
      $region74: #{ghost_sppf.1} parent=71 // pred_check_branch
        %2258 = sbr.rel (%p2256) target = $region76
      $region75: #{ghost_sppf.1} parent=71 // pred_region
        %p2259 = scmp.lt.s32.totalorder %s23, 1
        %s2260 = scalar_select %p2259, %s23, 1
        %s2261 = smul.addr %s2260, 4
        %s2262 = smul.addr %s2261, 8
        %s2263 = scalar_lea.vmem %s11, %s2262
      $region76: #{ghost_sppf.1} parent=71 // pred_fallthru
        _
    $region72: #{ghost_sppf.1} parent=5 // pred_fallthru
      _
  $region6: #{ghost_sppf.1} parent=0 // loop_footer
    %s21 = sadd.s32 1, %s17
  $region7: #{ghost_sppf.1} parent=0 // loop_footer_branch
    %16 = sbr.rel target = $region3
  $region8: #{ghost_sppf.1} parent=0 // loop_exit
    _

</llo_original>
